<compile_context>
chip_gen: v7x
topology: tpu7x:2x2x1
jax: 0.10.0
libtpu: 0.0.40
codegen_flags: <defaults>
</compile_context>

<pallas_src>
import functools

import jax
import jax.numpy as jnp
from jax.experimental import pallas as pl
from jax.experimental.pallas import tpu as pltpu

_SQRT_HALF = 0.7071067811865476
_TILE_M = 512                      # rows per grid step; ~1 MB bf16/buffer at K*Cin=1024
_VMEM_LIMIT = 32 * 1024 * 1024     # safe on v5e/v6e (128 MiB) and v7x (64 MiB) alike


def _round_up(x, m):
    return (x + m - 1) // m * m


def _erf_f32(x):
    # Abramowitz & Stegun 7.1.26 (|err| < 1.5e-7): matches torch's exact erf GELU to
    # fp32 eval precision.  The 1/(1+p*|x|) term uses the EUP approximate reciprocal
    # so the divide co-issues with the VPU polynomial instead of burning VALU slots.
    ax = jnp.abs(x)
    t = pl.reciprocal(1.0 + 0.3275911 * ax, approx=True)
    poly = t * (0.254829592 + t * (-0.284496736 + t * (1.421413741
               + t * (-1.453152027 + t * 1.061405429))))
    y = 1.0 - poly * jnp.exp(-ax * ax)
    return jnp.where(x >= 0.0, y, -y)


def _gelu_exact(x):
    return 0.5 * x * (1.0 + _erf_f32(x * _SQRT_HALF))


# ---------------------------------------------------------------------------
# Kernels
# ---------------------------------------------------------------------------
def _matmul_bn_act_kernel(p_ref, w_ref, s_ref, b_ref, o_ref, *, act):
    """(TILE_M, K*Cin)bf16 x (K*Cin, Cout)bf16 -> f32 BN scale/shift -> act -> bf16."""
    acc = jnp.dot(p_ref[...], w_ref[...], preferred_element_type=jnp.float32)
    y = acc * s_ref[...] + b_ref[...]
    if act == "gelu":
        y = _gelu_exact(y)
    elif act == "relu":
        y = jnp.maximum(y, 0.0)
    o_ref[...] = y.astype(o_ref.dtype)


def _maxpool_kernel(w_ref, o_ref):
    """windows (TILE_M, K, C) -> max over K -> (TILE_M, C)."""
    o_ref[...] = jnp.max(w_ref[...], axis=1)


def _afr_se_kernel(x_ref, avg_ref, exp_ref,
                   w1_ref, s1_ref, h1_ref,
                   w2_ref, s2_ref, h2_ref,
                   wf1_ref, wf2_ref,
                   wd_ref, sd_ref, hd_ref, o_ref):
    """Fused SEBasicBlock over the whole (B*L, Cin) activation (single block)."""
    x = x_ref[...]                                                   # (M, Cin) bf16
    out = jnp.dot(x, w1_ref[...], preferred_element_type=jnp.float32)
    out = jnp.maximum(out * s1_ref[...] + h1_ref[...], 0.0)          # conv1+bn1+relu
    out = jnp.dot(out.astype(jnp.bfloat16), w2_ref[...],
                  preferred_element_type=jnp.float32)
    out = out * s2_ref[...] + h2_ref[...]                            # conv2+bn2
    # SE gate: per-batch mean over length via a small averaging matmul, then
    # FC(afr->1) -> ReLU -> FC(1->afr) -> Sigmoid, broadcast back to rows.
    y = jnp.dot(avg_ref[...], out, preferred_element_type=jnp.float32)        # (B, C)
    z = jnp.maximum(jnp.sum(y * wf1_ref[...], axis=-1, keepdims=True), 0.0)   # (B, 1)
    gate = jax.nn.sigmoid(z * wf2_ref[...])                                   # (B, C)
    out = out * jnp.dot(exp_ref[...], gate, preferred_element_type=jnp.float32)
    # downsample residual: 1x1 conv (no bias) + bn, then final relu
    res = jnp.dot(x, wd_ref[...], preferred_element_type=jnp.float32)
    res = res * sd_ref[...] + hd_ref[...]
    o_ref[...] = jnp.maximum(out + res, 0.0)


# ---------------------------------------------------------------------------
# Wrappers (JAX glue: padding / im2col / reshapes)
# ---------------------------------------------------------------------------
def conv1d_bn_act(x_nlc, w_oik, scale, shift, *, stride, padding, act):
    """Conv1d(bias folded into shift) + BatchNorm1d + activation, NLC layout."""
    B, L, Cin = x_nlc.shape
    Cout, _, K = w_oik.shape
    x_bf = x_nlc.astype(jnp.bfloat16)
    xp = jnp.pad(x_bf, ((0, 0), (padding, padding), (0, 0)))
    Lout = (L + 2 * padding - K) // stride + 1
    idx = jnp.arange(Lout)[:, None] * stride + jnp.arange(K)[None, :]
    # TODO(synk): replace this XLA-side im2col with in-kernel shifted-slab
    #             accumulation to cut HBM traffic by ~K/stride on the big convs.
    patches = xp[:, idx, :].reshape(B * Lout, K * Cin)               # (M, K*Cin) bf16
    M, Kc = B * Lout, K * Cin
    tile_m = min(_TILE_M, _round_up(M, 8))
    Mp = _round_up(M, tile_m)
    if Mp != M:
        patches = jnp.pad(patches, ((0, Mp - M), (0, 0)))
    w_mat = jnp.transpose(w_oik, (2, 1, 0)).reshape(Kc, Cout).astype(jnp.bfloat16)

    out = pl.pallas_call(
        functools.partial(_matmul_bn_act_kernel, act=act),
        grid=(Mp // tile_m,),
        in_specs=[
            pl.BlockSpec((tile_m, Kc), lambda i: (i, 0)),            # streamed rows
            pl.BlockSpec((Kc, Cout), lambda i: (0, 0)),              # resident weights
            pl.BlockSpec((1, Cout), lambda i: (0, 0)),               # resident BN scale
            pl.BlockSpec((1, Cout), lambda i: (0, 0)),               # resident BN shift
        ],
        out_specs=pl.BlockSpec((tile_m, Cout), lambda i: (i, 0)),
        out_shape=jax.ShapeDtypeStruct((Mp, Cout), jnp.bfloat16),
        compiler_params=pltpu.CompilerParams(
            dimension_semantics=("parallel",),
            vmem_limit_bytes=_VMEM_LIMIT),
    )(patches, w_mat, scale.reshape(1, Cout), shift.reshape(1, Cout))
    return out[:M].reshape(B, Lout, Cout)


def maxpool1d(x_nlc, *, kernel, stride, padding):
    """MaxPool1d with -inf padding (PyTorch semantics), NLC layout."""
    B, L, C = x_nlc.shape
    xp = jnp.pad(x_nlc, ((0, 0), (padding, padding), (0, 0)),
                 constant_values=-jnp.inf)
    Lout = (L + 2 * padding - kernel) // stride + 1
    idx = jnp.arange(Lout)[:, None] * stride + jnp.arange(kernel)[None, :]
    # TODO(synk): fuse the pool into the preceding conv's epilogue to avoid this
    #             kernel x window materialization and the extra HBM round trip.
    win = xp[:, idx, :].reshape(B * Lout, kernel, C)
    M = B * Lout
    tile_m = min(_TILE_M, _round_up(M, 8))
    Mp = _round_up(M, tile_m)
    if Mp != M:
        win = jnp.pad(win, ((0, Mp - M), (0, 0), (0, 0)))

    out = pl.pallas_call(
        _maxpool_kernel,
        grid=(Mp // tile_m,),
        in_specs=[pl.BlockSpec((tile_m, kernel, C), lambda i: (i, 0, 0))],
        out_specs=pl.BlockSpec((tile_m, C), lambda i: (i, 0)),
        out_shape=jax.ShapeDtypeStruct((Mp, C), x_nlc.dtype),
        compiler_params=pltpu.CompilerParams(
            dimension_semantics=("parallel",),
            vmem_limit_bytes=_VMEM_LIMIT),
    )(win)
    return out[:M].reshape(B, Lout, C)


def afr_se_block(x_nlc, p):
    """One SEBasicBlock(128 -> afr) with 1x1-conv downsample, NLC layout, fused."""
    B, L, Cin = x_nlc.shape
    afr = p["w1"].shape[1]
    CP = 128                                        # lane-dense padded output channels
    M = B * L
    x2 = x_nlc.reshape(M, Cin).astype(jnp.bfloat16)

    pad_c = lambda a: jnp.pad(a, ((0, 0), (0, CP - a.shape[-1])))
    w1 = pad_c(p["w1"]).astype(jnp.bfloat16)
    w2 = jnp.pad(p["w2"], ((0, CP - afr), (0, CP - afr))).astype(jnp.bfloat16)
    wd = pad_c(p["wd"]).astype(jnp.bfloat16)
    s1, h1 = pad_c(p["s1"]), pad_c(p["h1"])
    s2, h2 = pad_c(p["s2"]), pad_c(p["h2"])
    sd, hd = pad_c(p["sd"]), pad_c(p["hd"])
    wf1, wf2 = pad_c(p["wf1"]), pad_c(p["wf2"])

    # Per-batch averaging / row-broadcast matrices for the SE global pool.
    row_batch = jnp.arange(M, dtype=jnp.int32) // L
    one_hot = (row_batch[None, :] == jnp.arange(B, dtype=jnp.int32)[:, None]
               ).astype(jnp.float32)                                 # (B, M)
    avg_mat = one_hot * jnp.float32(1.0 / L)
    exp_mat = jnp.transpose(one_hot)                                 # (M, B)

    # Whole activation as a single block: at MRCNN sizes B*L is tiny, so per-grid-step
    # overhead would dominate any batch loop.
    # TODO(synk): tile over batch chunks if B*L ever grows beyond a few MB of VMEM.
    out = pl.pallas_call(
        _afr_se_kernel,
        out_shape=jax.ShapeDtypeStruct((M, CP), jnp.float32),
        compiler_params=pltpu.CompilerParams(vmem_limit_bytes=_VMEM_LIMIT),
    )(x2, avg_mat, exp_mat, w1, s1, h1, w2, s2, h2, wf1, wf2, wd, sd, hd)
    return out[:, :afr].reshape(B, L, afr)


# ---------------------------------------------------------------------------
# Parameters (deterministic synthetic init; shapes follow MRCNN.__init__)
# ---------------------------------------------------------------------------
def init_params(key, afr=30):
    assert afr // 16 == 1, "SE hidden dim simplification assumes channel//16 == 1"
    keys = iter(jax.random.split(key, 64))
    nk = lambda: next(keys)

    def conv_w(shape):
        return 0.05 * jax.random.normal(nk(), shape, jnp.float32)

    def bn_params(c):
        gamma = 1.0 + 0.1 * jax.random.normal(nk(), (c,), jnp.float32)
        beta = 0.1 * jax.random.normal(nk(), (c,), jnp.float32)
        mean = 0.1 * jax.random.normal(nk(), (c,), jnp.float32)
        var = 0.5 + jax.random.uniform(nk(), (c,), jnp.float32)
        return gamma, beta, mean, var

    def fold(bn, bias=None, eps=1e-5):
        gamma, beta, mean, var = bn
        scale = gamma / jnp.sqrt(var + eps)
        shift = beta - mean * scale
        if bias is not None:
            shift = shift + scale * bias
        return scale, shift

    p = {}
    # features1: Conv1d(1,64,k64,s6) / Conv1d(64,128,k8,p4) / Conv1d(128,128,k8,p4)
    p["f1c1_w"] = conv_w((64, 1, 64));   p["f1c1_s"], p["f1c1_h"] = fold(bn_params(64))
    p["f1c2_w"] = conv_w((128, 64, 8));  p["f1c2_s"], p["f1c2_h"] = fold(bn_params(128))
    p["f1c3_w"] = conv_w((128, 128, 8)); p["f1c3_s"], p["f1c3_h"] = fold(bn_params(128))
    # features2: Conv1d(1,64,k512,s50,p256) / Conv1d(64,128,k7,p3) / Conv1d(128,128,k7,p3)
    p["f2c1_w"] = conv_w((64, 1, 512));  p["f2c1_s"], p["f2c1_h"] = fold(bn_params(64))
    p["f2c2_w"] = conv_w((128, 64, 7));  p["f2c2_s"], p["f2c2_h"] = fold(bn_params(128))
    p["f2c3_w"] = conv_w((128, 128, 7)); p["f2c3_s"], p["f2c3_h"] = fold(bn_params(128))
    # AFR = SEBasicBlock(128, afr): conv1/conv2 are kernel_size=1 (with bias),
    # SE(Linear(afr,1), Linear(1,afr)), downsample = 1x1 conv (no bias) + BN.
    inpl = 128
    w1 = conv_w((afr, inpl, 1)); b1 = 0.05 * jax.random.normal(nk(), (afr,), jnp.float32)
    s1, h1 = fold(bn_params(afr), bias=b1)
    w2 = conv_w((afr, afr, 1));  b2 = 0.05 * jax.random.normal(nk(), (afr,), jnp.float32)
    s2, h2 = fold(bn_params(afr), bias=b2)
    wf1 = 0.2 * jax.random.normal(nk(), (afr // 16, afr), jnp.float32)  # Linear(afr, 1)
    wf2 = 0.2 * jax.random.normal(nk(), (afr, afr // 16), jnp.float32)  # Linear(1, afr)
    wd = conv_w((afr, inpl, 1))
    sd, hd = fold(bn_params(afr))
    p["afr"] = dict(
        w1=jnp.transpose(w1[:, :, 0]), s1=s1.reshape(1, afr), h1=h1.reshape(1, afr),
        w2=jnp.transpose(w2[:, :, 0]), s2=s2.reshape(1, afr), h2=h2.reshape(1, afr),
        wf1=wf1.reshape(1, afr), wf2=jnp.transpose(wf2).reshape(1, afr),
        wd=jnp.transpose(wd[:, :, 0]), sd=sd.reshape(1, afr), hd=hd.reshape(1, afr),
    )
    return p


# ---------------------------------------------------------------------------
# Full forward pass (matches MRCNN.forward in eval mode)
# ---------------------------------------------------------------------------
def mrcnn_forward(x_ncl, params):
    # x_ncl: (B, 1, L) as in PyTorch; internally NLC.
    x = jnp.transpose(x_ncl, (0, 2, 1)).astype(jnp.float32)        # (B, L, 1)
    p = params
    # features1
    h1 = conv1d_bn_act(x, p["f1c1_w"], p["f1c1_s"], p["f1c1_h"], stride=6, padding=0, act="gelu")
    h1 = maxpool1d(h1, kernel=8, stride=2, padding=4)
    # Dropout(0.5): identity in eval mode
    h1 = conv1d_bn_act(h1, p["f1c2_w"], p["f1c2_s"], p["f1c2_h"], stride=1, padding=4, act="gelu")
    h1 = conv1d_bn_act(h1, p["f1c3_w"], p["f1c3_s"], p["f1c3_h"], stride=1, padding=4, act="gelu")
    h1 = maxpool1d(h1, kernel=4, stride=4, padding=2)
    # features2
    h2 = conv1d_bn_act(x, p["f2c1_w"], p["f2c1_s"], p["f2c1_h"], stride=50, padding=256, act="gelu")
    h2 = maxpool1d(h2, kernel=4, stride=2, padding=2)
    h2 = conv1d_bn_act(h2, p["f2c2_w"], p["f2c2_s"], p["f2c2_h"], stride=1, padding=3, act="gelu")
    h2 = conv1d_bn_act(h2, p["f2c3_w"], p["f2c3_s"], p["f2c3_h"], stride=1, padding=3, act="gelu")
    h2 = maxpool1d(h2, kernel=2, stride=2, padding=1)
    # torch.cat(dim=2) in NCL == concatenate along length (axis=1) in NLC
    hc = jnp.concatenate([h1, h2], axis=1)
    # dropout: identity in eval mode
    out = afr_se_block(hc, p["afr"])                               # (B, L_total, afr)
    return jnp.transpose(out, (0, 2, 1))                           # back to NCL (B, afr, L_total)


if __name__ == "__main__":
    key = jax.random.PRNGKey(0)
    pkey, xkey = jax.random.split(key)

    afr_reduced_cnn_size = 30
    params = init_params(pkey, afr=afr_reduced_cnn_size)

    B, L = 2, 300                                  # small but valid (needs L >= 64)
    x = jax.random.normal(xkey, (B, 1, L), jnp.float32)

    out = jax.jit(mrcnn_forward)(x, params)
    out = jax.block_until_ready(out)

    # branch1 length: 300->40->21->22->23->6 ; branch2: 300->7->4->4->4->3 ; concat = 9
    assert out.shape == (B, afr_reduced_cnn_size, 9), out.shape
    assert bool(jnp.all(jnp.isfinite(out)))
    print("KERNEL_OK")
</pallas_src>

<mosaic_0001>
module attributes {stable_mosaic.version = 11 : i64} {
  func.func @_matmul_bn_act_kernel(%arg0: i32, %arg1: memref<16x512xbf16, #tpu.memory_space<vmem>>, %arg2: memref<512x64xbf16, #tpu.memory_space<vmem>>, %arg3: memref<1x64xf32, #tpu.memory_space<vmem>>, %arg4: memref<1x64xf32, #tpu.memory_space<vmem>>, %arg5: memref<16x64xbf16, #tpu.memory_space<vmem>>) attributes {dimension_semantics = [#tpu.dimension_semantics<parallel>], iteration_bounds = array<i64: 1>, scalar_prefetch = 0 : i64, scratch_operands = 0 : i64, tpu.core_type = #tpu.core_type<tc>, window_params = [{transform_indices = @transform_0, window_bounds = array<i64: 16, 512>}, {pipeline_mode = #tpu.pipeline_mode<synchronous>, transform_indices = @transform_1, window_bounds = array<i64: 512, 64>}, {pipeline_mode = #tpu.pipeline_mode<synchronous>, transform_indices = @transform_2, window_bounds = array<i64: 1, 64>}, {pipeline_mode = #tpu.pipeline_mode<synchronous>, transform_indices = @transform_3, window_bounds = array<i64: 1, 64>}, {transform_indices = @transform_4, window_bounds = array<i64: 16, 64>}]} {
    %c0 = arith.constant 0 : index
    %c0_0 = arith.constant 0 : index
    %0 = vector.load %arg1[%c0, %c0_0] : memref<16x512xbf16, #tpu.memory_space<vmem>>, vector<16x512xbf16>
    %c0_1 = arith.constant 0 : index
    %c0_2 = arith.constant 0 : index
    %1 = vector.load %arg2[%c0_1, %c0_2] : memref<512x64xbf16, #tpu.memory_space<vmem>>, vector<512x64xbf16>
    %cst = arith.constant dense<0.000000e+00> : vector<16x64xf32>
    %2 = tpu.matmul %0, %1, %cst {dimension_numbers = #tpu.dot_dimension_numbers<[1], [0], [0], [1], [0, 0, 1, 1], [], []>} : vector<16x512xbf16>, vector<512x64xbf16>, vector<16x64xf32> -> vector<16x64xf32>
    %c0_3 = arith.constant 0 : index
    %c0_4 = arith.constant 0 : index
    %3 = vector.load %arg3[%c0_3, %c0_4] : memref<1x64xf32, #tpu.memory_space<vmem>>, vector<1x64xf32>
    %4 = vector.broadcast %3 : vector<1x64xf32> to vector<16x64xf32>
    %5 = arith.mulf %2, %4 : vector<16x64xf32>
    %c0_5 = arith.constant 0 : index
    %c0_6 = arith.constant 0 : index
    %6 = vector.load %arg4[%c0_5, %c0_6] : memref<1x64xf32, #tpu.memory_space<vmem>>, vector<1x64xf32>
    %7 = vector.broadcast %6 : vector<1x64xf32> to vector<16x64xf32>
    %8 = arith.addf %5, %7 : vector<16x64xf32>
    %cst_7 = arith.constant 5.000000e-01 : f32
    %9 = vector.broadcast %cst_7 : f32 to vector<16x64xf32>
    %10 = arith.mulf %9, %8 : vector<16x64xf32>
    %cst_8 = arith.constant 0.707106769 : f32
    %11 = vector.broadcast %cst_8 : f32 to vector<16x64xf32>
    %12 = arith.mulf %8, %11 : vector<16x64xf32>
    %13 = math.absf %12 : vector<16x64xf32>
    %cst_9 = arith.constant 0.327591091 : f32
    %14 = vector.broadcast %cst_9 : f32 to vector<16x64xf32>
    %15 = arith.mulf %14, %13 : vector<16x64xf32>
    %cst_10 = arith.constant 1.000000e+00 : f32
    %16 = vector.broadcast %cst_10 : f32 to vector<16x64xf32>
    %17 = arith.addf %16, %15 : vector<16x64xf32>
    %18 = tpu.reciprocal %17 {approx = true} : vector<16x64xf32> -> vector<16x64xf32>
    %cst_11 = arith.constant 1.06140542 : f32
    %19 = vector.broadcast %cst_11 : f32 to vector<16x64xf32>
    %20 = arith.mulf %18, %19 : vector<16x64xf32>
    %cst_12 = arith.constant -1.45315206 : f32
    %21 = vector.broadcast %cst_12 : f32 to vector<16x64xf32>
    %22 = arith.addf %21, %20 : vector<16x64xf32>
    %23 = arith.mulf %18, %22 : vector<16x64xf32>
    %cst_13 = arith.constant 1.42141378 : f32
    %24 = vector.broadcast %cst_13 : f32 to vector<16x64xf32>
    %25 = arith.addf %24, %23 : vector<16x64xf32>
    %26 = arith.mulf %18, %25 : vector<16x64xf32>
    %cst_14 = arith.constant -0.284496725 : f32
    %27 = vector.broadcast %cst_14 : f32 to vector<16x64xf32>
    %28 = arith.addf %27, %26 : vector<16x64xf32>
    %29 = arith.mulf %18, %28 : vector<16x64xf32>
    %cst_15 = arith.constant 0.254829586 : f32
    %30 = vector.broadcast %cst_15 : f32 to vector<16x64xf32>
    %31 = arith.addf %30, %29 : vector<16x64xf32>
    %32 = arith.mulf %18, %31 : vector<16x64xf32>
    %cst_16 = arith.constant 0.000000e+00 : f32
    %33 = vector.broadcast %cst_16 : f32 to vector<16x64xf32>
    %34 = arith.subf %33, %13 : vector<16x64xf32>
    %35 = arith.mulf %34, %13 : vector<16x64xf32>
    %36 = math.exp %35 : vector<16x64xf32>
    %37 = arith.mulf %32, %36 : vector<16x64xf32>
    %cst_17 = arith.constant 1.000000e+00 : f32
    %38 = vector.broadcast %cst_17 : f32 to vector<16x64xf32>
    %39 = arith.subf %38, %37 : vector<16x64xf32>
    %cst_18 = arith.constant 0.000000e+00 : f32
    %40 = vector.broadcast %cst_18 : f32 to vector<16x64xf32>
    %41 = arith.cmpf oge, %12, %40 : vector<16x64xf32>
    %cst_19 = arith.constant 0.000000e+00 : f32
    %42 = vector.broadcast %cst_19 : f32 to vector<16x64xf32>
    %43 = arith.subf %42, %39 : vector<16x64xf32>
    %44 = arith.select %41, %39, %43 : vector<16x64xi1>, vector<16x64xf32>
    %cst_20 = arith.constant 1.000000e+00 : f32
    %45 = vector.broadcast %cst_20 : f32 to vector<16x64xf32>
    %46 = arith.addf %45, %44 : vector<16x64xf32>
    %47 = arith.mulf %10, %46 : vector<16x64xf32>
    %48 = arith.truncf %47 : vector<16x64xf32> to vector<16x64xbf16>
    %c0_21 = arith.constant 0 : index
    %c0_22 = arith.constant 0 : index
    %49 = vector.load %arg5[%c0_21, %c0_22] : memref<16x64xbf16, #tpu.memory_space<vmem>>, vector<16x64xbf16>
    tpu.vector_store %arg5[%c0_21, %c0_22], %48 {strides = array<i32>} : memref<16x64xbf16, #tpu.memory_space<vmem>>, vector<16x64xbf16>,
    return
  }
  func.func @transform_0(%arg0: i32) -> (i32, i32) {
    %c0_i32 = arith.constant 0 : i32
    %c0_i32_0 = arith.constant 0 : i32
    return %arg0, %c0_i32 : i32, i32
  }
  func.func @transform_1(%arg0: i32) -> (i32, i32) {
    %c0_i32 = arith.constant 0 : i32
    %c0_i32_0 = arith.constant 0 : i32
    %c0_i32_1 = arith.constant 0 : i32
    return %c0_i32, %c0_i32_0 : i32, i32
  }
  func.func @transform_2(%arg0: i32) -> (i32, i32) {
    %c0_i32 = arith.constant 0 : i32
    %c0_i32_0 = arith.constant 0 : i32
    %c0_i32_1 = arith.constant 0 : i32
    return %c0_i32, %c0_i32_0 : i32, i32
  }
  func.func @transform_3(%arg0: i32) -> (i32, i32) {
    %c0_i32 = arith.constant 0 : i32
    %c0_i32_0 = arith.constant 0 : i32
    %c0_i32_1 = arith.constant 0 : i32
    return %c0_i32, %c0_i32_0 : i32, i32
  }
  func.func @transform_4(%arg0: i32) -> (i32, i32) {
    %c0_i32 = arith.constant 0 : i32
    %c0_i32_0 = arith.constant 0 : i32
    return %arg0, %c0_i32 : i32, i32
  }
}

module attributes {stable_mosaic.version = 11 : i64} {
  func.func @_maxpool_kernel(%arg0: i32, %arg1: memref<8x4x64xbf16, #tpu.memory_space<vmem>>, %arg2: memref<8x64xbf16, #tpu.memory_space<vmem>>) attributes {dimension_semantics = [#tpu.dimension_semantics<parallel>], iteration_bounds = array<i64: 1>, scalar_prefetch = 0 : i64, scratch_operands = 0 : i64, tpu.core_type = #tpu.core_type<tc>, window_params = [{transform_indices = @transform_0, window_bounds = array<i64: 8, 4, 64>}, {transform_indices = @transform_1, window_bounds = array<i64: 8, 64>}]} {
    %c0 = arith.constant 0 : index
    %c0_0 = arith.constant 0 : index
    %c0_1 = arith.constant 0 : index
    %0 = vector.load %arg1[%c0, %c0_0, %c0_1] : memref<8x4x64xbf16, #tpu.memory_space<vmem>>, vector<8x4x64xbf16>
    %cst = arith.constant dense<0xFF80> : vector<8x64xbf16>
    %1 = vector.multi_reduction <maximumf>, %0, %cst [1] : vector<8x4x64xbf16> to vector<8x64xbf16>
    %c0_2 = arith.constant 0 : index
    %c0_3 = arith.constant 0 : index
    %2 = vector.load %arg2[%c0_2, %c0_3] : memref<8x64xbf16, #tpu.memory_space<vmem>>, vector<8x64xbf16>
    tpu.vector_store %arg2[%c0_2, %c0_3], %1 {strides = array<i32>} : memref<8x64xbf16, #tpu.memory_space<vmem>>, vector<8x64xbf16>,
    return
  }
  func.func @transform_0(%arg0: i32) -> (i32, i32, i32) {
    %c0_i32 = arith.constant 0 : i32
    %c0_i32_0 = arith.constant 0 : i32
    %c0_i32_1 = arith.constant 0 : i32
    return %arg0, %c0_i32, %c0_i32_0 : i32, i32, i32
  }
  func.func @transform_1(%arg0: i32) -> (i32, i32) {
    %c0_i32 = arith.constant 0 : i32
    %c0_i32_0 = arith.constant 0 : i32
    return %arg0, %c0_i32 : i32, i32
  }
}

module attributes {stable_mosaic.version = 11 : i64} {
  func.func @_matmul_bn_act_kernel(%arg0: i32, %arg1: memref<8x448xbf16, #tpu.memory_space<vmem>>, %arg2: memref<448x128xbf16, #tpu.memory_space<vmem>>, %arg3: memref<1x128xf32, #tpu.memory_space<vmem>>, %arg4: memref<1x128xf32, #tpu.memory_space<vmem>>, %arg5: memref<8x128xbf16, #tpu.memory_space<vmem>>) attributes {dimension_semantics = [#tpu.dimension_semantics<parallel>], iteration_bounds = array<i64: 1>, scalar_prefetch = 0 : i64, scratch_operands = 0 : i64, tpu.core_type = #tpu.core_type<tc>, window_params = [{transform_indices = @transform_0, window_bounds = array<i64: 8, 448>}, {pipeline_mode = #tpu.pipeline_mode<synchronous>, transform_indices = @transform_1, window_bounds = array<i64: 448, 128>}, {pipeline_mode = #tpu.pipeline_mode<synchronous>, transform_indices = @transform_2, window_bounds = array<i64: 1, 128>}, {pipeline_mode = #tpu.pipeline_mode<synchronous>, transform_indices = @transform_3, window_bounds = array<i64: 1, 128>}, {transform_indices = @transform_4, window_bounds = array<i64: 8, 128>}]} {
    %c0 = arith.constant 0 : index
    %c0_0 = arith.constant 0 : index
    %0 = vector.load %arg1[%c0, %c0_0] : memref<8x448xbf16, #tpu.memory_space<vmem>>, vector<8x448xbf16>
    %c0_1 = arith.constant 0 : index
    %c0_2 = arith.constant 0 : index
    %1 = vector.load %arg2[%c0_1, %c0_2] : memref<448x128xbf16, #tpu.memory_space<vmem>>, vector<448x128xbf16>
    %cst = arith.constant dense<0.000000e+00> : vector<8x128xf32>
    %2 = tpu.matmul %0, %1, %cst {dimension_numbers = #tpu.dot_dimension_numbers<[1], [0], [0], [1], [0, 0, 1, 1], [], []>} : vector<8x448xbf16>, vector<448x128xbf16>, vector<8x128xf32> -> vector<8x128xf32>
    %c0_3 = arith.constant 0 : index
    %c0_4 = arith.constant 0 : index
    %3 = vector.load %arg3[%c0_3, %c0_4] : memref<1x128xf32, #tpu.memory_space<vmem>>, vector<1x128xf32>
    %4 = vector.broadcast %3 : vector<1x128xf32> to vector<8x128xf32>
    %5 = arith.mulf %2, %4 : vector<8x128xf32>
    %c0_5 = arith.constant 0 : index
    %c0_6 = arith.constant 0 : index
    %6 = vector.load %arg4[%c0_5, %c0_6] : memref<1x128xf32, #tpu.memory_space<vmem>>, vector<1x128xf32>
    %7 = vector.broadcast %6 : vector<1x128xf32> to vector<8x128xf32>
    %8 = arith.addf %5, %7 : vector<8x128xf32>
    %cst_7 = arith.constant 5.000000e-01 : f32
    %9 = vector.broadcast %cst_7 : f32 to vector<8x128xf32>
    %10 = arith.mulf %9, %8 : vector<8x128xf32>
    %cst_8 = arith.constant 0.707106769 : f32
    %11 = vector.broadcast %cst_8 : f32 to vector<8x128xf32>
    %12 = arith.mulf %8, %11 : vector<8x128xf32>
    %13 = math.absf %12 : vector<8x128xf32>
    %cst_9 = arith.constant 0.327591091 : f32
    %14 = vector.broadcast %cst_9 : f32 to vector<8x128xf32>
    %15 = arith.mulf %14, %13 : vector<8x128xf32>
    %cst_10 = arith.constant 1.000000e+00 : f32
    %16 = vector.broadcast %cst_10 : f32 to vector<8x128xf32>
    %17 = arith.addf %16, %15 : vector<8x128xf32>
    %18 = tpu.reciprocal %17 {approx = true} : vector<8x128xf32> -> vector<8x128xf32>
    %cst_11 = arith.constant 1.06140542 : f32
    %19 = vector.broadcast %cst_11 : f32 to vector<8x128xf32>
    %20 = arith.mulf %18, %19 : vector<8x128xf32>
    %cst_12 = arith.constant -1.45315206 : f32
    %21 = vector.broadcast %cst_12 : f32 to vector<8x128xf32>
    %22 = arith.addf %21, %20 : vector<8x128xf32>
    %23 = arith.mulf %18, %22 : vector<8x128xf32>
    %cst_13 = arith.constant 1.42141378 : f32
    %24 = vector.broadcast %cst_13 : f32 to vector<8x128xf32>
    %25 = arith.addf %24, %23 : vector<8x128xf32>
    %26 = arith.mulf %18, %25 : vector<8x128xf32>
    %cst_14 = arith.constant -0.284496725 : f32
    %27 = vector.broadcast %cst_14 : f32 to vector<8x128xf32>
    %28 = arith.addf %27, %26 : vector<8x128xf32>
    %29 = arith.mulf %18, %28 : vector<8x128xf32>
    %cst_15 = arith.constant 0.254829586 : f32
    %30 = vector.broadcast %cst_15 : f32 to vector<8x128xf32>
    %31 = arith.addf %30, %29 : vector<8x128xf32>
    %32 = arith.mulf %18, %31 : vector<8x128xf32>
    %cst_16 = arith.constant 0.000000e+00 : f32
    %33 = vector.broadcast %cst_16 : f32 to vector<8x128xf32>
    %34 = arith.subf %33, %13 : vector<8x128xf32>
    %35 = arith.mulf %34, %13 : vector<8x128xf32>
    %36 = math.exp %35 : vector<8x128xf32>
    %37 = arith.mulf %32, %36 : vector<8x128xf32>
    %cst_17 = arith.constant 1.000000e+00 : f32
    %38 = vector.broadcast %cst_17 : f32 to vector<8x128xf32>
    %39 = arith.subf %38, %37 : vector<8x128xf32>
    %cst_18 = arith.constant 0.000000e+00 : f32
    %40 = vector.broadcast %cst_18 : f32 to vector<8x128xf32>
    %41 = arith.cmpf oge, %12, %40 : vector<8x128xf32>
    %cst_19 = arith.constant 0.000000e+00 : f32
    %42 = vector.broadcast %cst_19 : f32 to vector<8x128xf32>
    %43 = arith.subf %42, %39 : vector<8x128xf32>
    %44 = arith.select %41, %39, %43 : vector<8x128xi1>, vector<8x128xf32>
    %cst_20 = arith.constant 1.000000e+00 : f32
    %45 = vector.broadcast %cst_20 : f32 to vector<8x128xf32>
    %46 = arith.addf %45, %44 : vector<8x128xf32>
    %47 = arith.mulf %10, %46 : vector<8x128xf32>
    %48 = arith.truncf %47 : vector<8x128xf32> to vector<8x128xbf16>
    %c0_21 = arith.constant 0 : index
    %c0_22 = arith.constant 0 : index
    %49 = vector.load %arg5[%c0_21, %c0_22] : memref<8x128xbf16, #tpu.memory_space<vmem>>, vector<8x128xbf16>
    tpu.vector_store %arg5[%c0_21, %c0_22], %48 {strides = array<i32>} : memref<8x128xbf16, #tpu.memory_space<vmem>>, vector<8x128xbf16>,
    return
  }
  func.func @transform_0(%arg0: i32) -> (i32, i32) {
    %c0_i32 = arith.constant 0 : i32
    %c0_i32_0 = arith.constant 0 : i32
    return %arg0, %c0_i32 : i32, i32
  }
  func.func @transform_1(%arg0: i32) -> (i32, i32) {
    %c0_i32 = arith.constant 0 : i32
    %c0_i32_0 = arith.constant 0 : i32
    %c0_i32_1 = arith.constant 0 : i32
    return %c0_i32, %c0_i32_0 : i32, i32
  }
  func.func @transform_2(%arg0: i32) -> (i32, i32) {
    %c0_i32 = arith.constant 0 : i32
    %c0_i32_0 = arith.constant 0 : i32
    %c0_i32_1 = arith.constant 0 : i32
    return %c0_i32, %c0_i32_0 : i32, i32
  }
  func.func @transform_3(%arg0: i32) -> (i32, i32) {
    %c0_i32 = arith.constant 0 : i32
    %c0_i32_0 = arith.constant 0 : i32
    %c0_i32_1 = arith.constant 0 : i32
    return %c0_i32, %c0_i32_0 : i32, i32
  }
  func.func @transform_4(%arg0: i32) -> (i32, i32) {
    %c0_i32 = arith.constant 0 : i32
    %c0_i32_0 = arith.constant 0 : i32
    return %arg0, %c0_i32 : i32, i32
  }
}

module attributes {stable_mosaic.version = 11 : i64} {
  func.func @_matmul_bn_act_kernel(%arg0: i32, %arg1: memref<8x896xbf16, #tpu.memory_space<vmem>>, %arg2: memref<896x128xbf16, #tpu.memory_space<vmem>>, %arg3: memref<1x128xf32, #tpu.memory_space<vmem>>, %arg4: memref<1x128xf32, #tpu.memory_space<vmem>>, %arg5: memref<8x128xbf16, #tpu.memory_space<vmem>>) attributes {dimension_semantics = [#tpu.dimension_semantics<parallel>], iteration_bounds = array<i64: 1>, scalar_prefetch = 0 : i64, scratch_operands = 0 : i64, tpu.core_type = #tpu.core_type<tc>, window_params = [{transform_indices = @transform_0, window_bounds = array<i64: 8, 896>}, {pipeline_mode = #tpu.pipeline_mode<synchronous>, transform_indices = @transform_1, window_bounds = array<i64: 896, 128>}, {pipeline_mode = #tpu.pipeline_mode<synchronous>, transform_indices = @transform_2, window_bounds = array<i64: 1, 128>}, {pipeline_mode = #tpu.pipeline_mode<synchronous>, transform_indices = @transform_3, window_bounds = array<i64: 1, 128>}, {transform_indices = @transform_4, window_bounds = array<i64: 8, 128>}]} {
    %c0 = arith.constant 0 : index
    %c0_0 = arith.constant 0 : index
    %0 = vector.load %arg1[%c0, %c0_0] : memref<8x896xbf16, #tpu.memory_space<vmem>>, vector<8x896xbf16>
    %c0_1 = arith.constant 0 : index
    %c0_2 = arith.constant 0 : index
    %1 = vector.load %arg2[%c0_1, %c0_2] : memref<896x128xbf16, #tpu.memory_space<vmem>>, vector<896x128xbf16>
    %cst = arith.constant dense<0.000000e+00> : vector<8x128xf32>
    %2 = tpu.matmul %0, %1, %cst {dimension_numbers = #tpu.dot_dimension_numbers<[1], [0], [0], [1], [0, 0, 1, 1], [], []>} : vector<8x896xbf16>, vector<896x128xbf16>, vector<8x128xf32> -> vector<8x128xf32>
    %c0_3 = arith.constant 0 : index
    %c0_4 = arith.constant 0 : index
    %3 = vector.load %arg3[%c0_3, %c0_4] : memref<1x128xf32, #tpu.memory_space<vmem>>, vector<1x128xf32>
    %4 = vector.broadcast %3 : vector<1x128xf32> to vector<8x128xf32>
    %5 = arith.mulf %2, %4 : vector<8x128xf32>
    %c0_5 = arith.constant 0 : index
    %c0_6 = arith.constant 0 : index
    %6 = vector.load %arg4[%c0_5, %c0_6] : memref<1x128xf32, #tpu.memory_space<vmem>>, vector<1x128xf32>
    %7 = vector.broadcast %6 : vector<1x128xf32> to vector<8x128xf32>
    %8 = arith.addf %5, %7 : vector<8x128xf32>
    %cst_7 = arith.constant 5.000000e-01 : f32
    %9 = vector.broadcast %cst_7 : f32 to vector<8x128xf32>
    %10 = arith.mulf %9, %8 : vector<8x128xf32>
    %cst_8 = arith.constant 0.707106769 : f32
    %11 = vector.broadcast %cst_8 : f32 to vector<8x128xf32>
    %12 = arith.mulf %8, %11 : vector<8x128xf32>
    %13 = math.absf %12 : vector<8x128xf32>
    %cst_9 = arith.constant 0.327591091 : f32
    %14 = vector.broadcast %cst_9 : f32 to vector<8x128xf32>
    %15 = arith.mulf %14, %13 : vector<8x128xf32>
    %cst_10 = arith.constant 1.000000e+00 : f32
    %16 = vector.broadcast %cst_10 : f32 to vector<8x128xf32>
    %17 = arith.addf %16, %15 : vector<8x128xf32>
    %18 = tpu.reciprocal %17 {approx = true} : vector<8x128xf32> -> vector<8x128xf32>
    %cst_11 = arith.constant 1.06140542 : f32
    %19 = vector.broadcast %cst_11 : f32 to vector<8x128xf32>
    %20 = arith.mulf %18, %19 : vector<8x128xf32>
    %cst_12 = arith.constant -1.45315206 : f32
    %21 = vector.broadcast %cst_12 : f32 to vector<8x128xf32>
    %22 = arith.addf %21, %20 : vector<8x128xf32>
    %23 = arith.mulf %18, %22 : vector<8x128xf32>
    %cst_13 = arith.constant 1.42141378 : f32
    %24 = vector.broadcast %cst_13 : f32 to vector<8x128xf32>
    %25 = arith.addf %24, %23 : vector<8x128xf32>
    %26 = arith.mulf %18, %25 : vector<8x128xf32>
    %cst_14 = arith.constant -0.284496725 : f32
    %27 = vector.broadcast %cst_14 : f32 to vector<8x128xf32>
    %28 = arith.addf %27, %26 : vector<8x128xf32>
    %29 = arith.mulf %18, %28 : vector<8x128xf32>
    %cst_15 = arith.constant 0.254829586 : f32
    %30 = vector.broadcast %cst_15 : f32 to vector<8x128xf32>
    %31 = arith.addf %30, %29 : vector<8x128xf32>
    %32 = arith.mulf %18, %31 : vector<8x128xf32>
    %cst_16 = arith.constant 0.000000e+00 : f32
    %33 = vector.broadcast %cst_16 : f32 to vector<8x128xf32>
    %34 = arith.subf %33, %13 : vector<8x128xf32>
    %35 = arith.mulf %34, %13 : vector<8x128xf32>
    %36 = math.exp %35 : vector<8x128xf32>
    %37 = arith.mulf %32, %36 : vector<8x128xf32>
    %cst_17 = arith.constant 1.000000e+00 : f32
    %38 = vector.broadcast %cst_17 : f32 to vector<8x128xf32>
    %39 = arith.subf %38, %37 : vector<8x128xf32>
    %cst_18 = arith.constant 0.000000e+00 : f32
    %40 = vector.broadcast %cst_18 : f32 to vector<8x128xf32>
    %41 = arith.cmpf oge, %12, %40 : vector<8x128xf32>
    %cst_19 = arith.constant 0.000000e+00 : f32
    %42 = vector.broadcast %cst_19 : f32 to vector<8x128xf32>
    %43 = arith.subf %42, %39 : vector<8x128xf32>
    %44 = arith.select %41, %39, %43 : vector<8x128xi1>, vector<8x128xf32>
    %cst_20 = arith.constant 1.000000e+00 : f32
    %45 = vector.broadcast %cst_20 : f32 to vector<8x128xf32>
    %46 = arith.addf %45, %44 : vector<8x128xf32>
    %47 = arith.mulf %10, %46 : vector<8x128xf32>
    %48 = arith.truncf %47 : vector<8x128xf32> to vector<8x128xbf16>
    %c0_21 = arith.constant 0 : index
    %c0_22 = arith.constant 0 : index
    %49 = vector.load %arg5[%c0_21, %c0_22] : memref<8x128xbf16, #tpu.memory_space<vmem>>, vector<8x128xbf16>
    tpu.vector_store %arg5[%c0_21, %c0_22], %48 {strides = array<i32>} : memref<8x128xbf16, #tpu.memory_space<vmem>>, vector<8x128xbf16>,
    return
  }
  func.func @transform_0(%arg0: i32) -> (i32, i32) {
    %c0_i32 = arith.constant 0 : i32
    %c0_i32_0 = arith.constant 0 : i32
    return %arg0, %c0_i32 : i32, i32
  }
  func.func @transform_1(%arg0: i32) -> (i32, i32) {
    %c0_i32 = arith.constant 0 : i32
    %c0_i32_0 = arith.constant 0 : i32
    %c0_i32_1 = arith.constant 0 : i32
    return %c0_i32, %c0_i32_0 : i32, i32
  }
  func.func @transform_2(%arg0: i32) -> (i32, i32) {
    %c0_i32 = arith.constant 0 : i32
    %c0_i32_0 = arith.constant 0 : i32
    %c0_i32_1 = arith.constant 0 : i32
    return %c0_i32, %c0_i32_0 : i32, i32
  }
  func.func @transform_3(%arg0: i32) -> (i32, i32) {
    %c0_i32 = arith.constant 0 : i32
    %c0_i32_0 = arith.constant 0 : i32
    %c0_i32_1 = arith.constant 0 : i32
    return %c0_i32, %c0_i32_0 : i32, i32
  }
  func.func @transform_4(%arg0: i32) -> (i32, i32) {
    %c0_i32 = arith.constant 0 : i32
    %c0_i32_0 = arith.constant 0 : i32
    return %arg0, %c0_i32 : i32, i32
  }
}

module attributes {stable_mosaic.version = 11 : i64} {
  func.func @_maxpool_kernel(%arg0: i32, %arg1: memref<8x2x128xbf16, #tpu.memory_space<vmem>>, %arg2: memref<8x128xbf16, #tpu.memory_space<vmem>>) attributes {dimension_semantics = [#tpu.dimension_semantics<parallel>], iteration_bounds = array<i64: 1>, scalar_prefetch = 0 : i64, scratch_operands = 0 : i64, tpu.core_type = #tpu.core_type<tc>, window_params = [{transform_indices = @transform_0, window_bounds = array<i64: 8, 2, 128>}, {transform_indices = @transform_1, window_bounds = array<i64: 8, 128>}]} {
    %c0 = arith.constant 0 : index
    %c0_0 = arith.constant 0 : index
    %c0_1 = arith.constant 0 : index
    %0 = vector.load %arg1[%c0, %c0_0, %c0_1] : memref<8x2x128xbf16, #tpu.memory_space<vmem>>, vector<8x2x128xbf16>
    %cst = arith.constant dense<0xFF80> : vector<8x128xbf16>
    %1 = vector.multi_reduction <maximumf>, %0, %cst [1] : vector<8x2x128xbf16> to vector<8x128xbf16>
    %c0_2 = arith.constant 0 : index
    %c0_3 = arith.constant 0 : index
    %2 = vector.load %arg2[%c0_2, %c0_3] : memref<8x128xbf16, #tpu.memory_space<vmem>>, vector<8x128xbf16>
    tpu.vector_store %arg2[%c0_2, %c0_3], %1 {strides = array<i32>} : memref<8x128xbf16, #tpu.memory_space<vmem>>, vector<8x128xbf16>,
    return
  }
  func.func @transform_0(%arg0: i32) -> (i32, i32, i32) {
    %c0_i32 = arith.constant 0 : i32
    %c0_i32_0 = arith.constant 0 : i32
    %c0_i32_1 = arith.constant 0 : i32
    return %arg0, %c0_i32, %c0_i32_0 : i32, i32, i32
  }
  func.func @transform_1(%arg0: i32) -> (i32, i32) {
    %c0_i32 = arith.constant 0 : i32
    %c0_i32_0 = arith.constant 0 : i32
    return %arg0, %c0_i32 : i32, i32
  }
}

module attributes {stable_mosaic.version = 11 : i64} {
  func.func @_matmul_bn_act_kernel(%arg0: i32, %arg1: memref<80x64xbf16, #tpu.memory_space<vmem>>, %arg2: memref<64x64xbf16, #tpu.memory_space<vmem>>, %arg3: memref<1x64xf32, #tpu.memory_space<vmem>>, %arg4: memref<1x64xf32, #tpu.memory_space<vmem>>, %arg5: memref<80x64xbf16, #tpu.memory_space<vmem>>) attributes {dimension_semantics = [#tpu.dimension_semantics<parallel>], iteration_bounds = array<i64: 1>, scalar_prefetch = 0 : i64, scratch_operands = 0 : i64, tpu.core_type = #tpu.core_type<tc>, window_params = [{transform_indices = @transform_0, window_bounds = array<i64: 80, 64>}, {pipeline_mode = #tpu.pipeline_mode<synchronous>, transform_indices = @transform_1, window_bounds = array<i64: 64, 64>}, {pipeline_mode = #tpu.pipeline_mode<synchronous>, transform_indices = @transform_2, window_bounds = array<i64: 1, 64>}, {pipeline_mode = #tpu.pipeline_mode<synchronous>, transform_indices = @transform_3, window_bounds = array<i64: 1, 64>}, {transform_indices = @transform_4, window_bounds = array<i64: 80, 64>}]} {
    %c0 = arith.constant 0 : index
    %c0_0 = arith.constant 0 : index
    %0 = vector.load %arg1[%c0, %c0_0] : memref<80x64xbf16, #tpu.memory_space<vmem>>, vector<80x64xbf16>
    %c0_1 = arith.constant 0 : index
    %c0_2 = arith.constant 0 : index
    %1 = vector.load %arg2[%c0_1, %c0_2] : memref<64x64xbf16, #tpu.memory_space<vmem>>, vector<64x64xbf16>
    %cst = arith.constant dense<0.000000e+00> : vector<80x64xf32>
    %2 = tpu.matmul %0, %1, %cst {dimension_numbers = #tpu.dot_dimension_numbers<[1], [0], [0], [1], [0, 0, 1, 1], [], []>} : vector<80x64xbf16>, vector<64x64xbf16>, vector<80x64xf32> -> vector<80x64xf32>
    %c0_3 = arith.constant 0 : index
    %c0_4 = arith.constant 0 : index
    %3 = vector.load %arg3[%c0_3, %c0_4] : memref<1x64xf32, #tpu.memory_space<vmem>>, vector<1x64xf32>
    %4 = vector.broadcast %3 : vector<1x64xf32> to vector<80x64xf32>
    %5 = arith.mulf %2, %4 : vector<80x64xf32>
    %c0_5 = arith.constant 0 : index
    %c0_6 = arith.constant 0 : index
    %6 = vector.load %arg4[%c0_5, %c0_6] : memref<1x64xf32, #tpu.memory_space<vmem>>, vector<1x64xf32>
    %7 = vector.broadcast %6 : vector<1x64xf32> to vector<80x64xf32>
    %8 = arith.addf %5, %7 : vector<80x64xf32>
    %cst_7 = arith.constant 5.000000e-01 : f32
    %9 = vector.broadcast %cst_7 : f32 to vector<80x64xf32>
    %10 = arith.mulf %9, %8 : vector<80x64xf32>
    %cst_8 = arith.constant 0.707106769 : f32
    %11 = vector.broadcast %cst_8 : f32 to vector<80x64xf32>
    %12 = arith.mulf %8, %11 : vector<80x64xf32>
    %13 = math.absf %12 : vector<80x64xf32>
    %cst_9 = arith.constant 0.327591091 : f32
    %14 = vector.broadcast %cst_9 : f32 to vector<80x64xf32>
    %15 = arith.mulf %14, %13 : vector<80x64xf32>
    %cst_10 = arith.constant 1.000000e+00 : f32
    %16 = vector.broadcast %cst_10 : f32 to vector<80x64xf32>
    %17 = arith.addf %16, %15 : vector<80x64xf32>
    %18 = tpu.reciprocal %17 {approx = true} : vector<80x64xf32> -> vector<80x64xf32>
    %cst_11 = arith.constant 1.06140542 : f32
    %19 = vector.broadcast %cst_11 : f32 to vector<80x64xf32>
    %20 = arith.mulf %18, %19 : vector<80x64xf32>
    %cst_12 = arith.constant -1.45315206 : f32
    %21 = vector.broadcast %cst_12 : f32 to vector<80x64xf32>
    %22 = arith.addf %21, %20 : vector<80x64xf32>
    %23 = arith.mulf %18, %22 : vector<80x64xf32>
    %cst_13 = arith.constant 1.42141378 : f32
    %24 = vector.broadcast %cst_13 : f32 to vector<80x64xf32>
    %25 = arith.addf %24, %23 : vector<80x64xf32>
    %26 = arith.mulf %18, %25 : vector<80x64xf32>
    %cst_14 = arith.constant -0.284496725 : f32
    %27 = vector.broadcast %cst_14 : f32 to vector<80x64xf32>
    %28 = arith.addf %27, %26 : vector<80x64xf32>
    %29 = arith.mulf %18, %28 : vector<80x64xf32>
    %cst_15 = arith.constant 0.254829586 : f32
    %30 = vector.broadcast %cst_15 : f32 to vector<80x64xf32>
    %31 = arith.addf %30, %29 : vector<80x64xf32>
    %32 = arith.mulf %18, %31 : vector<80x64xf32>
    %cst_16 = arith.constant 0.000000e+00 : f32
    %33 = vector.broadcast %cst_16 : f32 to vector<80x64xf32>
    %34 = arith.subf %33, %13 : vector<80x64xf32>
    %35 = arith.mulf %34, %13 : vector<80x64xf32>
    %36 = math.exp %35 : vector<80x64xf32>
    %37 = arith.mulf %32, %36 : vector<80x64xf32>
    %cst_17 = arith.constant 1.000000e+00 : f32
    %38 = vector.broadcast %cst_17 : f32 to vector<80x64xf32>
    %39 = arith.subf %38, %37 : vector<80x64xf32>
    %cst_18 = arith.constant 0.000000e+00 : f32
    %40 = vector.broadcast %cst_18 : f32 to vector<80x64xf32>
    %41 = arith.cmpf oge, %12, %40 : vector<80x64xf32>
    %cst_19 = arith.constant 0.000000e+00 : f32
    %42 = vector.broadcast %cst_19 : f32 to vector<80x64xf32>
    %43 = arith.subf %42, %39 : vector<80x64xf32>
    %44 = arith.select %41, %39, %43 : vector<80x64xi1>, vector<80x64xf32>
    %cst_20 = arith.constant 1.000000e+00 : f32
    %45 = vector.broadcast %cst_20 : f32 to vector<80x64xf32>
    %46 = arith.addf %45, %44 : vector<80x64xf32>
    %47 = arith.mulf %10, %46 : vector<80x64xf32>
    %48 = arith.truncf %47 : vector<80x64xf32> to vector<80x64xbf16>
    %c0_21 = arith.constant 0 : index
    %c0_22 = arith.constant 0 : index
    %49 = vector.load %arg5[%c0_21, %c0_22] : memref<80x64xbf16, #tpu.memory_space<vmem>>, vector<80x64xbf16>
    tpu.vector_store %arg5[%c0_21, %c0_22], %48 {strides = array<i32>} : memref<80x64xbf16, #tpu.memory_space<vmem>>, vector<80x64xbf16>,
    return
  }
  func.func @transform_0(%arg0: i32) -> (i32, i32) {
    %c0_i32 = arith.constant 0 : i32
    %c0_i32_0 = arith.constant 0 : i32
    return %arg0, %c0_i32 : i32, i32
  }
  func.func @transform_1(%arg0: i32) -> (i32, i32) {
    %c0_i32 = arith.constant 0 : i32
    %c0_i32_0 = arith.constant 0 : i32
    %c0_i32_1 = arith.constant 0 : i32
    return %c0_i32, %c0_i32_0 : i32, i32
  }
  func.func @transform_2(%arg0: i32) -> (i32, i32) {
    %c0_i32 = arith.constant 0 : i32
    %c0_i32_0 = arith.constant 0 : i32
    %c0_i32_1 = arith.constant 0 : i32
    return %c0_i32, %c0_i32_0 : i32, i32
  }
  func.func @transform_3(%arg0: i32) -> (i32, i32) {
    %c0_i32 = arith.constant 0 : i32
    %c0_i32_0 = arith.constant 0 : i32
    %c0_i32_1 = arith.constant 0 : i32
    return %c0_i32, %c0_i32_0 : i32, i32
  }
  func.func @transform_4(%arg0: i32) -> (i32, i32) {
    %c0_i32 = arith.constant 0 : i32
    %c0_i32_0 = arith.constant 0 : i32
    return %arg0, %c0_i32 : i32, i32
  }
}

module attributes {stable_mosaic.version = 11 : i64} {
  func.func @_maxpool_kernel(%arg0: i32, %arg1: memref<48x8x64xbf16, #tpu.memory_space<vmem>>, %arg2: memref<48x64xbf16, #tpu.memory_space<vmem>>) attributes {dimension_semantics = [#tpu.dimension_semantics<parallel>], iteration_bounds = array<i64: 1>, scalar_prefetch = 0 : i64, scratch_operands = 0 : i64, tpu.core_type = #tpu.core_type<tc>, window_params = [{transform_indices = @transform_0, window_bounds = array<i64: 48, 8, 64>}, {transform_indices = @transform_1, window_bounds = array<i64: 48, 64>}]} {
    %c0 = arith.constant 0 : index
    %c0_0 = arith.constant 0 : index
    %c0_1 = arith.constant 0 : index
    %0 = vector.load %arg1[%c0, %c0_0, %c0_1] : memref<48x8x64xbf16, #tpu.memory_space<vmem>>, vector<48x8x64xbf16>
    %cst = arith.constant dense<0xFF80> : vector<48x64xbf16>
    %1 = vector.multi_reduction <maximumf>, %0, %cst [1] : vector<48x8x64xbf16> to vector<48x64xbf16>
    %c0_2 = arith.constant 0 : index
    %c0_3 = arith.constant 0 : index
    %2 = vector.load %arg2[%c0_2, %c0_3] : memref<48x64xbf16, #tpu.memory_space<vmem>>, vector<48x64xbf16>
    tpu.vector_store %arg2[%c0_2, %c0_3], %1 {strides = array<i32>} : memref<48x64xbf16, #tpu.memory_space<vmem>>, vector<48x64xbf16>,
    return
  }
  func.func @transform_0(%arg0: i32) -> (i32, i32, i32) {
    %c0_i32 = arith.constant 0 : i32
    %c0_i32_0 = arith.constant 0 : i32
    %c0_i32_1 = arith.constant 0 : i32
    return %arg0, %c0_i32, %c0_i32_0 : i32, i32, i32
  }
  func.func @transform_1(%arg0: i32) -> (i32, i32) {
    %c0_i32 = arith.constant 0 : i32
    %c0_i32_0 = arith.constant 0 : i32
    return %arg0, %c0_i32 : i32, i32
  }
}

module attributes {stable_mosaic.version = 11 : i64} {
  func.func @_matmul_bn_act_kernel(%arg0: i32, %arg1: memref<48x512xbf16, #tpu.memory_space<vmem>>, %arg2: memref<512x128xbf16, #tpu.memory_space<vmem>>, %arg3: memref<1x128xf32, #tpu.memory_space<vmem>>, %arg4: memref<1x128xf32, #tpu.memory_space<vmem>>, %arg5: memref<48x128xbf16, #tpu.memory_space<vmem>>) attributes {dimension_semantics = [#tpu.dimension_semantics<parallel>], iteration_bounds = array<i64: 1>, scalar_prefetch = 0 : i64, scratch_operands = 0 : i64, tpu.core_type = #tpu.core_type<tc>, window_params = [{transform_indices = @transform_0, window_bounds = array<i64: 48, 512>}, {pipeline_mode = #tpu.pipeline_mode<synchronous>, transform_indices = @transform_1, window_bounds = array<i64: 512, 128>}, {pipeline_mode = #tpu.pipeline_mode<synchronous>, transform_indices = @transform_2, window_bounds = array<i64: 1, 128>}, {pipeline_mode = #tpu.pipeline_mode<synchronous>, transform_indices = @transform_3, window_bounds = array<i64: 1, 128>}, {transform_indices = @transform_4, window_bounds = array<i64: 48, 128>}]} {
    %c0 = arith.constant 0 : index
    %c0_0 = arith.constant 0 : index
    %0 = vector.load %arg1[%c0, %c0_0] : memref<48x512xbf16, #tpu.memory_space<vmem>>, vector<48x512xbf16>
    %c0_1 = arith.constant 0 : index
    %c0_2 = arith.constant 0 : index
    %1 = vector.load %arg2[%c0_1, %c0_2] : memref<512x128xbf16, #tpu.memory_space<vmem>>, vector<512x128xbf16>
    %cst = arith.constant dense<0.000000e+00> : vector<48x128xf32>
    %2 = tpu.matmul %0, %1, %cst {dimension_numbers = #tpu.dot_dimension_numbers<[1], [0], [0], [1], [0, 0, 1, 1], [], []>} : vector<48x512xbf16>, vector<512x128xbf16>, vector<48x128xf32> -> vector<48x128xf32>
    %c0_3 = arith.constant 0 : index
    %c0_4 = arith.constant 0 : index
    %3 = vector.load %arg3[%c0_3, %c0_4] : memref<1x128xf32, #tpu.memory_space<vmem>>, vector<1x128xf32>
    %4 = vector.broadcast %3 : vector<1x128xf32> to vector<48x128xf32>
    %5 = arith.mulf %2, %4 : vector<48x128xf32>
    %c0_5 = arith.constant 0 : index
    %c0_6 = arith.constant 0 : index
    %6 = vector.load %arg4[%c0_5, %c0_6] : memref<1x128xf32, #tpu.memory_space<vmem>>, vector<1x128xf32>
    %7 = vector.broadcast %6 : vector<1x128xf32> to vector<48x128xf32>
    %8 = arith.addf %5, %7 : vector<48x128xf32>
    %cst_7 = arith.constant 5.000000e-01 : f32
    %9 = vector.broadcast %cst_7 : f32 to vector<48x128xf32>
    %10 = arith.mulf %9, %8 : vector<48x128xf32>
    %cst_8 = arith.constant 0.707106769 : f32
    %11 = vector.broadcast %cst_8 : f32 to vector<48x128xf32>
    %12 = arith.mulf %8, %11 : vector<48x128xf32>
    %13 = math.absf %12 : vector<48x128xf32>
    %cst_9 = arith.constant 0.327591091 : f32
    %14 = vector.broadcast %cst_9 : f32 to vector<48x128xf32>
    %15 = arith.mulf %14, %13 : vector<48x128xf32>
    %cst_10 = arith.constant 1.000000e+00 : f32
    %16 = vector.broadcast %cst_10 : f32 to vector<48x128xf32>
    %17 = arith.addf %16, %15 : vector<48x128xf32>
    %18 = tpu.reciprocal %17 {approx = true} : vector<48x128xf32> -> vector<48x128xf32>
    %cst_11 = arith.constant 1.06140542 : f32
    %19 = vector.broadcast %cst_11 : f32 to vector<48x128xf32>
    %20 = arith.mulf %18, %19 : vector<48x128xf32>
    %cst_12 = arith.constant -1.45315206 : f32
    %21 = vector.broadcast %cst_12 : f32 to vector<48x128xf32>
    %22 = arith.addf %21, %20 : vector<48x128xf32>
    %23 = arith.mulf %18, %22 : vector<48x128xf32>
    %cst_13 = arith.constant 1.42141378 : f32
    %24 = vector.broadcast %cst_13 : f32 to vector<48x128xf32>
    %25 = arith.addf %24, %23 : vector<48x128xf32>
    %26 = arith.mulf %18, %25 : vector<48x128xf32>
    %cst_14 = arith.constant -0.284496725 : f32
    %27 = vector.broadcast %cst_14 : f32 to vector<48x128xf32>
    %28 = arith.addf %27, %26 : vector<48x128xf32>
    %29 = arith.mulf %18, %28 : vector<48x128xf32>
    %cst_15 = arith.constant 0.254829586 : f32
    %30 = vector.broadcast %cst_15 : f32 to vector<48x128xf32>
    %31 = arith.addf %30, %29 : vector<48x128xf32>
    %32 = arith.mulf %18, %31 : vector<48x128xf32>
    %cst_16 = arith.constant 0.000000e+00 : f32
    %33 = vector.broadcast %cst_16 : f32 to vector<48x128xf32>
    %34 = arith.subf %33, %13 : vector<48x128xf32>
    %35 = arith.mulf %34, %13 : vector<48x128xf32>
    %36 = math.exp %35 : vector<48x128xf32>
    %37 = arith.mulf %32, %36 : vector<48x128xf32>
    %cst_17 = arith.constant 1.000000e+00 : f32
    %38 = vector.broadcast %cst_17 : f32 to vector<48x128xf32>
    %39 = arith.subf %38, %37 : vector<48x128xf32>
    %cst_18 = arith.constant 0.000000e+00 : f32
    %40 = vector.broadcast %cst_18 : f32 to vector<48x128xf32>
    %41 = arith.cmpf oge, %12, %40 : vector<48x128xf32>
    %cst_19 = arith.constant 0.000000e+00 : f32
    %42 = vector.broadcast %cst_19 : f32 to vector<48x128xf32>
    %43 = arith.subf %42, %39 : vector<48x128xf32>
    %44 = arith.select %41, %39, %43 : vector<48x128xi1>, vector<48x128xf32>
    %cst_20 = arith.constant 1.000000e+00 : f32
    %45 = vector.broadcast %cst_20 : f32 to vector<48x128xf32>
    %46 = arith.addf %45, %44 : vector<48x128xf32>
    %47 = arith.mulf %10, %46 : vector<48x128xf32>
    %48 = arith.truncf %47 : vector<48x128xf32> to vector<48x128xbf16>
    %c0_21 = arith.constant 0 : index
    %c0_22 = arith.constant 0 : index
    %49 = vector.load %arg5[%c0_21, %c0_22] : memref<48x128xbf16, #tpu.memory_space<vmem>>, vector<48x128xbf16>
    tpu.vector_store %arg5[%c0_21, %c0_22], %48 {strides = array<i32>} : memref<48x128xbf16, #tpu.memory_space<vmem>>, vector<48x128xbf16>,
    return
  }
  func.func @transform_0(%arg0: i32) -> (i32, i32) {
    %c0_i32 = arith.constant 0 : i32
    %c0_i32_0 = arith.constant 0 : i32
    return %arg0, %c0_i32 : i32, i32
  }
  func.func @transform_1(%arg0: i32) -> (i32, i32) {
    %c0_i32 = arith.constant 0 : i32
    %c0_i32_0 = arith.constant 0 : i32
    %c0_i32_1 = arith.constant 0 : i32
    return %c0_i32, %c0_i32_0 : i32, i32
  }
  func.func @transform_2(%arg0: i32) -> (i32, i32) {
    %c0_i32 = arith.constant 0 : i32
    %c0_i32_0 = arith.constant 0 : i32
    %c0_i32_1 = arith.constant 0 : i32
    return %c0_i32, %c0_i32_0 : i32, i32
  }
  func.func @transform_3(%arg0: i32) -> (i32, i32) {
    %c0_i32 = arith.constant 0 : i32
    %c0_i32_0 = arith.constant 0 : i32
    %c0_i32_1 = arith.constant 0 : i32
    return %c0_i32, %c0_i32_0 : i32, i32
  }
  func.func @transform_4(%arg0: i32) -> (i32, i32) {
    %c0_i32 = arith.constant 0 : i32
    %c0_i32_0 = arith.constant 0 : i32
    return %arg0, %c0_i32 : i32, i32
  }
}

module attributes {stable_mosaic.version = 11 : i64} {
  func.func @_matmul_bn_act_kernel(%arg0: i32, %arg1: memref<48x1024xbf16, #tpu.memory_space<vmem>>, %arg2: memref<1024x128xbf16, #tpu.memory_space<vmem>>, %arg3: memref<1x128xf32, #tpu.memory_space<vmem>>, %arg4: memref<1x128xf32, #tpu.memory_space<vmem>>, %arg5: memref<48x128xbf16, #tpu.memory_space<vmem>>) attributes {dimension_semantics = [#tpu.dimension_semantics<parallel>], iteration_bounds = array<i64: 1>, scalar_prefetch = 0 : i64, scratch_operands = 0 : i64, tpu.core_type = #tpu.core_type<tc>, window_params = [{transform_indices = @transform_0, window_bounds = array<i64: 48, 1024>}, {pipeline_mode = #tpu.pipeline_mode<synchronous>, transform_indices = @transform_1, window_bounds = array<i64: 1024, 128>}, {pipeline_mode = #tpu.pipeline_mode<synchronous>, transform_indices = @transform_2, window_bounds = array<i64: 1, 128>}, {pipeline_mode = #tpu.pipeline_mode<synchronous>, transform_indices = @transform_3, window_bounds = array<i64: 1, 128>}, {transform_indices = @transform_4, window_bounds = array<i64: 48, 128>}]} {
    %c0 = arith.constant 0 : index
    %c0_0 = arith.constant 0 : index
    %0 = vector.load %arg1[%c0, %c0_0] : memref<48x1024xbf16, #tpu.memory_space<vmem>>, vector<48x1024xbf16>
    %c0_1 = arith.constant 0 : index
    %c0_2 = arith.constant 0 : index
    %1 = vector.load %arg2[%c0_1, %c0_2] : memref<1024x128xbf16, #tpu.memory_space<vmem>>, vector<1024x128xbf16>
    %cst = arith.constant dense<0.000000e+00> : vector<48x128xf32>
    %2 = tpu.matmul %0, %1, %cst {dimension_numbers = #tpu.dot_dimension_numbers<[1], [0], [0], [1], [0, 0, 1, 1], [], []>} : vector<48x1024xbf16>, vector<1024x128xbf16>, vector<48x128xf32> -> vector<48x128xf32>
    %c0_3 = arith.constant 0 : index
    %c0_4 = arith.constant 0 : index
    %3 = vector.load %arg3[%c0_3, %c0_4] : memref<1x128xf32, #tpu.memory_space<vmem>>, vector<1x128xf32>
    %4 = vector.broadcast %3 : vector<1x128xf32> to vector<48x128xf32>
    %5 = arith.mulf %2, %4 : vector<48x128xf32>
    %c0_5 = arith.constant 0 : index
    %c0_6 = arith.constant 0 : index
    %6 = vector.load %arg4[%c0_5, %c0_6] : memref<1x128xf32, #tpu.memory_space<vmem>>, vector<1x128xf32>
    %7 = vector.broadcast %6 : vector<1x128xf32> to vector<48x128xf32>
    %8 = arith.addf %5, %7 : vector<48x128xf32>
    %cst_7 = arith.constant 5.000000e-01 : f32
    %9 = vector.broadcast %cst_7 : f32 to vector<48x128xf32>
    %10 = arith.mulf %9, %8 : vector<48x128xf32>
    %cst_8 = arith.constant 0.707106769 : f32
    %11 = vector.broadcast %cst_8 : f32 to vector<48x128xf32>
    %12 = arith.mulf %8, %11 : vector<48x128xf32>
    %13 = math.absf %12 : vector<48x128xf32>
    %cst_9 = arith.constant 0.327591091 : f32
    %14 = vector.broadcast %cst_9 : f32 to vector<48x128xf32>
    %15 = arith.mulf %14, %13 : vector<48x128xf32>
    %cst_10 = arith.constant 1.000000e+00 : f32
    %16 = vector.broadcast %cst_10 : f32 to vector<48x128xf32>
    %17 = arith.addf %16, %15 : vector<48x128xf32>
    %18 = tpu.reciprocal %17 {approx = true} : vector<48x128xf32> -> vector<48x128xf32>
    %cst_11 = arith.constant 1.06140542 : f32
    %19 = vector.broadcast %cst_11 : f32 to vector<48x128xf32>
    %20 = arith.mulf %18, %19 : vector<48x128xf32>
    %cst_12 = arith.constant -1.45315206 : f32
    %21 = vector.broadcast %cst_12 : f32 to vector<48x128xf32>
    %22 = arith.addf %21, %20 : vector<48x128xf32>
    %23 = arith.mulf %18, %22 : vector<48x128xf32>
    %cst_13 = arith.constant 1.42141378 : f32
    %24 = vector.broadcast %cst_13 : f32 to vector<48x128xf32>
    %25 = arith.addf %24, %23 : vector<48x128xf32>
    %26 = arith.mulf %18, %25 : vector<48x128xf32>
    %cst_14 = arith.constant -0.284496725 : f32
    %27 = vector.broadcast %cst_14 : f32 to vector<48x128xf32>
    %28 = arith.addf %27, %26 : vector<48x128xf32>
    %29 = arith.mulf %18, %28 : vector<48x128xf32>
    %cst_15 = arith.constant 0.254829586 : f32
    %30 = vector.broadcast %cst_15 : f32 to vector<48x128xf32>
    %31 = arith.addf %30, %29 : vector<48x128xf32>
    %32 = arith.mulf %18, %31 : vector<48x128xf32>
    %cst_16 = arith.constant 0.000000e+00 : f32
    %33 = vector.broadcast %cst_16 : f32 to vector<48x128xf32>
    %34 = arith.subf %33, %13 : vector<48x128xf32>
    %35 = arith.mulf %34, %13 : vector<48x128xf32>
    %36 = math.exp %35 : vector<48x128xf32>
    %37 = arith.mulf %32, %36 : vector<48x128xf32>
    %cst_17 = arith.constant 1.000000e+00 : f32
    %38 = vector.broadcast %cst_17 : f32 to vector<48x128xf32>
    %39 = arith.subf %38, %37 : vector<48x128xf32>
    %cst_18 = arith.constant 0.000000e+00 : f32
    %40 = vector.broadcast %cst_18 : f32 to vector<48x128xf32>
    %41 = arith.cmpf oge, %12, %40 : vector<48x128xf32>
    %cst_19 = arith.constant 0.000000e+00 : f32
    %42 = vector.broadcast %cst_19 : f32 to vector<48x128xf32>
    %43 = arith.subf %42, %39 : vector<48x128xf32>
    %44 = arith.select %41, %39, %43 : vector<48x128xi1>, vector<48x128xf32>
    %cst_20 = arith.constant 1.000000e+00 : f32
    %45 = vector.broadcast %cst_20 : f32 to vector<48x128xf32>
    %46 = arith.addf %45, %44 : vector<48x128xf32>
    %47 = arith.mulf %10, %46 : vector<48x128xf32>
    %48 = arith.truncf %47 : vector<48x128xf32> to vector<48x128xbf16>
    %c0_21 = arith.constant 0 : index
    %c0_22 = arith.constant 0 : index
    %49 = vector.load %arg5[%c0_21, %c0_22] : memref<48x128xbf16, #tpu.memory_space<vmem>>, vector<48x128xbf16>
    tpu.vector_store %arg5[%c0_21, %c0_22], %48 {strides = array<i32>} : memref<48x128xbf16, #tpu.memory_space<vmem>>, vector<48x128xbf16>,
    return
  }
  func.func @transform_0(%arg0: i32) -> (i32, i32) {
    %c0_i32 = arith.constant 0 : i32
    %c0_i32_0 = arith.constant 0 : i32
    return %arg0, %c0_i32 : i32, i32
  }
  func.func @transform_1(%arg0: i32) -> (i32, i32) {
    %c0_i32 = arith.constant 0 : i32
    %c0_i32_0 = arith.constant 0 : i32
    %c0_i32_1 = arith.constant 0 : i32
    return %c0_i32, %c0_i32_0 : i32, i32
  }
  func.func @transform_2(%arg0: i32) -> (i32, i32) {
    %c0_i32 = arith.constant 0 : i32
    %c0_i32_0 = arith.constant 0 : i32
    %c0_i32_1 = arith.constant 0 : i32
    return %c0_i32, %c0_i32_0 : i32, i32
  }
  func.func @transform_3(%arg0: i32) -> (i32, i32) {
    %c0_i32 = arith.constant 0 : i32
    %c0_i32_0 = arith.constant 0 : i32
    %c0_i32_1 = arith.constant 0 : i32
    return %c0_i32, %c0_i32_0 : i32, i32
  }
  func.func @transform_4(%arg0: i32) -> (i32, i32) {
    %c0_i32 = arith.constant 0 : i32
    %c0_i32_0 = arith.constant 0 : i32
    return %arg0, %c0_i32 : i32, i32
  }
}

module attributes {stable_mosaic.version = 11 : i64} {
  func.func @_maxpool_kernel(%arg0: i32, %arg1: memref<16x4x128xbf16, #tpu.memory_space<vmem>>, %arg2: memref<16x128xbf16, #tpu.memory_space<vmem>>) attributes {dimension_semantics = [#tpu.dimension_semantics<parallel>], iteration_bounds = array<i64: 1>, scalar_prefetch = 0 : i64, scratch_operands = 0 : i64, tpu.core_type = #tpu.core_type<tc>, window_params = [{transform_indices = @transform_0, window_bounds = array<i64: 16, 4, 128>}, {transform_indices = @transform_1, window_bounds = array<i64: 16, 128>}]} {
    %c0 = arith.constant 0 : index
    %c0_0 = arith.constant 0 : index
    %c0_1 = arith.constant 0 : index
    %0 = vector.load %arg1[%c0, %c0_0, %c0_1] : memref<16x4x128xbf16, #tpu.memory_space<vmem>>, vector<16x4x128xbf16>
    %cst = arith.constant dense<0xFF80> : vector<16x128xbf16>
    %1 = vector.multi_reduction <maximumf>, %0, %cst [1] : vector<16x4x128xbf16> to vector<16x128xbf16>
    %c0_2 = arith.constant 0 : index
    %c0_3 = arith.constant 0 : index
    %2 = vector.load %arg2[%c0_2, %c0_3] : memref<16x128xbf16, #tpu.memory_space<vmem>>, vector<16x128xbf16>
    tpu.vector_store %arg2[%c0_2, %c0_3], %1 {strides = array<i32>} : memref<16x128xbf16, #tpu.memory_space<vmem>>, vector<16x128xbf16>,
    return
  }
  func.func @transform_0(%arg0: i32) -> (i32, i32, i32) {
    %c0_i32 = arith.constant 0 : i32
    %c0_i32_0 = arith.constant 0 : i32
    %c0_i32_1 = arith.constant 0 : i32
    return %arg0, %c0_i32, %c0_i32_0 : i32, i32, i32
  }
  func.func @transform_1(%arg0: i32) -> (i32, i32) {
    %c0_i32 = arith.constant 0 : i32
    %c0_i32_0 = arith.constant 0 : i32
    return %arg0, %c0_i32 : i32, i32
  }
}

module attributes {stable_mosaic.version = 11 : i64} {
  func.func @_afr_se_kernel(%arg0: memref<18x128xbf16, #tpu.memory_space<vmem>>, %arg1: memref<2x18xf32, #tpu.memory_space<vmem>>, %arg2: memref<18x2xf32, #tpu.memory_space<vmem>>, %arg3: memref<128x128xbf16, #tpu.memory_space<vmem>>, %arg4: memref<1x128xf32, #tpu.memory_space<vmem>>, %arg5: memref<1x128xf32, #tpu.memory_space<vmem>>, %arg6: memref<128x128xbf16, #tpu.memory_space<vmem>>, %arg7: memref<1x128xf32, #tpu.memory_space<vmem>>, %arg8: memref<1x128xf32, #tpu.memory_space<vmem>>, %arg9: memref<1x128xf32, #tpu.memory_space<vmem>>, %arg10: memref<1x128xf32, #tpu.memory_space<vmem>>, %arg11: memref<128x128xbf16, #tpu.memory_space<vmem>>, %arg12: memref<1x128xf32, #tpu.memory_space<vmem>>, %arg13: memref<1x128xf32, #tpu.memory_space<vmem>>, %arg14: memref<18x128xf32, #tpu.memory_space<vmem>>) attributes {dimension_semantics = [], scalar_prefetch = 0 : i64, scratch_operands = 0 : i64, tpu.core_type = #tpu.core_type<tc>} {
    %c0 = arith.constant 0 : index
    %c0_0 = arith.constant 0 : index
    %0 = vector.load %arg0[%c0, %c0_0] : memref<18x128xbf16, #tpu.memory_space<vmem>>, vector<18x128xbf16>
    %c0_1 = arith.constant 0 : index
    %c0_2 = arith.constant 0 : index
    %1 = vector.load %arg3[%c0_1, %c0_2] : memref<128x128xbf16, #tpu.memory_space<vmem>>, vector<128x128xbf16>
    %cst = arith.constant dense<0.000000e+00> : vector<18x128xf32>
    %2 = tpu.matmul %0, %1, %cst {dimension_numbers = #tpu.dot_dimension_numbers<[1], [0], [0], [1], [0, 0, 1, 1], [], []>} : vector<18x128xbf16>, vector<128x128xbf16>, vector<18x128xf32> -> vector<18x128xf32>
    %c0_3 = arith.constant 0 : index
    %c0_4 = arith.constant 0 : index
    %3 = vector.load %arg4[%c0_3, %c0_4] : memref<1x128xf32, #tpu.memory_space<vmem>>, vector<1x128xf32>
    %4 = vector.broadcast %3 : vector<1x128xf32> to vector<18x128xf32>
    %5 = arith.mulf %2, %4 : vector<18x128xf32>
    %c0_5 = arith.constant 0 : index
    %c0_6 = arith.constant 0 : index
    %6 = vector.load %arg5[%c0_5, %c0_6] : memref<1x128xf32, #tpu.memory_space<vmem>>, vector<1x128xf32>
    %7 = vector.broadcast %6 : vector<1x128xf32> to vector<18x128xf32>
    %8 = arith.addf %5, %7 : vector<18x128xf32>
    %cst_7 = arith.constant 0.000000e+00 : f32
    %9 = vector.broadcast %cst_7 : f32 to vector<18x128xf32>
    %10 = arith.maximumf %8, %9 : vector<18x128xf32>
    %11 = arith.truncf %10 : vector<18x128xf32> to vector<18x128xbf16>
    %c0_8 = arith.constant 0 : index
    %c0_9 = arith.constant 0 : index
    %12 = vector.load %arg6[%c0_8, %c0_9] : memref<128x128xbf16, #tpu.memory_space<vmem>>, vector<128x128xbf16>
    %cst_10 = arith.constant dense<0.000000e+00> : vector<18x128xf32>
    %13 = tpu.matmul %11, %12, %cst_10 {dimension_numbers = #tpu.dot_dimension_numbers<[1], [0], [0], [1], [0, 0, 1, 1], [], []>} : vector<18x128xbf16>, vector<128x128xbf16>, vector<18x128xf32> -> vector<18x128xf32>
    %c0_11 = arith.constant 0 : index
    %c0_12 = arith.constant 0 : index
    %14 = vector.load %arg7[%c0_11, %c0_12] : memref<1x128xf32, #tpu.memory_space<vmem>>, vector<1x128xf32>
    %15 = vector.broadcast %14 : vector<1x128xf32> to vector<18x128xf32>
    %16 = arith.mulf %13, %15 : vector<18x128xf32>
    %c0_13 = arith.constant 0 : index
    %c0_14 = arith.constant 0 : index
    %17 = vector.load %arg8[%c0_13, %c0_14] : memref<1x128xf32, #tpu.memory_space<vmem>>, vector<1x128xf32>
    %18 = vector.broadcast %17 : vector<1x128xf32> to vector<18x128xf32>
    %19 = arith.addf %16, %18 : vector<18x128xf32>
    %c0_15 = arith.constant 0 : index
    %c0_16 = arith.constant 0 : index
    %20 = vector.load %arg1[%c0_15, %c0_16] : memref<2x18xf32, #tpu.memory_space<vmem>>, vector<2x18xf32>
    %cst_17 = arith.constant dense<0.000000e+00> : vector<2x128xf32>
    %21 = tpu.matmul %20, %19, %cst_17 {dimension_numbers = #tpu.dot_dimension_numbers<[1], [0], [0], [1], [0, 0, 1, 1], [], []>} : vector<2x18xf32>, vector<18x128xf32>, vector<2x128xf32> -> vector<2x128xf32>
    %c0_18 = arith.constant 0 : index
    %c0_19 = arith.constant 0 : index
    %22 = vector.load %arg9[%c0_18, %c0_19] : memref<1x128xf32, #tpu.memory_space<vmem>>, vector<1x128xf32>
    %23 = vector.broadcast %22 : vector<1x128xf32> to vector<2x128xf32>
    %24 = arith.mulf %21, %23 : vector<2x128xf32>
    %cst_20 = arith.constant dense<0.000000e+00> : vector<2xf32>
    %25 = vector.multi_reduction <add>, %24, %cst_20 [1] : vector<2x128xf32> to vector<2xf32>
    %26 = vector.shape_cast %25 : vector<2xf32> to vector<2x1xf32>
    %cst_21 = arith.constant 0.000000e+00 : f32
    %27 = vector.broadcast %cst_21 : f32 to vector<2x1xf32>
    %28 = arith.maximumf %26, %27 : vector<2x1xf32>
    %c0_22 = arith.constant 0 : index
    %c0_23 = arith.constant 0 : index
    %29 = vector.load %arg10[%c0_22, %c0_23] : memref<1x128xf32, #tpu.memory_space<vmem>>, vector<1x128xf32>
    %30 = vector.broadcast %28 : vector<2x1xf32> to vector<2x128xf32>
    %31 = vector.broadcast %29 : vector<1x128xf32> to vector<2x128xf32>
    %32 = arith.mulf %30, %31 : vector<2x128xf32>
    %33 = arith.negf %32 : vector<2x128xf32>
    %34 = math.exp %33 : vector<2x128xf32>
    %cst_24 = arith.constant 1.000000e+00 : f32
    %35 = vector.broadcast %cst_24 : f32 to vector<2x128xf32>
    %36 = arith.addf %35, %34 : vector<2x128xf32>
    %37 = arith.divf %35, %36 : vector<2x128xf32>
    %c0_25 = arith.constant 0 : index
    %c0_26 = arith.constant 0 : index
    %38 = vector.load %arg2[%c0_25, %c0_26] : memref<18x2xf32, #tpu.memory_space<vmem>>, vector<18x2xf32>
    %cst_27 = arith.constant dense<0.000000e+00> : vector<18x128xf32>
    %39 = tpu.matmul %38, %37, %cst_27 {dimension_numbers = #tpu.dot_dimension_numbers<[1], [0], [0], [1], [0, 0, 1, 1], [], []>} : vector<18x2xf32>, vector<2x128xf32>, vector<18x128xf32> -> vector<18x128xf32>
    %40 = arith.mulf %19, %39 : vector<18x128xf32>
    %c0_28 = arith.constant 0 : index
    %c0_29 = arith.constant 0 : index
    %41 = vector.load %arg11[%c0_28, %c0_29] : memref<128x128xbf16, #tpu.memory_space<vmem>>, vector<128x128xbf16>
    %cst_30 = arith.constant dense<0.000000e+00> : vector<18x128xf32>
    %42 = tpu.matmul %0, %41, %cst_30 {dimension_numbers = #tpu.dot_dimension_numbers<[1], [0], [0], [1], [0, 0, 1, 1], [], []>} : vector<18x128xbf16>, vector<128x128xbf16>, vector<18x128xf32> -> vector<18x128xf32>
    %c0_31 = arith.constant 0 : index
    %c0_32 = arith.constant 0 : index
    %43 = vector.load %arg12[%c0_31, %c0_32] : memref<1x128xf32, #tpu.memory_space<vmem>>, vector<1x128xf32>
    %44 = vector.broadcast %43 : vector<1x128xf32> to vector<18x128xf32>
    %45 = arith.mulf %42, %44 : vector<18x128xf32>
    %c0_33 = arith.constant 0 : index
    %c0_34 = arith.constant 0 : index
    %46 = vector.load %arg13[%c0_33, %c0_34] : memref<1x128xf32, #tpu.memory_space<vmem>>, vector<1x128xf32>
    %47 = vector.broadcast %46 : vector<1x128xf32> to vector<18x128xf32>
    %48 = arith.addf %45, %47 : vector<18x128xf32>
    %49 = arith.addf %40, %48 : vector<18x128xf32>
    %cst_35 = arith.constant 0.000000e+00 : f32
    %50 = vector.broadcast %cst_35 : f32 to vector<18x128xf32>
    %51 = arith.maximumf %49, %50 : vector<18x128xf32>
    %c0_36 = arith.constant 0 : index
    %c0_37 = arith.constant 0 : index
    %52 = vector.load %arg14[%c0_36, %c0_37] : memref<18x128xf32, #tpu.memory_space<vmem>>, vector<18x128xf32>
    tpu.vector_store %arg14[%c0_36, %c0_37], %51 {strides = array<i32>} : memref<18x128xf32, #tpu.memory_space<vmem>>, vector<18x128xf32>,
    return
  }
}

</mosaic_0001>

<llo_original>
// kernel: mrcnn_forward.17
$region0: #{mrcnn_forward.17}
  #allocation0 [shape = 'u32[]', space=smem, size = 0x4, offset = 0x4, fixed_abs, tag = 'smem constant byte address 0x4 - core index']
  #allocation1 [shape = 'u32[144,128]{1,0:T(1,128)}', space=vmem, size = 0x12000, scoped, tag = 'internal scratch']
  %s0 = inlined_call_operand.vmem [shape: bf16[8,4,64], index: 0, kind: input, shape index: {}]
  %s1 = inlined_call_operand.vmem [shape: bf16[8,64], index: 1, kind: output, shape index: {}]
  %s2 = sld [smem:[#allocation0]]
  $region14: #{mrcnn_forward.17} parent=0
    _
  %s4 = ssub.s32 1, %s2
  %s5 = scalar_select 0, %s4, %s2
  // Predicated region
  $region2: #{mrcnn_forward.17} parent=0 // pred_check
    _
  $region3: #{mrcnn_forward.17} parent=0 // pred_check_branch
    %7 = sbr.rel (0) target = $region5
  $region4: #{mrcnn_forward.17} parent=0 // pred_region
    _
  $region5: #{mrcnn_forward.17} parent=0 // pred_fallthru
    _
  %v9 = vld [vmem:[%s0] sm:$0x3]
  %v10 = vld [vmem:[%s0 + $0x2] sm:$0x3]
  %v11 = vld [vmem:[%s0 + $0x4] sm:$0x3]
  %v12 = vld [vmem:[%s0 + $0x6] sm:$0x3]
  %v13 = vld [vmem:[%s0 + $0x8] sm:$0x3]
  %v14 = vld [vmem:[%s0 + $0xa] sm:$0x3]
  %v15 = vld [vmem:[%s0 + $0xc] sm:$0x3]
  %v16 = vld [vmem:[%s0 + $0xe] sm:$0x3]
  %vm17 = vcmask 517120
  %v20 = vsel %vm17, %v9, 4286644096
  %v22 = vunpack.i.l.bf16 %v20
  %v23 = vunpack.i.h.bf16 %v20
  %v24 = vmax.f32 %v22, %v23
  %v25 = vrot.slane %v24, 4
  %v26 = vmax.f32 %v24, %v25
  %v27 = vrot.slane %v26, 2
  %v28 = vmax.f32 %v26, %v27
  %v29 = vrot.slane %v28, 1
  %v30 = vmax.f32 %v28, %v29
  %v31 = vpack.i.bf16 %v30, %v30
  %v33 = vsel %vm17, %v10, 4286644096
  %v35 = vunpack.i.l.bf16 %v33
  %v36 = vunpack.i.h.bf16 %v33
  %v37 = vmax.f32 %v35, %v36
  %v38 = vrot.slane %v37, 4
  %v39 = vmax.f32 %v37, %v38
  %v40 = vrot.slane %v39, 2
  %v41 = vmax.f32 %v39, %v40
  %v42 = vrot.slane %v41, 1
  %v43 = vmax.f32 %v41, %v42
  %v44 = vpack.i.bf16 %v43, %v43
  %v46 = vsel %vm17, %v11, 4286644096
  %v48 = vunpack.i.l.bf16 %v46
  %v49 = vunpack.i.h.bf16 %v46
  %v50 = vmax.f32 %v48, %v49
  %v51 = vrot.slane %v50, 4
  %v52 = vmax.f32 %v50, %v51
  %v53 = vrot.slane %v52, 2
  %v54 = vmax.f32 %v52, %v53
  %v55 = vrot.slane %v54, 1
  %v56 = vmax.f32 %v54, %v55
  %v57 = vpack.i.bf16 %v56, %v56
  %v59 = vsel %vm17, %v12, 4286644096
  %v61 = vunpack.i.l.bf16 %v59
  %v62 = vunpack.i.h.bf16 %v59
  %v63 = vmax.f32 %v61, %v62
  %v64 = vrot.slane %v63, 4
  %v65 = vmax.f32 %v63, %v64
  %v66 = vrot.slane %v65, 2
  %v67 = vmax.f32 %v65, %v66
  %v68 = vrot.slane %v67, 1
  %v69 = vmax.f32 %v67, %v68
  %v70 = vpack.i.bf16 %v69, %v69
  %v72 = vsel %vm17, %v13, 4286644096
  %v74 = vunpack.i.l.bf16 %v72
  %v75 = vunpack.i.h.bf16 %v72
  %v76 = vmax.f32 %v74, %v75
  %v77 = vrot.slane %v76, 4
  %v78 = vmax.f32 %v76, %v77
  %v79 = vrot.slane %v78, 2
  %v80 = vmax.f32 %v78, %v79
  %v81 = vrot.slane %v80, 1
  %v82 = vmax.f32 %v80, %v81
  %v83 = vpack.i.bf16 %v82, %v82
  %v85 = vsel %vm17, %v14, 4286644096
  %v87 = vunpack.i.l.bf16 %v85
  %v88 = vunpack.i.h.bf16 %v85
  %v89 = vmax.f32 %v87, %v88
  %v90 = vrot.slane %v89, 4
  %v91 = vmax.f32 %v89, %v90
  %v92 = vrot.slane %v91, 2
  %v93 = vmax.f32 %v91, %v92
  %v94 = vrot.slane %v93, 1
  %v95 = vmax.f32 %v93, %v94
  %v96 = vpack.i.bf16 %v95, %v95
  %v98 = vsel %vm17, %v15, 4286644096
  %v100 = vunpack.i.l.bf16 %v98
  %v101 = vunpack.i.h.bf16 %v98
  %v102 = vmax.f32 %v100, %v101
  %v103 = vrot.slane %v102, 4
  %v104 = vmax.f32 %v102, %v103
  %v105 = vrot.slane %v104, 2
  %v106 = vmax.f32 %v104, %v105
  %v107 = vrot.slane %v106, 1
  %v108 = vmax.f32 %v106, %v107
  %v109 = vpack.i.bf16 %v108, %v108
  %v111 = vsel %vm17, %v16, 4286644096
  %v113 = vunpack.i.l.bf16 %v111
  %v114 = vunpack.i.h.bf16 %v111
  %v115 = vmax.f32 %v113, %v114
  %v116 = vrot.slane %v115, 4
  %v117 = vmax.f32 %v115, %v116
  %v118 = vrot.slane %v117, 2
  %v119 = vmax.f32 %v117, %v118
  %v120 = vrot.slane %v119, 1
  %v121 = vmax.f32 %v119, %v120
  %v122 = vpack.i.bf16 %v121, %v121
  %v131 = vunpack.c.l.b16 %v31
  %v132 = vunpack.c.l.b16 %v44
  %v133 = vunpack.c.l.b16 %v57
  %v134 = vunpack.c.l.b16 %v70
  %v135 = vunpack.c.l.b16 %v83
  %v136 = vunpack.c.l.b16 %v96
  %v137 = vunpack.c.l.b16 %v109
  %v138 = vunpack.c.l.b16 %v122
  %v139 = vpack.c.b16 %v131, %v131
  %v140 = vpack.c.b16 %v132, %v132
  %v141 = vpack.c.b16 %v133, %v133
  %v142 = vpack.c.b16 %v134, %v134
  %v143 = vpack.c.b16 %v135, %v135
  %v144 = vpack.c.b16 %v136, %v136
  %v145 = vpack.c.b16 %v137, %v137
  %v146 = vpack.c.b16 %v138, %v138
  %v147 = vunpack.c.l.b16 %v139
  %v148 = vunpack.c.l.b16 %v140
  %v149 = vunpack.c.l.b16 %v141
  %v150 = vunpack.c.l.b16 %v142
  %v151 = vunpack.c.l.b16 %v143
  %v152 = vunpack.c.l.b16 %v144
  %v153 = vunpack.c.l.b16 %v145
  %v154 = vunpack.c.l.b16 %v146
  %vm155 = vcmask 1041409
  %v156 = vsel %vm155, %v148, %v147
  %vm157 = vcmask 1042434
  %v158 = vsel %vm157, %v149, %v156
  %vm159 = vcmask 1043459
  %v160 = vsel %vm159, %v150, %v158
  %vm161 = vcmask 1044484
  %v162 = vsel %vm161, %v151, %v160
  %vm163 = vcmask 1045509
  %v164 = vsel %vm163, %v152, %v162
  %vm165 = vcmask 1046534
  %v166 = vsel %vm165, %v153, %v164
  %vm167 = vcmask 1047559
  %v168 = vsel %vm167, %v154, %v166
  %v169 = vpack.c.b16 %v168, %v168
  %vm171 = vcmask 519168
  %172 = vst.msk [vmem:[%s1] sm:$0xf] %vm171, %v169
  // Predicated region
  $region6: #{mrcnn_forward.17} parent=0 // pred_check
    _
  $region7: #{mrcnn_forward.17} parent=0 // pred_check_branch
    %174 = sbr.rel (0) target = $region9
  $region8: #{mrcnn_forward.17} parent=0 // pred_region
    _
  $region9: #{mrcnn_forward.17} parent=0 // pred_fallthru
    _
  // Predicated region
  $region10: #{mrcnn_forward.17} parent=0 // pred_check
    _
  $region11: #{mrcnn_forward.17} parent=0 // pred_check_branch
    %176 = sbr.rel (0) target = $region13
  $region12: #{mrcnn_forward.17} parent=0 // pred_region
    _
  $region13: #{mrcnn_forward.17} parent=0 // pred_fallthru
    _

// kernel: mrcnn_forward.16
$region0: #{mrcnn_forward.16}
  #allocation0 [shape = 'u32[]', space=smem, size = 0x4, offset = 0x4, fixed_abs, tag = 'smem constant byte address 0x4 - core index']
  #allocation1 [shape = 'u32[144,128]{1,0:T(1,128)}', space=vmem, size = 0x12000, scoped, tag = 'internal scratch']
  %s0 = inlined_call_operand.vmem [shape: bf16[16,512], index: 0, kind: input, shape index: {}]
  %s1 = inlined_call_operand.vmem [shape: bf16[512,64], index: 1, kind: input, shape index: {}]
  %s2 = inlined_call_operand.vmem [shape: f32[1,64], index: 2, kind: input, shape index: {}]
  %s3 = inlined_call_operand.vmem [shape: f32[1,64], index: 3, kind: input, shape index: {}]
  %s4 = inlined_call_operand.vmem [shape: bf16[16,64], index: 4, kind: output, shape index: {}]
  %s5 = sld [smem:[#allocation0]]
  $region26: #{mrcnn_forward.16} parent=0
    _
  %s7 = ssub.s32 1, %s5
  %s8 = scalar_select 0, %s7, %s5
  // Predicated region
  $region2: #{mrcnn_forward.16} parent=0 // pred_check
    _
  $region3: #{mrcnn_forward.16} parent=0 // pred_check_branch
    %10 = sbr.rel (0) target = $region5
  $region4: #{mrcnn_forward.16} parent=0 // pred_region
    _
  $region5: #{mrcnn_forward.16} parent=0 // pred_fallthru
    _
  // Predicated region
  $region6: #{mrcnn_forward.16} parent=0 // pred_check
    _
  $region7: #{mrcnn_forward.16} parent=0 // pred_check_branch
    %12 = sbr.rel (0) target = $region9
  $region8: #{mrcnn_forward.16} parent=0 // pred_region
    _
  $region9: #{mrcnn_forward.16} parent=0 // pred_fallthru
    _
  // Predicated region
  $region10: #{mrcnn_forward.16} parent=0 // pred_check
    _
  $region11: #{mrcnn_forward.16} parent=0 // pred_check_branch
    %14 = sbr.rel (0) target = $region13
  $region12: #{mrcnn_forward.16} parent=0 // pred_region
    _
  $region13: #{mrcnn_forward.16} parent=0 // pred_fallthru
    _
  // Predicated region
  $region14: #{mrcnn_forward.16} parent=0 // pred_check
    _
  $region15: #{mrcnn_forward.16} parent=0 // pred_check_branch
    %16 = sbr.rel (0) target = $region17
  $region16: #{mrcnn_forward.16} parent=0 // pred_region
    _
  $region17: #{mrcnn_forward.16} parent=0 // pred_fallthru
    _
  %v18 = vld [vmem:[%s0] sm:$0xff]
  %v19 = vld [vmem:[%s0 + $0x8] sm:$0xff]
  %v20 = vld [vmem:[%s0 + $0x10] sm:$0xff]
  %v21 = vld [vmem:[%s0 + $0x18] sm:$0xff]
  %v22 = vld [vmem:[%s1] sm:$0xf]
  %v23 = vld [vmem:[%s1 + $0x4] sm:$0xf]
  %v24 = vld [vmem:[%s1 + $0x8] sm:$0xf]
  %v25 = vld [vmem:[%s1 + $0xc] sm:$0xf]
  %v26 = vld [vmem:[%s1 + $0x10] sm:$0xf]
  %v27 = vld [vmem:[%s1 + $0x14] sm:$0xf]
  %v28 = vld [vmem:[%s1 + $0x18] sm:$0xf]
  %v29 = vld [vmem:[%s1 + $0x1c] sm:$0xf]
  %v30 = vld [vmem:[%s1 + $0x20] sm:$0xf]
  %v31 = vld [vmem:[%s1 + $0x24] sm:$0xf]
  %v32 = vld [vmem:[%s1 + $0x28] sm:$0xf]
  %v33 = vld [vmem:[%s1 + $0x2c] sm:$0xf]
  %v34 = vld [vmem:[%s1 + $0x30] sm:$0xf]
  %v35 = vld [vmem:[%s1 + $0x34] sm:$0xf]
  %v36 = vld [vmem:[%s1 + $0x38] sm:$0xf]
  %v37 = vld [vmem:[%s1 + $0x3c] sm:$0xf]
  %v38 = vld [vmem:[%s1 + $0x40] sm:$0xf]
  %v39 = vld [vmem:[%s1 + $0x44] sm:$0xf]
  %v40 = vld [vmem:[%s1 + $0x48] sm:$0xf]
  %v41 = vld [vmem:[%s1 + $0x4c] sm:$0xf]
  %v42 = vld [vmem:[%s1 + $0x50] sm:$0xf]
  %v43 = vld [vmem:[%s1 + $0x54] sm:$0xf]
  %v44 = vld [vmem:[%s1 + $0x58] sm:$0xf]
  %v45 = vld [vmem:[%s1 + $0x5c] sm:$0xf]
  %v46 = vld [vmem:[%s1 + $0x60] sm:$0xf]
  %v47 = vld [vmem:[%s1 + $0x64] sm:$0xf]
  %v48 = vld [vmem:[%s1 + $0x68] sm:$0xf]
  %v49 = vld [vmem:[%s1 + $0x6c] sm:$0xf]
  %v50 = vld [vmem:[%s1 + $0x70] sm:$0xf]
  %v51 = vld [vmem:[%s1 + $0x74] sm:$0xf]
  %v52 = vld [vmem:[%s1 + $0x78] sm:$0xf]
  %v53 = vld [vmem:[%s1 + $0x7c] sm:$0xf]
  %v54 = vld [vmem:[%s1 + $0x80] sm:$0xf]
  %v55 = vld [vmem:[%s1 + $0x84] sm:$0xf]
  %v56 = vld [vmem:[%s1 + $0x88] sm:$0xf]
  %v57 = vld [vmem:[%s1 + $0x8c] sm:$0xf]
  %v58 = vld [vmem:[%s1 + $0x90] sm:$0xf]
  %v59 = vld [vmem:[%s1 + $0x94] sm:$0xf]
  %v60 = vld [vmem:[%s1 + $0x98] sm:$0xf]
  %v61 = vld [vmem:[%s1 + $0x9c] sm:$0xf]
  %v62 = vld [vmem:[%s1 + $0xa0] sm:$0xf]
  %v63 = vld [vmem:[%s1 + $0xa4] sm:$0xf]
  %v64 = vld [vmem:[%s1 + $0xa8] sm:$0xf]
  %v65 = vld [vmem:[%s1 + $0xac] sm:$0xf]
  %v66 = vld [vmem:[%s1 + $0xb0] sm:$0xf]
  %v67 = vld [vmem:[%s1 + $0xb4] sm:$0xf]
  %v68 = vld [vmem:[%s1 + $0xb8] sm:$0xf]
  %v69 = vld [vmem:[%s1 + $0xbc] sm:$0xf]
  %v70 = vld [vmem:[%s1 + $0xc0] sm:$0xf]
  %v71 = vld [vmem:[%s1 + $0xc4] sm:$0xf]
  %v72 = vld [vmem:[%s1 + $0xc8] sm:$0xf]
  %v73 = vld [vmem:[%s1 + $0xcc] sm:$0xf]
  %v74 = vld [vmem:[%s1 + $0xd0] sm:$0xf]
  %v75 = vld [vmem:[%s1 + $0xd4] sm:$0xf]
  %v76 = vld [vmem:[%s1 + $0xd8] sm:$0xf]
  %v77 = vld [vmem:[%s1 + $0xdc] sm:$0xf]
  %v78 = vld [vmem:[%s1 + $0xe0] sm:$0xf]
  %v79 = vld [vmem:[%s1 + $0xe4] sm:$0xf]
  %v80 = vld [vmem:[%s1 + $0xe8] sm:$0xf]
  %v81 = vld [vmem:[%s1 + $0xec] sm:$0xf]
  %v82 = vld [vmem:[%s1 + $0xf0] sm:$0xf]
  %v83 = vld [vmem:[%s1 + $0xf4] sm:$0xf]
  %v84 = vld [vmem:[%s1 + $0xf8] sm:$0xf]
  %v85 = vld [vmem:[%s1 + $0xfc] sm:$0xf]
  %v90 = vunpack.c.l.b16 %v18
  %v91 = vunpack.c.h.b16 %v18
  %v92 = vunpack.c.l.b16 %v19
  %v93 = vunpack.c.h.b16 %v19
  %v94 = vunpack.c.l.b16 %v20
  %v95 = vunpack.c.h.b16 %v20
  %v96 = vunpack.c.l.b16 %v21
  %v97 = vunpack.c.h.b16 %v21
  %v98 = vpack.c.b16 %v94, %v90
  %v99 = vpack.c.b16 %v95, %v91
  %v100 = vpack.c.b16 %v96, %v92
  %v101 = vpack.c.b16 %v97, %v93
  %v170 = vunpack.c.l.b16 %v22
  %v171 = vunpack.c.l.b16 %v23
  %v172 = vunpack.c.l.b16 %v24
  %v173 = vunpack.c.l.b16 %v25
  %v174 = vunpack.c.l.b16 %v26
  %v175 = vunpack.c.l.b16 %v27
  %v176 = vunpack.c.l.b16 %v28
  %v177 = vunpack.c.l.b16 %v29
  %v178 = vunpack.c.l.b16 %v30
  %v179 = vunpack.c.l.b16 %v31
  %v180 = vunpack.c.l.b16 %v32
  %v181 = vunpack.c.l.b16 %v33
  %v182 = vunpack.c.l.b16 %v34
  %v183 = vunpack.c.l.b16 %v35
  %v184 = vunpack.c.l.b16 %v36
  %v185 = vunpack.c.l.b16 %v37
  %v186 = vunpack.c.l.b16 %v38
  %v187 = vunpack.c.l.b16 %v39
  %v188 = vunpack.c.l.b16 %v40
  %v189 = vunpack.c.l.b16 %v41
  %v190 = vunpack.c.l.b16 %v42
  %v191 = vunpack.c.l.b16 %v43
  %v192 = vunpack.c.l.b16 %v44
  %v193 = vunpack.c.l.b16 %v45
  %v194 = vunpack.c.l.b16 %v46
  %v195 = vunpack.c.l.b16 %v47
  %v196 = vunpack.c.l.b16 %v48
  %v197 = vunpack.c.l.b16 %v49
  %v198 = vunpack.c.l.b16 %v50
  %v199 = vunpack.c.l.b16 %v51
  %v200 = vunpack.c.l.b16 %v52
  %v201 = vunpack.c.l.b16 %v53
  %v202 = vunpack.c.l.b16 %v54
  %v203 = vunpack.c.l.b16 %v55
  %v204 = vunpack.c.l.b16 %v56
  %v205 = vunpack.c.l.b16 %v57
  %v206 = vunpack.c.l.b16 %v58
  %v207 = vunpack.c.l.b16 %v59
  %v208 = vunpack.c.l.b16 %v60
  %v209 = vunpack.c.l.b16 %v61
  %v210 = vunpack.c.l.b16 %v62
  %v211 = vunpack.c.l.b16 %v63
  %v212 = vunpack.c.l.b16 %v64
  %v213 = vunpack.c.l.b16 %v65
  %v214 = vunpack.c.l.b16 %v66
  %v215 = vunpack.c.l.b16 %v67
  %v216 = vunpack.c.l.b16 %v68
  %v217 = vunpack.c.l.b16 %v69
  %v218 = vunpack.c.l.b16 %v70
  %v219 = vunpack.c.l.b16 %v71
  %v220 = vunpack.c.l.b16 %v72
  %v221 = vunpack.c.l.b16 %v73
  %v222 = vunpack.c.l.b16 %v74
  %v223 = vunpack.c.l.b16 %v75
  %v224 = vunpack.c.l.b16 %v76
  %v225 = vunpack.c.l.b16 %v77
  %v226 = vunpack.c.l.b16 %v78
  %v227 = vunpack.c.l.b16 %v79
  %v228 = vunpack.c.l.b16 %v80
  %v229 = vunpack.c.l.b16 %v81
  %v230 = vunpack.c.l.b16 %v82
  %v231 = vunpack.c.l.b16 %v83
  %v232 = vunpack.c.l.b16 %v84
  %v233 = vunpack.c.l.b16 %v85
  %v234 = vpack.c.b16 %v171, %v170
  %v235 = vpack.c.b16 %v173, %v172
  %v236 = vpack.c.b16 %v175, %v174
  %v237 = vpack.c.b16 %v177, %v176
  %v238 = vpack.c.b16 %v179, %v178
  %v239 = vpack.c.b16 %v181, %v180
  %v240 = vpack.c.b16 %v183, %v182
  %v241 = vpack.c.b16 %v185, %v184
  %v242 = vpack.c.b16 %v187, %v186
  %v243 = vpack.c.b16 %v189, %v188
  %v244 = vpack.c.b16 %v191, %v190
  %v245 = vpack.c.b16 %v193, %v192
  %v246 = vpack.c.b16 %v195, %v194
  %v247 = vpack.c.b16 %v197, %v196
  %v248 = vpack.c.b16 %v199, %v198
  %v249 = vpack.c.b16 %v201, %v200
  %v250 = vpack.c.b16 %v203, %v202
  %v251 = vpack.c.b16 %v205, %v204
  %v252 = vpack.c.b16 %v207, %v206
  %v253 = vpack.c.b16 %v209, %v208
  %v254 = vpack.c.b16 %v211, %v210
  %v255 = vpack.c.b16 %v213, %v212
  %v256 = vpack.c.b16 %v215, %v214
  %v257 = vpack.c.b16 %v217, %v216
  %v258 = vpack.c.b16 %v219, %v218
  %v259 = vpack.c.b16 %v221, %v220
  %v260 = vpack.c.b16 %v223, %v222
  %v261 = vpack.c.b16 %v225, %v224
  %v262 = vpack.c.b16 %v227, %v226
  %v263 = vpack.c.b16 %v229, %v228
  %v264 = vpack.c.b16 %v231, %v230
  %v265 = vpack.c.b16 %v233, %v232
  %298 = vmatprep.subr.bf16.mxu0 0
  %299 = vmatpush1.bf16.msra.mxu0 %v234
  %300 = vmatprep.subr.bf16.mxu0 0
  %301 = vmatpush1.bf16.msra.mxu0 %v235
  %302 = vmatprep.subr.bf16.mxu0 0
  %303 = vmatpush1.bf16.msra.mxu0 %v236
  %304 = vmatprep.subr.bf16.mxu0 0
  %305 = vmatpush1.bf16.msra.mxu0 %v237
  %306 = vmatprep.subr.bf16.mxu0 0
  %307 = vmatpush1.bf16.msra.mxu0 %v238
  %308 = vmatprep.subr.bf16.mxu0 0
  %309 = vmatpush1.bf16.msra.mxu0 %v239
  %310 = vmatprep.subr.bf16.mxu0 0
  %311 = vmatpush1.bf16.msra.mxu0 %v240
  %312 = vmatprep.subr.bf16.mxu0 0
  %313 = vmatpush1.bf16.msra.mxu0 %v241
  %314 = vmatprep.subr.bf16.mxu0 0
  %315 = vmatpush1.bf16.msra.mxu0 %v242
  %316 = vmatprep.subr.bf16.mxu0 0
  %317 = vmatpush1.bf16.msra.mxu0 %v243
  %318 = vmatprep.subr.bf16.mxu0 0
  %319 = vmatpush1.bf16.msra.mxu0 %v244
  %320 = vmatprep.subr.bf16.mxu0 0
  %321 = vmatpush1.bf16.msra.mxu0 %v245
  %322 = vmatprep.subr.bf16.mxu0 0
  %323 = vmatpush1.bf16.msra.mxu0 %v246
  %324 = vmatprep.subr.bf16.mxu0 0
  %325 = vmatpush1.bf16.msra.mxu0 %v247
  %326 = vmatprep.subr.bf16.mxu0 0
  %327 = vmatpush1.bf16.msra.mxu0 %v248
  %328 = vmatprep.subr.bf16.mxu0 0
  %329 = vmatpush1.bf16.msra.mxu0 %v249
  %330 = vmatprep.mubr.bf16.mxu0 %v99
  %331 = vmatmul.mubr.bf16.gmra.mrb[0].mxu0 %v98
  %v332 = vpop.f32.mrb[0].mxu0
  %v333 = vadd.f32 0.0, %v332
  %v334 = vpop.f32.mrb[0].mxu0
  %v335 = vpop.f32.mrb[0].mxu0
  %v336 = vadd.f32 0.0, %v335
  %v337 = vpop.f32.mrb[0].mxu0
  %338 = vdwg.mxu0
  %339 = vmatprep.subr.bf16.mxu0 0
  %340 = vmatpush1.bf16.msra.mxu0 %v250
  %341 = vmatprep.subr.bf16.mxu0 0
  %342 = vmatpush1.bf16.msra.mxu0 %v251
  %343 = vmatprep.subr.bf16.mxu0 0
  %344 = vmatpush1.bf16.msra.mxu0 %v252
  %345 = vmatprep.subr.bf16.mxu0 0
  %346 = vmatpush1.bf16.msra.mxu0 %v253
  %347 = vmatprep.subr.bf16.mxu0 0
  %348 = vmatpush1.bf16.msra.mxu0 %v254
  %349 = vmatprep.subr.bf16.mxu0 0
  %350 = vmatpush1.bf16.msra.mxu0 %v255
  %351 = vmatprep.subr.bf16.mxu0 0
  %352 = vmatpush1.bf16.msra.mxu0 %v256
  %353 = vmatprep.subr.bf16.mxu0 0
  %354 = vmatpush1.bf16.msra.mxu0 %v257
  %355 = vmatprep.subr.bf16.mxu0 0
  %356 = vmatpush1.bf16.msra.mxu0 %v258
  %357 = vmatprep.subr.bf16.mxu0 0
  %358 = vmatpush1.bf16.msra.mxu0 %v259
  %359 = vmatprep.subr.bf16.mxu0 0
  %360 = vmatpush1.bf16.msra.mxu0 %v260
  %361 = vmatprep.subr.bf16.mxu0 0
  %362 = vmatpush1.bf16.msra.mxu0 %v261
  %363 = vmatprep.subr.bf16.mxu0 0
  %364 = vmatpush1.bf16.msra.mxu0 %v262
  %365 = vmatprep.subr.bf16.mxu0 0
  %366 = vmatpush1.bf16.msra.mxu0 %v263
  %367 = vmatprep.subr.bf16.mxu0 0
  %368 = vmatpush1.bf16.msra.mxu0 %v264
  %369 = vmatprep.subr.bf16.mxu0 0
  %370 = vmatpush1.bf16.msra.mxu0 %v265
  %371 = vmatprep.mubr.bf16.mxu0 %v101
  %372 = vmatmul.mubr.bf16.gmra.mrb[0].mxu0 %v100
  %v373 = vpop.f32.mrb[0].mxu0
  %v374 = vadd.f32 %v333, %v373
  %v375 = vpop.f32.mrb[0].mxu0
  %v376 = vpop.f32.mrb[0].mxu0
  %v377 = vadd.f32 %v336, %v376
  %v378 = vpop.f32.mrb[0].mxu0
  %379 = vdwg.mxu0
  %v380 = vld [vmem:[%s2] sm:$0x1]
  %v382 = vlaneseq
  %v383 = vshrl.u32 %v382, 7
  %v384 = vsub.s32 0, %v383
  %v385 = vrot.slane %v380, %v384
  %v387 = vmul.f32 %v374, %v385
  %v388 = vmul.f32 %v377, %v385
  %v389 = vld [vmem:[%s3] sm:$0x1]
  %v391 = vlaneseq
  %v392 = vshrl.u32 %v391, 7
  %v393 = vsub.s32 0, %v392
  %v394 = vrot.slane %v389, %v393
  %v396 = vadd.f32 %v387, %v394
  %v397 = vadd.f32 %v388, %v394
  %v398 = vmul.f32 %v396, 0.5
  %v399 = vmul.f32 %v397, 0.5
  %v400 = vmul.f32 %v396, 0.70710677
  %v401 = vmul.f32 %v397, 0.70710677
  %v402 = vand.u32 2147483647, %v400
  %v403 = vand.u32 2147483647, %v401
  %v404 = vmul.f32 %v402, 0.3275911
  %v405 = vmul.f32 %v403, 0.3275911
  %v406 = vadd.f32 %v404, 1.0
  %v407 = vadd.f32 %v405, 1.0
  %v408 = vrcp.pop %v406
  %v409 = vrcp.pop %v407
  %v410 = vmul.f32 %v408, 1.0614054
  %v411 = vmul.f32 %v409, 1.0614054
  %v412 = vadd.f32 %v410, -1.4531521
  %v413 = vadd.f32 %v411, -1.4531521
  %v414 = vmul.f32 %v408, %v412
  %v415 = vmul.f32 %v409, %v413
  %v416 = vadd.f32 %v414, 1.4214138
  %v417 = vadd.f32 %v415, 1.4214138
  %v418 = vmul.f32 %v408, %v416
  %v419 = vmul.f32 %v409, %v417
  %v420 = vadd.f32 %v418, -0.28449672
  %v421 = vadd.f32 %v419, -0.28449672
  %v422 = vmul.f32 %v408, %v420
  %v423 = vmul.f32 %v409, %v421
  %v424 = vadd.f32 %v422, 0.2548296
  %v425 = vadd.f32 %v423, 0.2548296
  %v426 = vmul.f32 %v408, %v424
  %v427 = vmul.f32 %v409, %v425
  %v428 = vsub.f32 0.0, %v402
  %v429 = vsub.f32 0.0, %v403
  %v430 = vmul.f32 %v428, %v402
  %v431 = vmul.f32 %v429, %v403
  %v432 = vmul.f32 %v430, 1.442695
  %v433 = vpow.pop %v432
  %v434 = vmul.f32 %v431, 1.442695
  %v435 = vpow.pop %v434
  %v436 = vmul.f32 %v426, %v433
  %v437 = vmul.f32 %v427, %v435
  %v438 = vsub.f32 1.0, %v436
  %v439 = vsub.f32 1.0, %v437
  %vm440 = vcmp.ge.f32.partialorder %v400, 0.0
  %vm441 = vcmp.ge.f32.partialorder %v401, 0.0
  %v442 = vsub.f32 0.0, %v438
  %v443 = vsub.f32 0.0, %v439
  %v444 = vsel %vm440, %v438, %v442
  %v445 = vsel %vm441, %v439, %v443
  %v446 = vadd.f32 %v444, 1.0
  %v447 = vadd.f32 %v445, 1.0
  %v448 = vmul.f32 %v398, %v446
  %v449 = vmul.f32 %v399, %v447
  %v450 = vpack.c.bf16 %v449, %v448
  %v452 = vunpack.c.l.b16 %v450
  %v453 = vunpack.c.h.b16 %v450
  %v454 = vpack.c.b16 %v452, %v452
  %v455 = vpack.c.b16 %v453, %v453
  %vm458 = vcmask 519168
  %459 = vst.msk [vmem:[%s4] sm:$0xf] %vm458, %v454
  %460 = vst.msk [vmem:[%s4 + $0x4] sm:$0xf] %vm458, %v455
  // Predicated region
  $region18: #{mrcnn_forward.16} parent=0 // pred_check
    _
  $region19: #{mrcnn_forward.16} parent=0 // pred_check_branch
    %462 = sbr.rel (0) target = $region21
  $region20: #{mrcnn_forward.16} parent=0 // pred_region
    _
  $region21: #{mrcnn_forward.16} parent=0 // pred_fallthru
    _
  // Predicated region
  $region22: #{mrcnn_forward.16} parent=0 // pred_check
    _
  $region23: #{mrcnn_forward.16} parent=0 // pred_check_branch
    %464 = sbr.rel (0) target = $region25
  $region24: #{mrcnn_forward.16} parent=0 // pred_region
    _
  $region25: #{mrcnn_forward.16} parent=0 // pred_fallthru
    _

// kernel: mrcnn_forward.18
$region0: #{mrcnn_forward.18}
  #allocation0 [shape = 'u32[]', space=smem, size = 0x4, offset = 0x4, fixed_abs, tag = 'smem constant byte address 0x4 - core index']
  #allocation1 [shape = 'u32[144,128]{1,0:T(1,128)}', space=vmem, size = 0x12000, scoped, tag = 'internal scratch']
  %s0 = inlined_call_operand.vmem [shape: bf16[8,448], index: 0, kind: input, shape index: {}]
  %s1 = inlined_call_operand.vmem [shape: bf16[448,128], index: 1, kind: input, shape index: {}]
  %s2 = inlined_call_operand.vmem [shape: f32[1,128], index: 2, kind: input, shape index: {}]
  %s3 = inlined_call_operand.vmem [shape: f32[1,128], index: 3, kind: input, shape index: {}]
  %s4 = inlined_call_operand.vmem [shape: bf16[8,128], index: 4, kind: output, shape index: {}]
  %s5 = sld [smem:[#allocation0]]
  $region26: #{mrcnn_forward.18} parent=0
    _
  %s7 = ssub.s32 1, %s5
  %s8 = scalar_select 0, %s7, %s5
  // Predicated region
  $region2: #{mrcnn_forward.18} parent=0 // pred_check
    _
  $region3: #{mrcnn_forward.18} parent=0 // pred_check_branch
    %10 = sbr.rel (0) target = $region5
  $region4: #{mrcnn_forward.18} parent=0 // pred_region
    _
  $region5: #{mrcnn_forward.18} parent=0 // pred_fallthru
    _
  // Predicated region
  $region6: #{mrcnn_forward.18} parent=0 // pred_check
    _
  $region7: #{mrcnn_forward.18} parent=0 // pred_check_branch
    %12 = sbr.rel (0) target = $region9
  $region8: #{mrcnn_forward.18} parent=0 // pred_region
    _
  $region9: #{mrcnn_forward.18} parent=0 // pred_fallthru
    _
  // Predicated region
  $region10: #{mrcnn_forward.18} parent=0 // pred_check
    _
  $region11: #{mrcnn_forward.18} parent=0 // pred_check_branch
    %14 = sbr.rel (0) target = $region13
  $region12: #{mrcnn_forward.18} parent=0 // pred_region
    _
  $region13: #{mrcnn_forward.18} parent=0 // pred_fallthru
    _
  // Predicated region
  $region14: #{mrcnn_forward.18} parent=0 // pred_check
    _
  $region15: #{mrcnn_forward.18} parent=0 // pred_check_branch
    %16 = sbr.rel (0) target = $region17
  $region16: #{mrcnn_forward.18} parent=0 // pred_region
    _
  $region17: #{mrcnn_forward.18} parent=0 // pred_fallthru
    _
  %v18 = vld [vmem:[%s0] sm:$0xff]
  %v19 = vld [vmem:[%s0 + $0x8] sm:$0xff]
  %v20 = vld [vmem:[%s1] sm:$0xf]
  %v21 = vld [vmem:[%s1 + $0x4] sm:$0xf]
  %v22 = vld [vmem:[%s1 + $0x8] sm:$0xf]
  %v23 = vld [vmem:[%s1 + $0xc] sm:$0xf]
  %v24 = vld [vmem:[%s1 + $0x10] sm:$0xf]
  %v25 = vld [vmem:[%s1 + $0x14] sm:$0xf]
  %v26 = vld [vmem:[%s1 + $0x18] sm:$0xf]
  %v27 = vld [vmem:[%s1 + $0x1c] sm:$0xf]
  %v28 = vld [vmem:[%s1 + $0x20] sm:$0xf]
  %v29 = vld [vmem:[%s1 + $0x24] sm:$0xf]
  %v30 = vld [vmem:[%s1 + $0x28] sm:$0xf]
  %v31 = vld [vmem:[%s1 + $0x2c] sm:$0xf]
  %v32 = vld [vmem:[%s1 + $0x30] sm:$0xf]
  %v33 = vld [vmem:[%s1 + $0x34] sm:$0xf]
  %v34 = vld [vmem:[%s1 + $0x38] sm:$0xf]
  %v35 = vld [vmem:[%s1 + $0x3c] sm:$0xf]
  %v36 = vld [vmem:[%s1 + $0x40] sm:$0xf]
  %v37 = vld [vmem:[%s1 + $0x44] sm:$0xf]
  %v38 = vld [vmem:[%s1 + $0x48] sm:$0xf]
  %v39 = vld [vmem:[%s1 + $0x4c] sm:$0xf]
  %v40 = vld [vmem:[%s1 + $0x50] sm:$0xf]
  %v41 = vld [vmem:[%s1 + $0x54] sm:$0xf]
  %v42 = vld [vmem:[%s1 + $0x58] sm:$0xf]
  %v43 = vld [vmem:[%s1 + $0x5c] sm:$0xf]
  %v44 = vld [vmem:[%s1 + $0x60] sm:$0xf]
  %v45 = vld [vmem:[%s1 + $0x64] sm:$0xf]
  %v46 = vld [vmem:[%s1 + $0x68] sm:$0xf]
  %v47 = vld [vmem:[%s1 + $0x6c] sm:$0xf]
  %v48 = vld [vmem:[%s1 + $0x70] sm:$0xf]
  %v49 = vld [vmem:[%s1 + $0x74] sm:$0xf]
  %v50 = vld [vmem:[%s1 + $0x78] sm:$0xf]
  %v51 = vld [vmem:[%s1 + $0x7c] sm:$0xf]
  %v52 = vld [vmem:[%s1 + $0x80] sm:$0xf]
  %v53 = vld [vmem:[%s1 + $0x84] sm:$0xf]
  %v54 = vld [vmem:[%s1 + $0x88] sm:$0xf]
  %v55 = vld [vmem:[%s1 + $0x8c] sm:$0xf]
  %v56 = vld [vmem:[%s1 + $0x90] sm:$0xf]
  %v57 = vld [vmem:[%s1 + $0x94] sm:$0xf]
  %v58 = vld [vmem:[%s1 + $0x98] sm:$0xf]
  %v59 = vld [vmem:[%s1 + $0x9c] sm:$0xf]
  %v60 = vld [vmem:[%s1 + $0xa0] sm:$0xf]
  %v61 = vld [vmem:[%s1 + $0xa4] sm:$0xf]
  %v62 = vld [vmem:[%s1 + $0xa8] sm:$0xf]
  %v63 = vld [vmem:[%s1 + $0xac] sm:$0xf]
  %v64 = vld [vmem:[%s1 + $0xb0] sm:$0xf]
  %v65 = vld [vmem:[%s1 + $0xb4] sm:$0xf]
  %v66 = vld [vmem:[%s1 + $0xb8] sm:$0xf]
  %v67 = vld [vmem:[%s1 + $0xbc] sm:$0xf]
  %v68 = vld [vmem:[%s1 + $0xc0] sm:$0xf]
  %v69 = vld [vmem:[%s1 + $0xc4] sm:$0xf]
  %v70 = vld [vmem:[%s1 + $0xc8] sm:$0xf]
  %v71 = vld [vmem:[%s1 + $0xcc] sm:$0xf]
  %v72 = vld [vmem:[%s1 + $0xd0] sm:$0xf]
  %v73 = vld [vmem:[%s1 + $0xd4] sm:$0xf]
  %v74 = vld [vmem:[%s1 + $0xd8] sm:$0xf]
  %v75 = vld [vmem:[%s1 + $0xdc] sm:$0xf]
  %v78 = vunpack.c.l.b16 %v18
  %v79 = vunpack.c.h.b16 %v18
  %v80 = vunpack.c.l.b16 %v19
  %v81 = vunpack.c.h.b16 %v19
  %v82 = vpack.c.b16 %v78, %v78
  %v83 = vpack.c.b16 %v79, %v79
  %v84 = vpack.c.b16 %v80, %v80
  %v85 = vpack.c.b16 %v81, %v81
  %v145 = vunpack.c.l.b16 %v20
  %v146 = vunpack.c.l.b16 %v21
  %v147 = vunpack.c.l.b16 %v22
  %v148 = vunpack.c.l.b16 %v23
  %v149 = vunpack.c.l.b16 %v24
  %v150 = vunpack.c.l.b16 %v25
  %v151 = vunpack.c.l.b16 %v26
  %v152 = vunpack.c.l.b16 %v27
  %v153 = vunpack.c.l.b16 %v28
  %v154 = vunpack.c.l.b16 %v29
  %v155 = vunpack.c.l.b16 %v30
  %v156 = vunpack.c.l.b16 %v31
  %v157 = vunpack.c.l.b16 %v32
  %v158 = vunpack.c.l.b16 %v33
  %v159 = vunpack.c.l.b16 %v34
  %v160 = vunpack.c.l.b16 %v35
  %v161 = vunpack.c.l.b16 %v36
  %v162 = vunpack.c.l.b16 %v37
  %v163 = vunpack.c.l.b16 %v38
  %v164 = vunpack.c.l.b16 %v39
  %v165 = vunpack.c.l.b16 %v40
  %v166 = vunpack.c.l.b16 %v41
  %v167 = vunpack.c.l.b16 %v42
  %v168 = vunpack.c.l.b16 %v43
  %v169 = vunpack.c.l.b16 %v44
  %v170 = vunpack.c.l.b16 %v45
  %v171 = vunpack.c.l.b16 %v46
  %v172 = vunpack.c.l.b16 %v47
  %v173 = vunpack.c.l.b16 %v48
  %v174 = vunpack.c.l.b16 %v49
  %v175 = vunpack.c.l.b16 %v50
  %v176 = vunpack.c.l.b16 %v51
  %v177 = vunpack.c.l.b16 %v52
  %v178 = vunpack.c.l.b16 %v53
  %v179 = vunpack.c.l.b16 %v54
  %v180 = vunpack.c.l.b16 %v55
  %v181 = vunpack.c.l.b16 %v56
  %v182 = vunpack.c.l.b16 %v57
  %v183 = vunpack.c.l.b16 %v58
  %v184 = vunpack.c.l.b16 %v59
  %v185 = vunpack.c.l.b16 %v60
  %v186 = vunpack.c.l.b16 %v61
  %v187 = vunpack.c.l.b16 %v62
  %v188 = vunpack.c.l.b16 %v63
  %v189 = vunpack.c.l.b16 %v64
  %v190 = vunpack.c.l.b16 %v65
  %v191 = vunpack.c.l.b16 %v66
  %v192 = vunpack.c.l.b16 %v67
  %v193 = vunpack.c.l.b16 %v68
  %v194 = vunpack.c.l.b16 %v69
  %v195 = vunpack.c.l.b16 %v70
  %v196 = vunpack.c.l.b16 %v71
  %v197 = vunpack.c.l.b16 %v72
  %v198 = vunpack.c.l.b16 %v73
  %v199 = vunpack.c.l.b16 %v74
  %v200 = vunpack.c.l.b16 %v75
  %v201 = vpack.c.b16 %v146, %v145
  %v202 = vpack.c.b16 %v148, %v147
  %v203 = vpack.c.b16 %v150, %v149
  %v204 = vpack.c.b16 %v152, %v151
  %v205 = vpack.c.b16 %v154, %v153
  %v206 = vpack.c.b16 %v156, %v155
  %v207 = vpack.c.b16 %v158, %v157
  %v208 = vpack.c.b16 %v160, %v159
  %v209 = vpack.c.b16 %v162, %v161
  %v210 = vpack.c.b16 %v164, %v163
  %v211 = vpack.c.b16 %v166, %v165
  %v212 = vpack.c.b16 %v168, %v167
  %v213 = vpack.c.b16 %v170, %v169
  %v214 = vpack.c.b16 %v172, %v171
  %v215 = vpack.c.b16 %v174, %v173
  %v216 = vpack.c.b16 %v176, %v175
  %v217 = vpack.c.b16 %v178, %v177
  %v218 = vpack.c.b16 %v180, %v179
  %v219 = vpack.c.b16 %v182, %v181
  %v220 = vpack.c.b16 %v184, %v183
  %v221 = vpack.c.b16 %v186, %v185
  %v222 = vpack.c.b16 %v188, %v187
  %v223 = vpack.c.b16 %v190, %v189
  %v224 = vpack.c.b16 %v192, %v191
  %v225 = vpack.c.b16 %v194, %v193
  %v226 = vpack.c.b16 %v196, %v195
  %v227 = vpack.c.b16 %v198, %v197
  %v228 = vpack.c.b16 %v200, %v199
  %vm257 = vcmask 523264
  %v259 = vsel %vm257, %v85, 0
  %261 = vmatprep.subr.bf16.mxu0 0
  %262 = vmatpush1.bf16.msra.mxu0 %v201
  %263 = vmatprep.subr.bf16.mxu0 0
  %264 = vmatpush1.bf16.msra.mxu0 %v202
  %265 = vmatprep.subr.bf16.mxu0 0
  %266 = vmatpush1.bf16.msra.mxu0 %v203
  %267 = vmatprep.subr.bf16.mxu0 0
  %268 = vmatpush1.bf16.msra.mxu0 %v204
  %269 = vmatprep.subr.bf16.mxu0 0
  %270 = vmatpush1.bf16.msra.mxu0 %v205
  %271 = vmatprep.subr.bf16.mxu0 0
  %272 = vmatpush1.bf16.msra.mxu0 %v206
  %273 = vmatprep.subr.bf16.mxu0 0
  %274 = vmatpush1.bf16.msra.mxu0 %v207
  %275 = vmatprep.subr.bf16.mxu0 0
  %276 = vmatpush1.bf16.msra.mxu0 %v208
  %277 = vmatprep.subr.bf16.mxu0 0
  %278 = vmatpush1.bf16.msra.mxu0 %v209
  %279 = vmatprep.subr.bf16.mxu0 0
  %280 = vmatpush1.bf16.msra.mxu0 %v210
  %281 = vmatprep.subr.bf16.mxu0 0
  %282 = vmatpush1.bf16.msra.mxu0 %v211
  %283 = vmatprep.subr.bf16.mxu0 0
  %284 = vmatpush1.bf16.msra.mxu0 %v212
  %285 = vmatprep.subr.bf16.mxu0 0
  %286 = vmatpush1.bf16.msra.mxu0 %v213
  %287 = vmatprep.subr.bf16.mxu0 0
  %288 = vmatpush1.bf16.msra.mxu0 %v214
  %289 = vmatprep.subr.bf16.mxu0 0
  %290 = vmatpush1.bf16.msra.mxu0 %v215
  %291 = vmatprep.subr.bf16.mxu0 0
  %292 = vmatpush1.bf16.msra.mxu0 %v216
  %293 = vmatprep.mubr.bf16.mxu0 %v83
  %294 = vmatmul.mubr.bf16.gmra.mrb[0].mxu0 %v82
  %v295 = vpop.f32.mrb[0].mxu0
  %v296 = vadd.f32 0.0, %v295
  %v297 = vpop.f32.mrb[0].mxu0
  %v298 = vpop.f32.mrb[0].mxu0
  %v299 = vpop.f32.mrb[0].mxu0
  %300 = vdwg.mxu0
  %301 = vmatprep.subr.bf16.mxu0 0
  %302 = vmatpush1.bf16.msra.mxu0 %v217
  %303 = vmatprep.subr.bf16.mxu0 0
  %304 = vmatpush1.bf16.msra.mxu0 %v218
  %305 = vmatprep.subr.bf16.mxu0 0
  %306 = vmatpush1.bf16.msra.mxu0 %v219
  %307 = vmatprep.subr.bf16.mxu0 0
  %308 = vmatpush1.bf16.msra.mxu0 %v220
  %309 = vmatprep.subr.bf16.mxu0 0
  %310 = vmatpush1.bf16.msra.mxu0 %v221
  %311 = vmatprep.subr.bf16.mxu0 0
  %312 = vmatpush1.bf16.msra.mxu0 %v222
  %313 = vmatprep.subr.bf16.mxu0 0
  %314 = vmatpush1.bf16.msra.mxu0 %v223
  %315 = vmatprep.subr.bf16.mxu0 0
  %316 = vmatpush1.bf16.msra.mxu0 %v224
  %317 = vmatprep.subr.bf16.mxu0 0
  %318 = vmatpush1.bf16.msra.mxu0 %v225
  %319 = vmatprep.subr.bf16.mxu0 0
  %320 = vmatpush1.bf16.msra.mxu0 %v226
  %321 = vmatprep.subr.bf16.mxu0 0
  %322 = vmatpush1.bf16.msra.mxu0 %v227
  %323 = vmatprep.subr.bf16.mxu0 0
  %324 = vmatpush1.bf16.msra.mxu0 %v228
  %325 = vmatprep.subr.bf16.mxu0 0
  %326 = vmatpush1.bf16.msra.mxu0 0
  %327 = vmatprep.subr.bf16.mxu0 0
  %328 = vmatpush1.bf16.msra.mxu0 0
  %329 = vmatprep.subr.bf16.mxu0 0
  %330 = vmatpush1.bf16.msra.mxu0 0
  %331 = vmatprep.subr.bf16.mxu0 0
  %332 = vmatpush1.bf16.msra.mxu0 0
  %333 = vmatprep.mubr.bf16.mxu0 %v259
  %334 = vmatmul.mubr.bf16.gmra.mrb[0].mxu0 %v84
  %v335 = vpop.f32.mrb[0].mxu0
  %v336 = vadd.f32 %v296, %v335
  %v337 = vpop.f32.mrb[0].mxu0
  %v338 = vpop.f32.mrb[0].mxu0
  %v339 = vpop.f32.mrb[0].mxu0
  %340 = vdwg.mxu0
  %v341 = vld [vmem:[%s2] sm:$0x1]
  %v343 = vlaneseq
  %v344 = vshrl.u32 %v343, 7
  %v345 = vsub.s32 0, %v344
  %v346 = vrot.slane %v341, %v345
  %v348 = vmul.f32 %v336, %v346
  %v349 = vld [vmem:[%s3] sm:$0x1]
  %v351 = vlaneseq
  %v352 = vshrl.u32 %v351, 7
  %v353 = vsub.s32 0, %v352
  %v354 = vrot.slane %v349, %v353
  %v356 = vadd.f32 %v348, %v354
  %v357 = vmul.f32 %v356, 0.5
  %v358 = vmul.f32 %v356, 0.70710677
  %v359 = vand.u32 2147483647, %v358
  %v360 = vmul.f32 %v359, 0.3275911
  %v361 = vadd.f32 %v360, 1.0
  %v362 = vrcp.pop %v361
  %v363 = vmul.f32 %v362, 1.0614054
  %v364 = vadd.f32 %v363, -1.4531521
  %v365 = vmul.f32 %v362, %v364
  %v366 = vadd.f32 %v365, 1.4214138
  %v367 = vmul.f32 %v362, %v366
  %v368 = vadd.f32 %v367, -0.28449672
  %v369 = vmul.f32 %v362, %v368
  %v370 = vadd.f32 %v369, 0.2548296
  %v371 = vmul.f32 %v362, %v370
  %v372 = vsub.f32 0.0, %v359
  %v373 = vmul.f32 %v372, %v359
  %v374 = vmul.f32 %v373, 1.442695
  %v375 = vpow.pop %v374
  %v376 = vmul.f32 %v371, %v375
  %v377 = vsub.f32 1.0, %v376
  %vm378 = vcmp.ge.f32.partialorder %v358, 0.0
  %v379 = vsub.f32 0.0, %v377
  %v380 = vsel %vm378, %v377, %v379
  %v381 = vadd.f32 %v380, 1.0
  %v382 = vmul.f32 %v357, %v381
  %v383 = vpack.c.bf16 %v382, %v382
  %384 = vst [vmem:[%s4] sm:$0xf] %v383
  // Predicated region
  $region18: #{mrcnn_forward.18} parent=0 // pred_check
    _
  $region19: #{mrcnn_forward.18} parent=0 // pred_check_branch
    %386 = sbr.rel (0) target = $region21
  $region20: #{mrcnn_forward.18} parent=0 // pred_region
    _
  $region21: #{mrcnn_forward.18} parent=0 // pred_fallthru
    _
  // Predicated region
  $region22: #{mrcnn_forward.18} parent=0 // pred_check
    _
  $region23: #{mrcnn_forward.18} parent=0 // pred_check_branch
    %388 = sbr.rel (0) target = $region25
  $region24: #{mrcnn_forward.18} parent=0 // pred_region
    _
  $region25: #{mrcnn_forward.18} parent=0 // pred_fallthru
    _

// kernel: mrcnn_forward.19
$region0: #{mrcnn_forward.19}
  #allocation0 [shape = 'u32[]', space=smem, size = 0x4, offset = 0x4, fixed_abs, tag = 'smem constant byte address 0x4 - core index']
  #allocation1 [shape = 'u32[144,128]{1,0:T(1,128)}', space=vmem, size = 0x12000, scoped, tag = 'internal scratch']
  %s0 = inlined_call_operand.vmem [shape: bf16[8,896], index: 0, kind: input, shape index: {}]
  %s1 = inlined_call_operand.vmem [shape: bf16[896,128], index: 1, kind: input, shape index: {}]
  %s2 = inlined_call_operand.vmem [shape: f32[1,128], index: 2, kind: input, shape index: {}]
  %s3 = inlined_call_operand.vmem [shape: f32[1,128], index: 3, kind: input, shape index: {}]
  %s4 = inlined_call_operand.vmem [shape: bf16[8,128], index: 4, kind: output, shape index: {}]
  %s5 = sld [smem:[#allocation0]]
  $region26: #{mrcnn_forward.19} parent=0
    _
  %s7 = ssub.s32 1, %s5
  %s8 = scalar_select 0, %s7, %s5
  // Predicated region
  $region2: #{mrcnn_forward.19} parent=0 // pred_check
    _
  $region3: #{mrcnn_forward.19} parent=0 // pred_check_branch
    %10 = sbr.rel (0) target = $region5
  $region4: #{mrcnn_forward.19} parent=0 // pred_region
    _
  $region5: #{mrcnn_forward.19} parent=0 // pred_fallthru
    _
  // Predicated region
  $region6: #{mrcnn_forward.19} parent=0 // pred_check
    _
  $region7: #{mrcnn_forward.19} parent=0 // pred_check_branch
    %12 = sbr.rel (0) target = $region9
  $region8: #{mrcnn_forward.19} parent=0 // pred_region
    _
  $region9: #{mrcnn_forward.19} parent=0 // pred_fallthru
    _
  // Predicated region
  $region10: #{mrcnn_forward.19} parent=0 // pred_check
    _
  $region11: #{mrcnn_forward.19} parent=0 // pred_check_branch
    %14 = sbr.rel (0) target = $region13
  $region12: #{mrcnn_forward.19} parent=0 // pred_region
    _
  $region13: #{mrcnn_forward.19} parent=0 // pred_fallthru
    _
  // Predicated region
  $region14: #{mrcnn_forward.19} parent=0 // pred_check
    _
  $region15: #{mrcnn_forward.19} parent=0 // pred_check_branch
    %16 = sbr.rel (0) target = $region17
  $region16: #{mrcnn_forward.19} parent=0 // pred_region
    _
  $region17: #{mrcnn_forward.19} parent=0 // pred_fallthru
    _
  %v18 = vld [vmem:[%s0] sm:$0xff]
  %v19 = vld [vmem:[%s0 + $0x8] sm:$0xff]
  %v20 = vld [vmem:[%s0 + $0x10] sm:$0xff]
  %v21 = vld [vmem:[%s0 + $0x18] sm:$0xf]
  %v22 = vld [vmem:[%s1] sm:$0xf]
  %v23 = vld [vmem:[%s1 + $0x4] sm:$0xf]
  %v24 = vld [vmem:[%s1 + $0x8] sm:$0xf]
  %v25 = vld [vmem:[%s1 + $0xc] sm:$0xf]
  %v26 = vld [vmem:[%s1 + $0x10] sm:$0xf]
  %v27 = vld [vmem:[%s1 + $0x14] sm:$0xf]
  %v28 = vld [vmem:[%s1 + $0x18] sm:$0xf]
  %v29 = vld [vmem:[%s1 + $0x1c] sm:$0xf]
  %v30 = vld [vmem:[%s1 + $0x20] sm:$0xf]
  %v31 = vld [vmem:[%s1 + $0x24] sm:$0xf]
  %v32 = vld [vmem:[%s1 + $0x28] sm:$0xf]
  %v33 = vld [vmem:[%s1 + $0x2c] sm:$0xf]
  %v34 = vld [vmem:[%s1 + $0x30] sm:$0xf]
  %v35 = vld [vmem:[%s1 + $0x34] sm:$0xf]
  %v36 = vld [vmem:[%s1 + $0x38] sm:$0xf]
  %v37 = vld [vmem:[%s1 + $0x3c] sm:$0xf]
  %v38 = vld [vmem:[%s1 + $0x40] sm:$0xf]
  %v39 = vld [vmem:[%s1 + $0x44] sm:$0xf]
  %v40 = vld [vmem:[%s1 + $0x48] sm:$0xf]
  %v41 = vld [vmem:[%s1 + $0x4c] sm:$0xf]
  %v42 = vld [vmem:[%s1 + $0x50] sm:$0xf]
  %v43 = vld [vmem:[%s1 + $0x54] sm:$0xf]
  %v44 = vld [vmem:[%s1 + $0x58] sm:$0xf]
  %v45 = vld [vmem:[%s1 + $0x5c] sm:$0xf]
  %v46 = vld [vmem:[%s1 + $0x60] sm:$0xf]
  %v47 = vld [vmem:[%s1 + $0x64] sm:$0xf]
  %v48 = vld [vmem:[%s1 + $0x68] sm:$0xf]
  %v49 = vld [vmem:[%s1 + $0x6c] sm:$0xf]
  %v50 = vld [vmem:[%s1 + $0x70] sm:$0xf]
  %v51 = vld [vmem:[%s1 + $0x74] sm:$0xf]
  %v52 = vld [vmem:[%s1 + $0x78] sm:$0xf]
  %v53 = vld [vmem:[%s1 + $0x7c] sm:$0xf]
  %v54 = vld [vmem:[%s1 + $0x80] sm:$0xf]
  %v55 = vld [vmem:[%s1 + $0x84] sm:$0xf]
  %v56 = vld [vmem:[%s1 + $0x88] sm:$0xf]
  %v57 = vld [vmem:[%s1 + $0x8c] sm:$0xf]
  %v58 = vld [vmem:[%s1 + $0x90] sm:$0xf]
  %v59 = vld [vmem:[%s1 + $0x94] sm:$0xf]
  %v60 = vld [vmem:[%s1 + $0x98] sm:$0xf]
  %v61 = vld [vmem:[%s1 + $0x9c] sm:$0xf]
  %v62 = vld [vmem:[%s1 + $0xa0] sm:$0xf]
  %v63 = vld [vmem:[%s1 + $0xa4] sm:$0xf]
  %v64 = vld [vmem:[%s1 + $0xa8] sm:$0xf]
  %v65 = vld [vmem:[%s1 + $0xac] sm:$0xf]
  %v66 = vld [vmem:[%s1 + $0xb0] sm:$0xf]
  %v67 = vld [vmem:[%s1 + $0xb4] sm:$0xf]
  %v68 = vld [vmem:[%s1 + $0xb8] sm:$0xf]
  %v69 = vld [vmem:[%s1 + $0xbc] sm:$0xf]
  %v70 = vld [vmem:[%s1 + $0xc0] sm:$0xf]
  %v71 = vld [vmem:[%s1 + $0xc4] sm:$0xf]
  %v72 = vld [vmem:[%s1 + $0xc8] sm:$0xf]
  %v73 = vld [vmem:[%s1 + $0xcc] sm:$0xf]
  %v74 = vld [vmem:[%s1 + $0xd0] sm:$0xf]
  %v75 = vld [vmem:[%s1 + $0xd4] sm:$0xf]
  %v76 = vld [vmem:[%s1 + $0xd8] sm:$0xf]
  %v77 = vld [vmem:[%s1 + $0xdc] sm:$0xf]
  %v78 = vld [vmem:[%s1 + $0xe0] sm:$0xf]
  %v79 = vld [vmem:[%s1 + $0xe4] sm:$0xf]
  %v80 = vld [vmem:[%s1 + $0xe8] sm:$0xf]
  %v81 = vld [vmem:[%s1 + $0xec] sm:$0xf]
  %v82 = vld [vmem:[%s1 + $0xf0] sm:$0xf]
  %v83 = vld [vmem:[%s1 + $0xf4] sm:$0xf]
  %v84 = vld [vmem:[%s1 + $0xf8] sm:$0xf]
  %v85 = vld [vmem:[%s1 + $0xfc] sm:$0xf]
  %v86 = vld [vmem:[%s1 + $0x100] sm:$0xf]
  %v87 = vld [vmem:[%s1 + $0x104] sm:$0xf]
  %v88 = vld [vmem:[%s1 + $0x108] sm:$0xf]
  %v89 = vld [vmem:[%s1 + $0x10c] sm:$0xf]
  %v90 = vld [vmem:[%s1 + $0x110] sm:$0xf]
  %v91 = vld [vmem:[%s1 + $0x114] sm:$0xf]
  %v92 = vld [vmem:[%s1 + $0x118] sm:$0xf]
  %v93 = vld [vmem:[%s1 + $0x11c] sm:$0xf]
  %v94 = vld [vmem:[%s1 + $0x120] sm:$0xf]
  %v95 = vld [vmem:[%s1 + $0x124] sm:$0xf]
  %v96 = vld [vmem:[%s1 + $0x128] sm:$0xf]
  %v97 = vld [vmem:[%s1 + $0x12c] sm:$0xf]
  %v98 = vld [vmem:[%s1 + $0x130] sm:$0xf]
  %v99 = vld [vmem:[%s1 + $0x134] sm:$0xf]
  %v100 = vld [vmem:[%s1 + $0x138] sm:$0xf]
  %v101 = vld [vmem:[%s1 + $0x13c] sm:$0xf]
  %v102 = vld [vmem:[%s1 + $0x140] sm:$0xf]
  %v103 = vld [vmem:[%s1 + $0x144] sm:$0xf]
  %v104 = vld [vmem:[%s1 + $0x148] sm:$0xf]
  %v105 = vld [vmem:[%s1 + $0x14c] sm:$0xf]
  %v106 = vld [vmem:[%s1 + $0x150] sm:$0xf]
  %v107 = vld [vmem:[%s1 + $0x154] sm:$0xf]
  %v108 = vld [vmem:[%s1 + $0x158] sm:$0xf]
  %v109 = vld [vmem:[%s1 + $0x15c] sm:$0xf]
  %v110 = vld [vmem:[%s1 + $0x160] sm:$0xf]
  %v111 = vld [vmem:[%s1 + $0x164] sm:$0xf]
  %v112 = vld [vmem:[%s1 + $0x168] sm:$0xf]
  %v113 = vld [vmem:[%s1 + $0x16c] sm:$0xf]
  %v114 = vld [vmem:[%s1 + $0x170] sm:$0xf]
  %v115 = vld [vmem:[%s1 + $0x174] sm:$0xf]
  %v116 = vld [vmem:[%s1 + $0x178] sm:$0xf]
  %v117 = vld [vmem:[%s1 + $0x17c] sm:$0xf]
  %v118 = vld [vmem:[%s1 + $0x180] sm:$0xf]
  %v119 = vld [vmem:[%s1 + $0x184] sm:$0xf]
  %v120 = vld [vmem:[%s1 + $0x188] sm:$0xf]
  %v121 = vld [vmem:[%s1 + $0x18c] sm:$0xf]
  %v122 = vld [vmem:[%s1 + $0x190] sm:$0xf]
  %v123 = vld [vmem:[%s1 + $0x194] sm:$0xf]
  %v124 = vld [vmem:[%s1 + $0x198] sm:$0xf]
  %v125 = vld [vmem:[%s1 + $0x19c] sm:$0xf]
  %v126 = vld [vmem:[%s1 + $0x1a0] sm:$0xf]
  %v127 = vld [vmem:[%s1 + $0x1a4] sm:$0xf]
  %v128 = vld [vmem:[%s1 + $0x1a8] sm:$0xf]
  %v129 = vld [vmem:[%s1 + $0x1ac] sm:$0xf]
  %v130 = vld [vmem:[%s1 + $0x1b0] sm:$0xf]
  %v131 = vld [vmem:[%s1 + $0x1b4] sm:$0xf]
  %v132 = vld [vmem:[%s1 + $0x1b8] sm:$0xf]
  %v133 = vld [vmem:[%s1 + $0x1bc] sm:$0xf]
  %v138 = vunpack.c.l.b16 %v18
  %v139 = vunpack.c.h.b16 %v18
  %v140 = vunpack.c.l.b16 %v19
  %v141 = vunpack.c.h.b16 %v19
  %v142 = vunpack.c.l.b16 %v20
  %v143 = vunpack.c.h.b16 %v20
  %v144 = vunpack.c.l.b16 %v21
  %v145 = vpack.c.b16 %v138, %v138
  %v146 = vpack.c.b16 %v139, %v139
  %v147 = vpack.c.b16 %v140, %v140
  %v148 = vpack.c.b16 %v141, %v141
  %v149 = vpack.c.b16 %v142, %v142
  %v150 = vpack.c.b16 %v143, %v143
  %v151 = vpack.c.b16 %v144, %v144
  %v271 = vunpack.c.l.b16 %v22
  %v272 = vunpack.c.l.b16 %v23
  %v273 = vunpack.c.l.b16 %v24
  %v274 = vunpack.c.l.b16 %v25
  %v275 = vunpack.c.l.b16 %v26
  %v276 = vunpack.c.l.b16 %v27
  %v277 = vunpack.c.l.b16 %v28
  %v278 = vunpack.c.l.b16 %v29
  %v279 = vunpack.c.l.b16 %v30
  %v280 = vunpack.c.l.b16 %v31
  %v281 = vunpack.c.l.b16 %v32
  %v282 = vunpack.c.l.b16 %v33
  %v283 = vunpack.c.l.b16 %v34
  %v284 = vunpack.c.l.b16 %v35
  %v285 = vunpack.c.l.b16 %v36
  %v286 = vunpack.c.l.b16 %v37
  %v287 = vunpack.c.l.b16 %v38
  %v288 = vunpack.c.l.b16 %v39
  %v289 = vunpack.c.l.b16 %v40
  %v290 = vunpack.c.l.b16 %v41
  %v291 = vunpack.c.l.b16 %v42
  %v292 = vunpack.c.l.b16 %v43
  %v293 = vunpack.c.l.b16 %v44
  %v294 = vunpack.c.l.b16 %v45
  %v295 = vunpack.c.l.b16 %v46
  %v296 = vunpack.c.l.b16 %v47
  %v297 = vunpack.c.l.b16 %v48
  %v298 = vunpack.c.l.b16 %v49
  %v299 = vunpack.c.l.b16 %v50
  %v300 = vunpack.c.l.b16 %v51
  %v301 = vunpack.c.l.b16 %v52
  %v302 = vunpack.c.l.b16 %v53
  %v303 = vunpack.c.l.b16 %v54
  %v304 = vunpack.c.l.b16 %v55
  %v305 = vunpack.c.l.b16 %v56
  %v306 = vunpack.c.l.b16 %v57
  %v307 = vunpack.c.l.b16 %v58
  %v308 = vunpack.c.l.b16 %v59
  %v309 = vunpack.c.l.b16 %v60
  %v310 = vunpack.c.l.b16 %v61
  %v311 = vunpack.c.l.b16 %v62
  %v312 = vunpack.c.l.b16 %v63
  %v313 = vunpack.c.l.b16 %v64
  %v314 = vunpack.c.l.b16 %v65
  %v315 = vunpack.c.l.b16 %v66
  %v316 = vunpack.c.l.b16 %v67
  %v317 = vunpack.c.l.b16 %v68
  %v318 = vunpack.c.l.b16 %v69
  %v319 = vunpack.c.l.b16 %v70
  %v320 = vunpack.c.l.b16 %v71
  %v321 = vunpack.c.l.b16 %v72
  %v322 = vunpack.c.l.b16 %v73
  %v323 = vunpack.c.l.b16 %v74
  %v324 = vunpack.c.l.b16 %v75
  %v325 = vunpack.c.l.b16 %v76
  %v326 = vunpack.c.l.b16 %v77
  %v327 = vunpack.c.l.b16 %v78
  %v328 = vunpack.c.l.b16 %v79
  %v329 = vunpack.c.l.b16 %v80
  %v330 = vunpack.c.l.b16 %v81
  %v331 = vunpack.c.l.b16 %v82
  %v332 = vunpack.c.l.b16 %v83
  %v333 = vunpack.c.l.b16 %v84
  %v334 = vunpack.c.l.b16 %v85
  %v335 = vunpack.c.l.b16 %v86
  %v336 = vunpack.c.l.b16 %v87
  %v337 = vunpack.c.l.b16 %v88
  %v338 = vunpack.c.l.b16 %v89
  %v339 = vunpack.c.l.b16 %v90
  %v340 = vunpack.c.l.b16 %v91
  %v341 = vunpack.c.l.b16 %v92
  %v342 = vunpack.c.l.b16 %v93
  %v343 = vunpack.c.l.b16 %v94
  %v344 = vunpack.c.l.b16 %v95
  %v345 = vunpack.c.l.b16 %v96
  %v346 = vunpack.c.l.b16 %v97
  %v347 = vunpack.c.l.b16 %v98
  %v348 = vunpack.c.l.b16 %v99
  %v349 = vunpack.c.l.b16 %v100
  %v350 = vunpack.c.l.b16 %v101
  %v351 = vunpack.c.l.b16 %v102
  %v352 = vunpack.c.l.b16 %v103
  %v353 = vunpack.c.l.b16 %v104
  %v354 = vunpack.c.l.b16 %v105
  %v355 = vunpack.c.l.b16 %v106
  %v356 = vunpack.c.l.b16 %v107
  %v357 = vunpack.c.l.b16 %v108
  %v358 = vunpack.c.l.b16 %v109
  %v359 = vunpack.c.l.b16 %v110
  %v360 = vunpack.c.l.b16 %v111
  %v361 = vunpack.c.l.b16 %v112
  %v362 = vunpack.c.l.b16 %v113
  %v363 = vunpack.c.l.b16 %v114
  %v364 = vunpack.c.l.b16 %v115
  %v365 = vunpack.c.l.b16 %v116
  %v366 = vunpack.c.l.b16 %v117
  %v367 = vunpack.c.l.b16 %v118
  %v368 = vunpack.c.l.b16 %v119
  %v369 = vunpack.c.l.b16 %v120
  %v370 = vunpack.c.l.b16 %v121
  %v371 = vunpack.c.l.b16 %v122
  %v372 = vunpack.c.l.b16 %v123
  %v373 = vunpack.c.l.b16 %v124
  %v374 = vunpack.c.l.b16 %v125
  %v375 = vunpack.c.l.b16 %v126
  %v376 = vunpack.c.l.b16 %v127
  %v377 = vunpack.c.l.b16 %v128
  %v378 = vunpack.c.l.b16 %v129
  %v379 = vunpack.c.l.b16 %v130
  %v380 = vunpack.c.l.b16 %v131
  %v381 = vunpack.c.l.b16 %v132
  %v382 = vunpack.c.l.b16 %v133
  %v383 = vpack.c.b16 %v272, %v271
  %v384 = vpack.c.b16 %v274, %v273
  %v385 = vpack.c.b16 %v276, %v275
  %v386 = vpack.c.b16 %v278, %v277
  %v387 = vpack.c.b16 %v280, %v279
  %v388 = vpack.c.b16 %v282, %v281
  %v389 = vpack.c.b16 %v284, %v283
  %v390 = vpack.c.b16 %v286, %v285
  %v391 = vpack.c.b16 %v288, %v287
  %v392 = vpack.c.b16 %v290, %v289
  %v393 = vpack.c.b16 %v292, %v291
  %v394 = vpack.c.b16 %v294, %v293
  %v395 = vpack.c.b16 %v296, %v295
  %v396 = vpack.c.b16 %v298, %v297
  %v397 = vpack.c.b16 %v300, %v299
  %v398 = vpack.c.b16 %v302, %v301
  %v399 = vpack.c.b16 %v304, %v303
  %v400 = vpack.c.b16 %v306, %v305
  %v401 = vpack.c.b16 %v308, %v307
  %v402 = vpack.c.b16 %v310, %v309
  %v403 = vpack.c.b16 %v312, %v311
  %v404 = vpack.c.b16 %v314, %v313
  %v405 = vpack.c.b16 %v316, %v315
  %v406 = vpack.c.b16 %v318, %v317
  %v407 = vpack.c.b16 %v320, %v319
  %v408 = vpack.c.b16 %v322, %v321
  %v409 = vpack.c.b16 %v324, %v323
  %v410 = vpack.c.b16 %v326, %v325
  %v411 = vpack.c.b16 %v328, %v327
  %v412 = vpack.c.b16 %v330, %v329
  %v413 = vpack.c.b16 %v332, %v331
  %v414 = vpack.c.b16 %v334, %v333
  %v415 = vpack.c.b16 %v336, %v335
  %v416 = vpack.c.b16 %v338, %v337
  %v417 = vpack.c.b16 %v340, %v339
  %v418 = vpack.c.b16 %v342, %v341
  %v419 = vpack.c.b16 %v344, %v343
  %v420 = vpack.c.b16 %v346, %v345
  %v421 = vpack.c.b16 %v348, %v347
  %v422 = vpack.c.b16 %v350, %v349
  %v423 = vpack.c.b16 %v352, %v351
  %v424 = vpack.c.b16 %v354, %v353
  %v425 = vpack.c.b16 %v356, %v355
  %v426 = vpack.c.b16 %v358, %v357
  %v427 = vpack.c.b16 %v360, %v359
  %v428 = vpack.c.b16 %v362, %v361
  %v429 = vpack.c.b16 %v364, %v363
  %v430 = vpack.c.b16 %v366, %v365
  %v431 = vpack.c.b16 %v368, %v367
  %v432 = vpack.c.b16 %v370, %v369
  %v433 = vpack.c.b16 %v372, %v371
  %v434 = vpack.c.b16 %v374, %v373
  %v435 = vpack.c.b16 %v376, %v375
  %v436 = vpack.c.b16 %v378, %v377
  %v437 = vpack.c.b16 %v380, %v379
  %v438 = vpack.c.b16 %v382, %v381
  %495 = vmatprep.subr.bf16.mxu0 0
  %496 = vmatpush1.bf16.msra.mxu0 %v383
  %497 = vmatprep.subr.bf16.mxu0 0
  %498 = vmatpush1.bf16.msra.mxu0 %v384
  %499 = vmatprep.subr.bf16.mxu0 0
  %500 = vmatpush1.bf16.msra.mxu0 %v385
  %501 = vmatprep.subr.bf16.mxu0 0
  %502 = vmatpush1.bf16.msra.mxu0 %v386
  %503 = vmatprep.subr.bf16.mxu0 0
  %504 = vmatpush1.bf16.msra.mxu0 %v387
  %505 = vmatprep.subr.bf16.mxu0 0
  %506 = vmatpush1.bf16.msra.mxu0 %v388
  %507 = vmatprep.subr.bf16.mxu0 0
  %508 = vmatpush1.bf16.msra.mxu0 %v389
  %509 = vmatprep.subr.bf16.mxu0 0
  %510 = vmatpush1.bf16.msra.mxu0 %v390
  %511 = vmatprep.subr.bf16.mxu0 0
  %512 = vmatpush1.bf16.msra.mxu0 %v391
  %513 = vmatprep.subr.bf16.mxu0 0
  %514 = vmatpush1.bf16.msra.mxu0 %v392
  %515 = vmatprep.subr.bf16.mxu0 0
  %516 = vmatpush1.bf16.msra.mxu0 %v393
  %517 = vmatprep.subr.bf16.mxu0 0
  %518 = vmatpush1.bf16.msra.mxu0 %v394
  %519 = vmatprep.subr.bf16.mxu0 0
  %520 = vmatpush1.bf16.msra.mxu0 %v395
  %521 = vmatprep.subr.bf16.mxu0 0
  %522 = vmatpush1.bf16.msra.mxu0 %v396
  %523 = vmatprep.subr.bf16.mxu0 0
  %524 = vmatpush1.bf16.msra.mxu0 %v397
  %525 = vmatprep.subr.bf16.mxu0 0
  %526 = vmatpush1.bf16.msra.mxu0 %v398
  %527 = vmatprep.mubr.bf16.mxu0 %v146
  %528 = vmatmul.mubr.bf16.gmra.mrb[0].mxu0 %v145
  %v529 = vpop.f32.mrb[0].mxu0
  %v530 = vadd.f32 0.0, %v529
  %v531 = vpop.f32.mrb[0].mxu0
  %v532 = vpop.f32.mrb[0].mxu0
  %v533 = vpop.f32.mrb[0].mxu0
  %534 = vdwg.mxu0
  %535 = vmatprep.subr.bf16.mxu0 0
  %536 = vmatpush1.bf16.msra.mxu0 %v399
  %537 = vmatprep.subr.bf16.mxu0 0
  %538 = vmatpush1.bf16.msra.mxu0 %v400
  %539 = vmatprep.subr.bf16.mxu0 0
  %540 = vmatpush1.bf16.msra.mxu0 %v401
  %541 = vmatprep.subr.bf16.mxu0 0
  %542 = vmatpush1.bf16.msra.mxu0 %v402
  %543 = vmatprep.subr.bf16.mxu0 0
  %544 = vmatpush1.bf16.msra.mxu0 %v403
  %545 = vmatprep.subr.bf16.mxu0 0
  %546 = vmatpush1.bf16.msra.mxu0 %v404
  %547 = vmatprep.subr.bf16.mxu0 0
  %548 = vmatpush1.bf16.msra.mxu0 %v405
  %549 = vmatprep.subr.bf16.mxu0 0
  %550 = vmatpush1.bf16.msra.mxu0 %v406
  %551 = vmatprep.subr.bf16.mxu0 0
  %552 = vmatpush1.bf16.msra.mxu0 %v407
  %553 = vmatprep.subr.bf16.mxu0 0
  %554 = vmatpush1.bf16.msra.mxu0 %v408
  %555 = vmatprep.subr.bf16.mxu0 0
  %556 = vmatpush1.bf16.msra.mxu0 %v409
  %557 = vmatprep.subr.bf16.mxu0 0
  %558 = vmatpush1.bf16.msra.mxu0 %v410
  %559 = vmatprep.subr.bf16.mxu0 0
  %560 = vmatpush1.bf16.msra.mxu0 %v411
  %561 = vmatprep.subr.bf16.mxu0 0
  %562 = vmatpush1.bf16.msra.mxu0 %v412
  %563 = vmatprep.subr.bf16.mxu0 0
  %564 = vmatpush1.bf16.msra.mxu0 %v413
  %565 = vmatprep.subr.bf16.mxu0 0
  %566 = vmatpush1.bf16.msra.mxu0 %v414
  %567 = vmatprep.mubr.bf16.mxu0 %v148
  %568 = vmatmul.mubr.bf16.gmra.mrb[0].mxu0 %v147
  %v569 = vpop.f32.mrb[0].mxu0
  %v570 = vadd.f32 %v530, %v569
  %v571 = vpop.f32.mrb[0].mxu0
  %v572 = vpop.f32.mrb[0].mxu0
  %v573 = vpop.f32.mrb[0].mxu0
  %574 = vdwg.mxu0
  %575 = vmatprep.subr.bf16.mxu0 0
  %576 = vmatpush1.bf16.msra.mxu0 %v415
  %577 = vmatprep.subr.bf16.mxu0 0
  %578 = vmatpush1.bf16.msra.mxu0 %v416
  %579 = vmatprep.subr.bf16.mxu0 0
  %580 = vmatpush1.bf16.msra.mxu0 %v417
  %581 = vmatprep.subr.bf16.mxu0 0
  %582 = vmatpush1.bf16.msra.mxu0 %v418
  %583 = vmatprep.subr.bf16.mxu0 0
  %584 = vmatpush1.bf16.msra.mxu0 %v419
  %585 = vmatprep.subr.bf16.mxu0 0
  %586 = vmatpush1.bf16.msra.mxu0 %v420
  %587 = vmatprep.subr.bf16.mxu0 0
  %588 = vmatpush1.bf16.msra.mxu0 %v421
  %589 = vmatprep.subr.bf16.mxu0 0
  %590 = vmatpush1.bf16.msra.mxu0 %v422
  %591 = vmatprep.subr.bf16.mxu0 0
  %592 = vmatpush1.bf16.msra.mxu0 %v423
  %593 = vmatprep.subr.bf16.mxu0 0
  %594 = vmatpush1.bf16.msra.mxu0 %v424
  %595 = vmatprep.subr.bf16.mxu0 0
  %596 = vmatpush1.bf16.msra.mxu0 %v425
  %597 = vmatprep.subr.bf16.mxu0 0
  %598 = vmatpush1.bf16.msra.mxu0 %v426
  %599 = vmatprep.subr.bf16.mxu0 0
  %600 = vmatpush1.bf16.msra.mxu0 %v427
  %601 = vmatprep.subr.bf16.mxu0 0
  %602 = vmatpush1.bf16.msra.mxu0 %v428
  %603 = vmatprep.subr.bf16.mxu0 0
  %604 = vmatpush1.bf16.msra.mxu0 %v429
  %605 = vmatprep.subr.bf16.mxu0 0
  %606 = vmatpush1.bf16.msra.mxu0 %v430
  %607 = vmatprep.mubr.bf16.mxu0 %v150
  %608 = vmatmul.mubr.bf16.gmra.mrb[0].mxu0 %v149
  %v609 = vpop.f32.mrb[0].mxu0
  %v610 = vadd.f32 %v570, %v609
  %v611 = vpop.f32.mrb[0].mxu0
  %v612 = vpop.f32.mrb[0].mxu0
  %v613 = vpop.f32.mrb[0].mxu0
  %614 = vdwg.mxu0
  %615 = vmatprep.subr.bf16.mxu0 0
  %616 = vmatpush1.bf16.msra.mxu0 %v431
  %617 = vmatprep.subr.bf16.mxu0 0
  %618 = vmatpush1.bf16.msra.mxu0 %v432
  %619 = vmatprep.subr.bf16.mxu0 0
  %620 = vmatpush1.bf16.msra.mxu0 %v433
  %621 = vmatprep.subr.bf16.mxu0 0
  %622 = vmatpush1.bf16.msra.mxu0 %v434
  %623 = vmatprep.subr.bf16.mxu0 0
  %624 = vmatpush1.bf16.msra.mxu0 %v435
  %625 = vmatprep.subr.bf16.mxu0 0
  %626 = vmatpush1.bf16.msra.mxu0 %v436
  %627 = vmatprep.subr.bf16.mxu0 0
  %628 = vmatpush1.bf16.msra.mxu0 %v437
  %629 = vmatprep.subr.bf16.mxu0 0
  %630 = vmatpush1.bf16.msra.mxu0 %v438
  %631 = vmatprep.subr.bf16.mxu0 0
  %632 = vmatpush1.bf16.msra.mxu0 0
  %633 = vmatprep.subr.bf16.mxu0 0
  %634 = vmatpush1.bf16.msra.mxu0 0
  %635 = vmatprep.subr.bf16.mxu0 0
  %636 = vmatpush1.bf16.msra.mxu0 0
  %637 = vmatprep.subr.bf16.mxu0 0
  %638 = vmatpush1.bf16.msra.mxu0 0
  %639 = vmatprep.subr.bf16.mxu0 0
  %640 = vmatpush1.bf16.msra.mxu0 0
  %641 = vmatprep.subr.bf16.mxu0 0
  %642 = vmatpush1.bf16.msra.mxu0 0
  %643 = vmatprep.subr.bf16.mxu0 0
  %644 = vmatpush1.bf16.msra.mxu0 0
  %645 = vmatprep.subr.bf16.mxu0 0
  %646 = vmatpush1.bf16.msra.mxu0 0
  %647 = vmatprep.mubr.bf16.mxu0 0
  %648 = vmatmul.mubr.bf16.gmra.mrb[0].mxu0 %v151
  %v649 = vpop.f32.mrb[0].mxu0
  %v650 = vadd.f32 %v610, %v649
  %v651 = vpop.f32.mrb[0].mxu0
  %v652 = vpop.f32.mrb[0].mxu0
  %v653 = vpop.f32.mrb[0].mxu0
  %654 = vdwg.mxu0
  %v655 = vld [vmem:[%s2] sm:$0x1]
  %v657 = vlaneseq
  %v658 = vshrl.u32 %v657, 7
  %v659 = vsub.s32 0, %v658
  %v660 = vrot.slane %v655, %v659
  %v662 = vmul.f32 %v650, %v660
  %v663 = vld [vmem:[%s3] sm:$0x1]
  %v665 = vlaneseq
  %v666 = vshrl.u32 %v665, 7
  %v667 = vsub.s32 0, %v666
  %v668 = vrot.slane %v663, %v667
  %v670 = vadd.f32 %v662, %v668
  %v671 = vmul.f32 %v670, 0.5
  %v672 = vmul.f32 %v670, 0.70710677
  %v673 = vand.u32 2147483647, %v672
  %v674 = vmul.f32 %v673, 0.3275911
  %v675 = vadd.f32 %v674, 1.0
  %v676 = vrcp.pop %v675
  %v677 = vmul.f32 %v676, 1.0614054
  %v678 = vadd.f32 %v677, -1.4531521
  %v679 = vmul.f32 %v676, %v678
  %v680 = vadd.f32 %v679, 1.4214138
  %v681 = vmul.f32 %v676, %v680
  %v682 = vadd.f32 %v681, -0.28449672
  %v683 = vmul.f32 %v676, %v682
  %v684 = vadd.f32 %v683, 0.2548296
  %v685 = vmul.f32 %v676, %v684
  %v686 = vsub.f32 0.0, %v673
  %v687 = vmul.f32 %v686, %v673
  %v688 = vmul.f32 %v687, 1.442695
  %v689 = vpow.pop %v688
  %v690 = vmul.f32 %v685, %v689
  %v691 = vsub.f32 1.0, %v690
  %vm692 = vcmp.ge.f32.partialorder %v672, 0.0
  %v693 = vsub.f32 0.0, %v691
  %v694 = vsel %vm692, %v691, %v693
  %v695 = vadd.f32 %v694, 1.0
  %v696 = vmul.f32 %v671, %v695
  %v697 = vpack.c.bf16 %v696, %v696
  %698 = vst [vmem:[%s4] sm:$0xf] %v697
  // Predicated region
  $region18: #{mrcnn_forward.19} parent=0 // pred_check
    _
  $region19: #{mrcnn_forward.19} parent=0 // pred_check_branch
    %700 = sbr.rel (0) target = $region21
  $region20: #{mrcnn_forward.19} parent=0 // pred_region
    _
  $region21: #{mrcnn_forward.19} parent=0 // pred_fallthru
    _
  // Predicated region
  $region22: #{mrcnn_forward.19} parent=0 // pred_check
    _
  $region23: #{mrcnn_forward.19} parent=0 // pred_check_branch
    %702 = sbr.rel (0) target = $region25
  $region24: #{mrcnn_forward.19} parent=0 // pred_region
    _
  $region25: #{mrcnn_forward.19} parent=0 // pred_fallthru
    _

// kernel: mrcnn_forward.20
$region0: #{mrcnn_forward.20}
  #allocation0 [shape = 'u32[]', space=smem, size = 0x4, offset = 0x4, fixed_abs, tag = 'smem constant byte address 0x4 - core index']
  #allocation1 [shape = 'u32[144,128]{1,0:T(1,128)}', space=vmem, size = 0x12000, scoped, tag = 'internal scratch']
  %s0 = inlined_call_operand.vmem [shape: bf16[8,2,128], index: 0, kind: input, shape index: {}]
  %s1 = inlined_call_operand.vmem [shape: bf16[8,128], index: 1, kind: output, shape index: {}]
  %s2 = sld [smem:[#allocation0]]
  $region14: #{mrcnn_forward.20} parent=0
    _
  %s4 = ssub.s32 1, %s2
  %s5 = scalar_select 0, %s4, %s2
  // Predicated region
  $region2: #{mrcnn_forward.20} parent=0 // pred_check
    _
  $region3: #{mrcnn_forward.20} parent=0 // pred_check_branch
    %7 = sbr.rel (0) target = $region5
  $region4: #{mrcnn_forward.20} parent=0 // pred_region
    _
  $region5: #{mrcnn_forward.20} parent=0 // pred_fallthru
    _
  %v9 = vld [vmem:[%s0] sm:$0x1]
  %v10 = vld [vmem:[%s0 + $0x1] sm:$0x1]
  %v11 = vld [vmem:[%s0 + $0x2] sm:$0x1]
  %v12 = vld [vmem:[%s0 + $0x3] sm:$0x1]
  %v13 = vld [vmem:[%s0 + $0x4] sm:$0x1]
  %v14 = vld [vmem:[%s0 + $0x5] sm:$0x1]
  %v15 = vld [vmem:[%s0 + $0x6] sm:$0x1]
  %v16 = vld [vmem:[%s0 + $0x7] sm:$0x1]
  %vm17 = vcmask 1040384
  %v20 = vsel %vm17, %v9, 4286644096
  %v22 = vunpack.i.l.bf16 %v20
  %v23 = vunpack.i.h.bf16 %v20
  %v24 = vmax.f32 %v22, %v23
  %v25 = vrot.slane %v24, 4
  %v26 = vmax.f32 %v24, %v25
  %v27 = vrot.slane %v26, 2
  %v28 = vmax.f32 %v26, %v27
  %v29 = vrot.slane %v28, 1
  %v30 = vmax.f32 %v28, %v29
  %v31 = vpack.i.bf16 %v30, %v30
  %v33 = vsel %vm17, %v10, 4286644096
  %v35 = vunpack.i.l.bf16 %v33
  %v36 = vunpack.i.h.bf16 %v33
  %v37 = vmax.f32 %v35, %v36
  %v38 = vrot.slane %v37, 4
  %v39 = vmax.f32 %v37, %v38
  %v40 = vrot.slane %v39, 2
  %v41 = vmax.f32 %v39, %v40
  %v42 = vrot.slane %v41, 1
  %v43 = vmax.f32 %v41, %v42
  %v44 = vpack.i.bf16 %v43, %v43
  %v46 = vsel %vm17, %v11, 4286644096
  %v48 = vunpack.i.l.bf16 %v46
  %v49 = vunpack.i.h.bf16 %v46
  %v50 = vmax.f32 %v48, %v49
  %v51 = vrot.slane %v50, 4
  %v52 = vmax.f32 %v50, %v51
  %v53 = vrot.slane %v52, 2
  %v54 = vmax.f32 %v52, %v53
  %v55 = vrot.slane %v54, 1
  %v56 = vmax.f32 %v54, %v55
  %v57 = vpack.i.bf16 %v56, %v56
  %v59 = vsel %vm17, %v12, 4286644096
  %v61 = vunpack.i.l.bf16 %v59
  %v62 = vunpack.i.h.bf16 %v59
  %v63 = vmax.f32 %v61, %v62
  %v64 = vrot.slane %v63, 4
  %v65 = vmax.f32 %v63, %v64
  %v66 = vrot.slane %v65, 2
  %v67 = vmax.f32 %v65, %v66
  %v68 = vrot.slane %v67, 1
  %v69 = vmax.f32 %v67, %v68
  %v70 = vpack.i.bf16 %v69, %v69
  %v72 = vsel %vm17, %v13, 4286644096
  %v74 = vunpack.i.l.bf16 %v72
  %v75 = vunpack.i.h.bf16 %v72
  %v76 = vmax.f32 %v74, %v75
  %v77 = vrot.slane %v76, 4
  %v78 = vmax.f32 %v76, %v77
  %v79 = vrot.slane %v78, 2
  %v80 = vmax.f32 %v78, %v79
  %v81 = vrot.slane %v80, 1
  %v82 = vmax.f32 %v80, %v81
  %v83 = vpack.i.bf16 %v82, %v82
  %v85 = vsel %vm17, %v14, 4286644096
  %v87 = vunpack.i.l.bf16 %v85
  %v88 = vunpack.i.h.bf16 %v85
  %v89 = vmax.f32 %v87, %v88
  %v90 = vrot.slane %v89, 4
  %v91 = vmax.f32 %v89, %v90
  %v92 = vrot.slane %v91, 2
  %v93 = vmax.f32 %v91, %v92
  %v94 = vrot.slane %v93, 1
  %v95 = vmax.f32 %v93, %v94
  %v96 = vpack.i.bf16 %v95, %v95
  %v98 = vsel %vm17, %v15, 4286644096
  %v100 = vunpack.i.l.bf16 %v98
  %v101 = vunpack.i.h.bf16 %v98
  %v102 = vmax.f32 %v100, %v101
  %v103 = vrot.slane %v102, 4
  %v104 = vmax.f32 %v102, %v103
  %v105 = vrot.slane %v104, 2
  %v106 = vmax.f32 %v104, %v105
  %v107 = vrot.slane %v106, 1
  %v108 = vmax.f32 %v106, %v107
  %v109 = vpack.i.bf16 %v108, %v108
  %v111 = vsel %vm17, %v16, 4286644096
  %v113 = vunpack.i.l.bf16 %v111
  %v114 = vunpack.i.h.bf16 %v111
  %v115 = vmax.f32 %v113, %v114
  %v116 = vrot.slane %v115, 4
  %v117 = vmax.f32 %v115, %v116
  %v118 = vrot.slane %v117, 2
  %v119 = vmax.f32 %v117, %v118
  %v120 = vrot.slane %v119, 1
  %v121 = vmax.f32 %v119, %v120
  %v122 = vpack.i.bf16 %v121, %v121
  %v131 = vunpack.c.l.b16 %v31
  %v132 = vunpack.c.l.b16 %v44
  %v133 = vunpack.c.l.b16 %v57
  %v134 = vunpack.c.l.b16 %v70
  %v135 = vunpack.c.l.b16 %v83
  %v136 = vunpack.c.l.b16 %v96
  %v137 = vunpack.c.l.b16 %v109
  %v138 = vunpack.c.l.b16 %v122
  %v139 = vpack.c.b16 %v131, %v131
  %v140 = vpack.c.b16 %v132, %v132
  %v141 = vpack.c.b16 %v133, %v133
  %v142 = vpack.c.b16 %v134, %v134
  %v143 = vpack.c.b16 %v135, %v135
  %v144 = vpack.c.b16 %v136, %v136
  %v145 = vpack.c.b16 %v137, %v137
  %v146 = vpack.c.b16 %v138, %v138
  %v147 = vunpack.c.l.b16 %v139
  %v148 = vunpack.c.l.b16 %v140
  %v149 = vunpack.c.l.b16 %v141
  %v150 = vunpack.c.l.b16 %v142
  %v151 = vunpack.c.l.b16 %v143
  %v152 = vunpack.c.l.b16 %v144
  %v153 = vunpack.c.l.b16 %v145
  %v154 = vunpack.c.l.b16 %v146
  %vm155 = vcmask 1041409
  %v156 = vsel %vm155, %v148, %v147
  %vm157 = vcmask 1042434
  %v158 = vsel %vm157, %v149, %v156
  %vm159 = vcmask 1043459
  %v160 = vsel %vm159, %v150, %v158
  %vm161 = vcmask 1044484
  %v162 = vsel %vm161, %v151, %v160
  %vm163 = vcmask 1045509
  %v164 = vsel %vm163, %v152, %v162
  %vm165 = vcmask 1046534
  %v166 = vsel %vm165, %v153, %v164
  %vm167 = vcmask 1047559
  %v168 = vsel %vm167, %v154, %v166
  %v169 = vpack.c.b16 %v168, %v168
  %171 = vst [vmem:[%s1] sm:$0xf] %v169
  // Predicated region
  $region6: #{mrcnn_forward.20} parent=0 // pred_check
    _
  $region7: #{mrcnn_forward.20} parent=0 // pred_check_branch
    %173 = sbr.rel (0) target = $region9
  $region8: #{mrcnn_forward.20} parent=0 // pred_region
    _
  $region9: #{mrcnn_forward.20} parent=0 // pred_fallthru
    _
  // Predicated region
  $region10: #{mrcnn_forward.20} parent=0 // pred_check
    _
  $region11: #{mrcnn_forward.20} parent=0 // pred_check_branch
    %175 = sbr.rel (0) target = $region13
  $region12: #{mrcnn_forward.20} parent=0 // pred_region
    _
  $region13: #{mrcnn_forward.20} parent=0 // pred_fallthru
    _

// kernel: mrcnn_forward.11
$region0: #{mrcnn_forward.11}
  #allocation0 [shape = 'u32[]', space=smem, size = 0x4, offset = 0x4, fixed_abs, tag = 'smem constant byte address 0x4 - core index']
  #allocation1 [shape = 'u32[144,128]{1,0:T(1,128)}', space=vmem, size = 0x12000, scoped, tag = 'internal scratch']
  %s0 = inlined_call_operand.vmem [shape: bf16[80,64], index: 0, kind: input, shape index: {}]
  %s1 = inlined_call_operand.vmem [shape: bf16[64,64], index: 1, kind: input, shape index: {}]
  %s2 = inlined_call_operand.vmem [shape: f32[1,64], index: 2, kind: input, shape index: {}]
  %s3 = inlined_call_operand.vmem [shape: f32[1,64], index: 3, kind: input, shape index: {}]
  %s4 = inlined_call_operand.vmem [shape: bf16[80,64], index: 4, kind: output, shape index: {}]
  %s5 = sld [smem:[#allocation0]]
  $region26: #{mrcnn_forward.11} parent=0
    _
  %s7 = ssub.s32 1, %s5
  %s8 = scalar_select 0, %s7, %s5
  // Predicated region
  $region2: #{mrcnn_forward.11} parent=0 // pred_check
    _
  $region3: #{mrcnn_forward.11} parent=0 // pred_check_branch
    %10 = sbr.rel (0) target = $region5
  $region4: #{mrcnn_forward.11} parent=0 // pred_region
    _
  $region5: #{mrcnn_forward.11} parent=0 // pred_fallthru
    _
  // Predicated region
  $region6: #{mrcnn_forward.11} parent=0 // pred_check
    _
  $region7: #{mrcnn_forward.11} parent=0 // pred_check_branch
    %12 = sbr.rel (0) target = $region9
  $region8: #{mrcnn_forward.11} parent=0 // pred_region
    _
  $region9: #{mrcnn_forward.11} parent=0 // pred_fallthru
    _
  // Predicated region
  $region10: #{mrcnn_forward.11} parent=0 // pred_check
    _
  $region11: #{mrcnn_forward.11} parent=0 // pred_check_branch
    %14 = sbr.rel (0) target = $region13
  $region12: #{mrcnn_forward.11} parent=0 // pred_region
    _
  $region13: #{mrcnn_forward.11} parent=0 // pred_fallthru
    _
  // Predicated region
  $region14: #{mrcnn_forward.11} parent=0 // pred_check
    _
  $region15: #{mrcnn_forward.11} parent=0 // pred_check_branch
    %16 = sbr.rel (0) target = $region17
  $region16: #{mrcnn_forward.11} parent=0 // pred_region
    _
  $region17: #{mrcnn_forward.11} parent=0 // pred_fallthru
    _
  %v18 = vld [vmem:[%s0] sm:$0xf]
  %v19 = vld [vmem:[%s0 + $0x4] sm:$0xf]
  %v20 = vld [vmem:[%s0 + $0x8] sm:$0xf]
  %v21 = vld [vmem:[%s0 + $0xc] sm:$0xf]
  %v22 = vld [vmem:[%s0 + $0x10] sm:$0xf]
  %v23 = vld [vmem:[%s0 + $0x14] sm:$0xf]
  %v24 = vld [vmem:[%s0 + $0x18] sm:$0xf]
  %v25 = vld [vmem:[%s0 + $0x1c] sm:$0xf]
  %v26 = vld [vmem:[%s0 + $0x20] sm:$0xf]
  %v27 = vld [vmem:[%s0 + $0x24] sm:$0xf]
  %v28 = vld [vmem:[%s1] sm:$0xf]
  %v29 = vld [vmem:[%s1 + $0x4] sm:$0xf]
  %v30 = vld [vmem:[%s1 + $0x8] sm:$0xf]
  %v31 = vld [vmem:[%s1 + $0xc] sm:$0xf]
  %v32 = vld [vmem:[%s1 + $0x10] sm:$0xf]
  %v33 = vld [vmem:[%s1 + $0x14] sm:$0xf]
  %v34 = vld [vmem:[%s1 + $0x18] sm:$0xf]
  %v35 = vld [vmem:[%s1 + $0x1c] sm:$0xf]
  %v46 = vunpack.c.l.b16 %v18
  %v47 = vunpack.c.l.b16 %v19
  %v48 = vunpack.c.l.b16 %v20
  %v49 = vunpack.c.l.b16 %v21
  %v50 = vunpack.c.l.b16 %v22
  %v51 = vunpack.c.l.b16 %v23
  %v52 = vunpack.c.l.b16 %v24
  %v53 = vunpack.c.l.b16 %v25
  %v54 = vunpack.c.l.b16 %v26
  %v55 = vunpack.c.l.b16 %v27
  %v56 = vpack.c.b16 %v47, %v46
  %v57 = vpack.c.b16 %v49, %v48
  %v58 = vpack.c.b16 %v51, %v50
  %v59 = vpack.c.b16 %v53, %v52
  %v60 = vpack.c.b16 %v55, %v54
  %v69 = vunpack.c.l.b16 %v28
  %v70 = vunpack.c.l.b16 %v29
  %v71 = vunpack.c.l.b16 %v30
  %v72 = vunpack.c.l.b16 %v31
  %v73 = vunpack.c.l.b16 %v32
  %v74 = vunpack.c.l.b16 %v33
  %v75 = vunpack.c.l.b16 %v34
  %v76 = vunpack.c.l.b16 %v35
  %v77 = vpack.c.b16 %v70, %v69
  %v78 = vpack.c.b16 %v72, %v71
  %v79 = vpack.c.b16 %v74, %v73
  %v80 = vpack.c.b16 %v76, %v75
  %vm85 = vcmask 523264
  %v87 = vsel %vm85, %v56, 0
  %v90 = vsel %vm85, %v57, 0
  %v93 = vsel %vm85, %v58, 0
  %v96 = vsel %vm85, %v59, 0
  %v99 = vsel %vm85, %v60, 0
  %101 = vmatprep.subr.bf16.mxu0 0
  %102 = vmatpush1.bf16.msra.mxu0 %v77
  %103 = vmatprep.subr.bf16.mxu0 0
  %104 = vmatpush1.bf16.msra.mxu0 %v78
  %105 = vmatprep.subr.bf16.mxu0 0
  %106 = vmatpush1.bf16.msra.mxu0 %v79
  %107 = vmatprep.subr.bf16.mxu0 0
  %108 = vmatpush1.bf16.msra.mxu0 %v80
  %109 = vmatprep.subr.bf16.mxu0 0
  %110 = vmatpush1.bf16.msra.mxu0 0
  %111 = vmatprep.subr.bf16.mxu0 0
  %112 = vmatpush1.bf16.msra.mxu0 0
  %113 = vmatprep.subr.bf16.mxu0 0
  %114 = vmatpush1.bf16.msra.mxu0 0
  %115 = vmatprep.subr.bf16.mxu0 0
  %116 = vmatpush1.bf16.msra.mxu0 0
  %117 = vmatprep.subr.bf16.mxu0 0
  %118 = vmatpush1.bf16.msra.mxu0 0
  %119 = vmatprep.subr.bf16.mxu0 0
  %120 = vmatpush1.bf16.msra.mxu0 0
  %121 = vmatprep.subr.bf16.mxu0 0
  %122 = vmatpush1.bf16.msra.mxu0 0
  %123 = vmatprep.subr.bf16.mxu0 0
  %124 = vmatpush1.bf16.msra.mxu0 0
  %125 = vmatprep.subr.bf16.mxu0 0
  %126 = vmatpush1.bf16.msra.mxu0 0
  %127 = vmatprep.subr.bf16.mxu0 0
  %128 = vmatpush1.bf16.msra.mxu0 0
  %129 = vmatprep.subr.bf16.mxu0 0
  %130 = vmatpush1.bf16.msra.mxu0 0
  %131 = vmatprep.subr.bf16.mxu0 0
  %132 = vmatpush1.bf16.msra.mxu0 0
  %133 = vmatprep.mubr.bf16.mxu0 0
  %134 = vmatmul.mubr.bf16.gmra.mrb[0].mxu0 %v87
  %v135 = vpop.f32.mrb[0].mxu0
  %v136 = vadd.f32 0.0, %v135
  %v137 = vpop.f32.mrb[0].mxu0
  %v138 = vpop.f32.mrb[0].mxu0
  %v139 = vadd.f32 0.0, %v138
  %v140 = vpop.f32.mrb[0].mxu0
  %141 = vmatprep.mubr.bf16.mxu0 0
  %142 = vmatmul.mubr.bf16.gmra.mrb[0].mxu0 %v90
  %v143 = vpop.f32.mrb[0].mxu0
  %v144 = vadd.f32 0.0, %v143
  %v145 = vpop.f32.mrb[0].mxu0
  %v146 = vpop.f32.mrb[0].mxu0
  %v147 = vadd.f32 0.0, %v146
  %v148 = vpop.f32.mrb[0].mxu0
  %149 = vmatprep.mubr.bf16.mxu0 0
  %150 = vmatmul.mubr.bf16.gmra.mrb[0].mxu0 %v93
  %v151 = vpop.f32.mrb[0].mxu0
  %v152 = vadd.f32 0.0, %v151
  %v153 = vpop.f32.mrb[0].mxu0
  %v154 = vpop.f32.mrb[0].mxu0
  %v155 = vadd.f32 0.0, %v154
  %v156 = vpop.f32.mrb[0].mxu0
  %157 = vmatprep.mubr.bf16.mxu0 0
  %158 = vmatmul.mubr.bf16.gmra.mrb[0].mxu0 %v96
  %v159 = vpop.f32.mrb[0].mxu0
  %v160 = vadd.f32 0.0, %v159
  %v161 = vpop.f32.mrb[0].mxu0
  %v162 = vpop.f32.mrb[0].mxu0
  %v163 = vadd.f32 0.0, %v162
  %v164 = vpop.f32.mrb[0].mxu0
  %165 = vmatprep.mubr.bf16.mxu0 0
  %166 = vmatmul.mubr.bf16.gmra.mrb[0].mxu0 %v99
  %v167 = vpop.f32.mrb[0].mxu0
  %v168 = vadd.f32 0.0, %v167
  %v169 = vpop.f32.mrb[0].mxu0
  %v170 = vpop.f32.mrb[0].mxu0
  %v171 = vadd.f32 0.0, %v170
  %v172 = vpop.f32.mrb[0].mxu0
  %173 = vdwg.mxu0
  %v174 = vld [vmem:[%s2] sm:$0x1]
  %v176 = vlaneseq
  %v177 = vshrl.u32 %v176, 7
  %v178 = vsub.s32 0, %v177
  %v179 = vrot.slane %v174, %v178
  %v181 = vmul.f32 %v136, %v179
  %v182 = vmul.f32 %v139, %v179
  %v183 = vmul.f32 %v144, %v179
  %v184 = vmul.f32 %v147, %v179
  %v185 = vmul.f32 %v152, %v179
  %v186 = vmul.f32 %v155, %v179
  %v187 = vmul.f32 %v160, %v179
  %v188 = vmul.f32 %v163, %v179
  %v189 = vmul.f32 %v168, %v179
  %v190 = vmul.f32 %v171, %v179
  %v191 = vld [vmem:[%s3] sm:$0x1]
  %v193 = vlaneseq
  %v194 = vshrl.u32 %v193, 7
  %v195 = vsub.s32 0, %v194
  %v196 = vrot.slane %v191, %v195
  %v198 = vadd.f32 %v181, %v196
  %v199 = vadd.f32 %v182, %v196
  %v200 = vadd.f32 %v183, %v196
  %v201 = vadd.f32 %v184, %v196
  %v202 = vadd.f32 %v185, %v196
  %v203 = vadd.f32 %v186, %v196
  %v204 = vadd.f32 %v187, %v196
  %v205 = vadd.f32 %v188, %v196
  %v206 = vadd.f32 %v189, %v196
  %v207 = vadd.f32 %v190, %v196
  %v208 = vmul.f32 %v198, 0.5
  %v209 = vmul.f32 %v199, 0.5
  %v210 = vmul.f32 %v200, 0.5
  %v211 = vmul.f32 %v201, 0.5
  %v212 = vmul.f32 %v202, 0.5
  %v213 = vmul.f32 %v203, 0.5
  %v214 = vmul.f32 %v204, 0.5
  %v215 = vmul.f32 %v205, 0.5
  %v216 = vmul.f32 %v206, 0.5
  %v217 = vmul.f32 %v207, 0.5
  %v218 = vmul.f32 %v198, 0.70710677
  %v219 = vmul.f32 %v199, 0.70710677
  %v220 = vmul.f32 %v200, 0.70710677
  %v221 = vmul.f32 %v201, 0.70710677
  %v222 = vmul.f32 %v202, 0.70710677
  %v223 = vmul.f32 %v203, 0.70710677
  %v224 = vmul.f32 %v204, 0.70710677
  %v225 = vmul.f32 %v205, 0.70710677
  %v226 = vmul.f32 %v206, 0.70710677
  %v227 = vmul.f32 %v207, 0.70710677
  %v228 = vand.u32 2147483647, %v218
  %v229 = vand.u32 2147483647, %v219
  %v230 = vand.u32 2147483647, %v220
  %v231 = vand.u32 2147483647, %v221
  %v232 = vand.u32 2147483647, %v222
  %v233 = vand.u32 2147483647, %v223
  %v234 = vand.u32 2147483647, %v224
  %v235 = vand.u32 2147483647, %v225
  %v236 = vand.u32 2147483647, %v226
  %v237 = vand.u32 2147483647, %v227
  %v238 = vmul.f32 %v228, 0.3275911
  %v239 = vmul.f32 %v229, 0.3275911
  %v240 = vmul.f32 %v230, 0.3275911
  %v241 = vmul.f32 %v231, 0.3275911
  %v242 = vmul.f32 %v232, 0.3275911
  %v243 = vmul.f32 %v233, 0.3275911
  %v244 = vmul.f32 %v234, 0.3275911
  %v245 = vmul.f32 %v235, 0.3275911
  %v246 = vmul.f32 %v236, 0.3275911
  %v247 = vmul.f32 %v237, 0.3275911
  %v248 = vadd.f32 %v238, 1.0
  %v249 = vadd.f32 %v239, 1.0
  %v250 = vadd.f32 %v240, 1.0
  %v251 = vadd.f32 %v241, 1.0
  %v252 = vadd.f32 %v242, 1.0
  %v253 = vadd.f32 %v243, 1.0
  %v254 = vadd.f32 %v244, 1.0
  %v255 = vadd.f32 %v245, 1.0
  %v256 = vadd.f32 %v246, 1.0
  %v257 = vadd.f32 %v247, 1.0
  %v258 = vrcp.pop %v248
  %v259 = vrcp.pop %v249
  %v260 = vrcp.pop %v250
  %v261 = vrcp.pop %v251
  %v262 = vrcp.pop %v252
  %v263 = vrcp.pop %v253
  %v264 = vrcp.pop %v254
  %v265 = vrcp.pop %v255
  %v266 = vrcp.pop %v256
  %v267 = vrcp.pop %v257
  %v268 = vmul.f32 %v258, 1.0614054
  %v269 = vmul.f32 %v259, 1.0614054
  %v270 = vmul.f32 %v260, 1.0614054
  %v271 = vmul.f32 %v261, 1.0614054
  %v272 = vmul.f32 %v262, 1.0614054
  %v273 = vmul.f32 %v263, 1.0614054
  %v274 = vmul.f32 %v264, 1.0614054
  %v275 = vmul.f32 %v265, 1.0614054
  %v276 = vmul.f32 %v266, 1.0614054
  %v277 = vmul.f32 %v267, 1.0614054
  %v278 = vadd.f32 %v268, -1.4531521
  %v279 = vadd.f32 %v269, -1.4531521
  %v280 = vadd.f32 %v270, -1.4531521
  %v281 = vadd.f32 %v271, -1.4531521
  %v282 = vadd.f32 %v272, -1.4531521
  %v283 = vadd.f32 %v273, -1.4531521
  %v284 = vadd.f32 %v274, -1.4531521
  %v285 = vadd.f32 %v275, -1.4531521
  %v286 = vadd.f32 %v276, -1.4531521
  %v287 = vadd.f32 %v277, -1.4531521
  %v288 = vmul.f32 %v258, %v278
  %v289 = vmul.f32 %v259, %v279
  %v290 = vmul.f32 %v260, %v280
  %v291 = vmul.f32 %v261, %v281
  %v292 = vmul.f32 %v262, %v282
  %v293 = vmul.f32 %v263, %v283
  %v294 = vmul.f32 %v264, %v284
  %v295 = vmul.f32 %v265, %v285
  %v296 = vmul.f32 %v266, %v286
  %v297 = vmul.f32 %v267, %v287
  %v298 = vadd.f32 %v288, 1.4214138
  %v299 = vadd.f32 %v289, 1.4214138
  %v300 = vadd.f32 %v290, 1.4214138
  %v301 = vadd.f32 %v291, 1.4214138
  %v302 = vadd.f32 %v292, 1.4214138
  %v303 = vadd.f32 %v293, 1.4214138
  %v304 = vadd.f32 %v294, 1.4214138
  %v305 = vadd.f32 %v295, 1.4214138
  %v306 = vadd.f32 %v296, 1.4214138
  %v307 = vadd.f32 %v297, 1.4214138
  %v308 = vmul.f32 %v258, %v298
  %v309 = vmul.f32 %v259, %v299
  %v310 = vmul.f32 %v260, %v300
  %v311 = vmul.f32 %v261, %v301
  %v312 = vmul.f32 %v262, %v302
  %v313 = vmul.f32 %v263, %v303
  %v314 = vmul.f32 %v264, %v304
  %v315 = vmul.f32 %v265, %v305
  %v316 = vmul.f32 %v266, %v306
  %v317 = vmul.f32 %v267, %v307
  %v318 = vadd.f32 %v308, -0.28449672
  %v319 = vadd.f32 %v309, -0.28449672
  %v320 = vadd.f32 %v310, -0.28449672
  %v321 = vadd.f32 %v311, -0.28449672
  %v322 = vadd.f32 %v312, -0.28449672
  %v323 = vadd.f32 %v313, -0.28449672
  %v324 = vadd.f32 %v314, -0.28449672
  %v325 = vadd.f32 %v315, -0.28449672
  %v326 = vadd.f32 %v316, -0.28449672
  %v327 = vadd.f32 %v317, -0.28449672
  %v328 = vmul.f32 %v258, %v318
  %v329 = vmul.f32 %v259, %v319
  %v330 = vmul.f32 %v260, %v320
  %v331 = vmul.f32 %v261, %v321
  %v332 = vmul.f32 %v262, %v322
  %v333 = vmul.f32 %v263, %v323
  %v334 = vmul.f32 %v264, %v324
  %v335 = vmul.f32 %v265, %v325
  %v336 = vmul.f32 %v266, %v326
  %v337 = vmul.f32 %v267, %v327
  %v338 = vadd.f32 %v328, 0.2548296
  %v339 = vadd.f32 %v329, 0.2548296
  %v340 = vadd.f32 %v330, 0.2548296
  %v341 = vadd.f32 %v331, 0.2548296
  %v342 = vadd.f32 %v332, 0.2548296
  %v343 = vadd.f32 %v333, 0.2548296
  %v344 = vadd.f32 %v334, 0.2548296
  %v345 = vadd.f32 %v335, 0.2548296
  %v346 = vadd.f32 %v336, 0.2548296
  %v347 = vadd.f32 %v337, 0.2548296
  %v348 = vmul.f32 %v258, %v338
  %v349 = vmul.f32 %v259, %v339
  %v350 = vmul.f32 %v260, %v340
  %v351 = vmul.f32 %v261, %v341
  %v352 = vmul.f32 %v262, %v342
  %v353 = vmul.f32 %v263, %v343
  %v354 = vmul.f32 %v264, %v344
  %v355 = vmul.f32 %v265, %v345
  %v356 = vmul.f32 %v266, %v346
  %v357 = vmul.f32 %v267, %v347
  %v358 = vsub.f32 0.0, %v228
  %v359 = vsub.f32 0.0, %v229
  %v360 = vsub.f32 0.0, %v230
  %v361 = vsub.f32 0.0, %v231
  %v362 = vsub.f32 0.0, %v232
  %v363 = vsub.f32 0.0, %v233
  %v364 = vsub.f32 0.0, %v234
  %v365 = vsub.f32 0.0, %v235
  %v366 = vsub.f32 0.0, %v236
  %v367 = vsub.f32 0.0, %v237
  %v368 = vmul.f32 %v358, %v228
  %v369 = vmul.f32 %v359, %v229
  %v370 = vmul.f32 %v360, %v230
  %v371 = vmul.f32 %v361, %v231
  %v372 = vmul.f32 %v362, %v232
  %v373 = vmul.f32 %v363, %v233
  %v374 = vmul.f32 %v364, %v234
  %v375 = vmul.f32 %v365, %v235
  %v376 = vmul.f32 %v366, %v236
  %v377 = vmul.f32 %v367, %v237
  %v378 = vmul.f32 %v368, 1.442695
  %v379 = vpow.pop %v378
  %v380 = vmul.f32 %v369, 1.442695
  %v381 = vpow.pop %v380
  %v382 = vmul.f32 %v370, 1.442695
  %v383 = vpow.pop %v382
  %v384 = vmul.f32 %v371, 1.442695
  %v385 = vpow.pop %v384
  %v386 = vmul.f32 %v372, 1.442695
  %v387 = vpow.pop %v386
  %v388 = vmul.f32 %v373, 1.442695
  %v389 = vpow.pop %v388
  %v390 = vmul.f32 %v374, 1.442695
  %v391 = vpow.pop %v390
  %v392 = vmul.f32 %v375, 1.442695
  %v393 = vpow.pop %v392
  %v394 = vmul.f32 %v376, 1.442695
  %v395 = vpow.pop %v394
  %v396 = vmul.f32 %v377, 1.442695
  %v397 = vpow.pop %v396
  %v398 = vmul.f32 %v348, %v379
  %v399 = vmul.f32 %v349, %v381
  %v400 = vmul.f32 %v350, %v383
  %v401 = vmul.f32 %v351, %v385
  %v402 = vmul.f32 %v352, %v387
  %v403 = vmul.f32 %v353, %v389
  %v404 = vmul.f32 %v354, %v391
  %v405 = vmul.f32 %v355, %v393
  %v406 = vmul.f32 %v356, %v395
  %v407 = vmul.f32 %v357, %v397
  %v408 = vsub.f32 1.0, %v398
  %v409 = vsub.f32 1.0, %v399
  %v410 = vsub.f32 1.0, %v400
  %v411 = vsub.f32 1.0, %v401
  %v412 = vsub.f32 1.0, %v402
  %v413 = vsub.f32 1.0, %v403
  %v414 = vsub.f32 1.0, %v404
  %v415 = vsub.f32 1.0, %v405
  %v416 = vsub.f32 1.0, %v406
  %v417 = vsub.f32 1.0, %v407
  %vm418 = vcmp.ge.f32.partialorder %v218, 0.0
  %vm419 = vcmp.ge.f32.partialorder %v219, 0.0
  %vm420 = vcmp.ge.f32.partialorder %v220, 0.0
  %vm421 = vcmp.ge.f32.partialorder %v221, 0.0
  %vm422 = vcmp.ge.f32.partialorder %v222, 0.0
  %vm423 = vcmp.ge.f32.partialorder %v223, 0.0
  %vm424 = vcmp.ge.f32.partialorder %v224, 0.0
  %vm425 = vcmp.ge.f32.partialorder %v225, 0.0
  %vm426 = vcmp.ge.f32.partialorder %v226, 0.0
  %vm427 = vcmp.ge.f32.partialorder %v227, 0.0
  %v428 = vsub.f32 0.0, %v408
  %v429 = vsub.f32 0.0, %v409
  %v430 = vsub.f32 0.0, %v410
  %v431 = vsub.f32 0.0, %v411
  %v432 = vsub.f32 0.0, %v412
  %v433 = vsub.f32 0.0, %v413
  %v434 = vsub.f32 0.0, %v414
  %v435 = vsub.f32 0.0, %v415
  %v436 = vsub.f32 0.0, %v416
  %v437 = vsub.f32 0.0, %v417
  %v438 = vsel %vm418, %v408, %v428
  %v439 = vsel %vm419, %v409, %v429
  %v440 = vsel %vm420, %v410, %v430
  %v441 = vsel %vm421, %v411, %v431
  %v442 = vsel %vm422, %v412, %v432
  %v443 = vsel %vm423, %v413, %v433
  %v444 = vsel %vm424, %v414, %v434
  %v445 = vsel %vm425, %v415, %v435
  %v446 = vsel %vm426, %v416, %v436
  %v447 = vsel %vm427, %v417, %v437
  %v448 = vadd.f32 %v438, 1.0
  %v449 = vadd.f32 %v439, 1.0
  %v450 = vadd.f32 %v440, 1.0
  %v451 = vadd.f32 %v441, 1.0
  %v452 = vadd.f32 %v442, 1.0
  %v453 = vadd.f32 %v443, 1.0
  %v454 = vadd.f32 %v444, 1.0
  %v455 = vadd.f32 %v445, 1.0
  %v456 = vadd.f32 %v446, 1.0
  %v457 = vadd.f32 %v447, 1.0
  %v458 = vmul.f32 %v208, %v448
  %v459 = vmul.f32 %v209, %v449
  %v460 = vmul.f32 %v210, %v450
  %v461 = vmul.f32 %v211, %v451
  %v462 = vmul.f32 %v212, %v452
  %v463 = vmul.f32 %v213, %v453
  %v464 = vmul.f32 %v214, %v454
  %v465 = vmul.f32 %v215, %v455
  %v466 = vmul.f32 %v216, %v456
  %v467 = vmul.f32 %v217, %v457
  %v468 = vpack.c.bf16 %v459, %v458
  %v469 = vpack.c.bf16 %v461, %v460
  %v470 = vpack.c.bf16 %v463, %v462
  %v471 = vpack.c.bf16 %v465, %v464
  %v472 = vpack.c.bf16 %v467, %v466
  %v478 = vunpack.c.l.b16 %v468
  %v479 = vunpack.c.h.b16 %v468
  %v480 = vunpack.c.l.b16 %v469
  %v481 = vunpack.c.h.b16 %v469
  %v482 = vunpack.c.l.b16 %v470
  %v483 = vunpack.c.h.b16 %v470
  %v484 = vunpack.c.l.b16 %v471
  %v485 = vunpack.c.h.b16 %v471
  %v486 = vunpack.c.l.b16 %v472
  %v487 = vunpack.c.h.b16 %v472
  %v488 = vpack.c.b16 %v478, %v478
  %v489 = vpack.c.b16 %v479, %v479
  %v490 = vpack.c.b16 %v480, %v480
  %v491 = vpack.c.b16 %v481, %v481
  %v492 = vpack.c.b16 %v482, %v482
  %v493 = vpack.c.b16 %v483, %v483
  %v494 = vpack.c.b16 %v484, %v484
  %v495 = vpack.c.b16 %v485, %v485
  %v496 = vpack.c.b16 %v486, %v486
  %v497 = vpack.c.b16 %v487, %v487
  %vm508 = vcmask 519168
  %509 = vst.msk [vmem:[%s4] sm:$0xf] %vm508, %v488
  %510 = vst.msk [vmem:[%s4 + $0x4] sm:$0xf] %vm508, %v489
  %511 = vst.msk [vmem:[%s4 + $0x8] sm:$0xf] %vm508, %v490
  %512 = vst.msk [vmem:[%s4 + $0xc] sm:$0xf] %vm508, %v491
  %513 = vst.msk [vmem:[%s4 + $0x10] sm:$0xf] %vm508, %v492
  %514 = vst.msk [vmem:[%s4 + $0x14] sm:$0xf] %vm508, %v493
  %515 = vst.msk [vmem:[%s4 + $0x18] sm:$0xf] %vm508, %v494
  %516 = vst.msk [vmem:[%s4 + $0x1c] sm:$0xf] %vm508, %v495
  %517 = vst.msk [vmem:[%s4 + $0x20] sm:$0xf] %vm508, %v496
  %518 = vst.msk [vmem:[%s4 + $0x24] sm:$0xf] %vm508, %v497
  // Predicated region
  $region18: #{mrcnn_forward.11} parent=0 // pred_check
    _
  $region19: #{mrcnn_forward.11} parent=0 // pred_check_branch
    %520 = sbr.rel (0) target = $region21
  $region20: #{mrcnn_forward.11} parent=0 // pred_region
    _
  $region21: #{mrcnn_forward.11} parent=0 // pred_fallthru
    _
  // Predicated region
  $region22: #{mrcnn_forward.11} parent=0 // pred_check
    _
  $region23: #{mrcnn_forward.11} parent=0 // pred_check_branch
    %522 = sbr.rel (0) target = $region25
  $region24: #{mrcnn_forward.11} parent=0 // pred_region
    _
  $region25: #{mrcnn_forward.11} parent=0 // pred_fallthru
    _

// kernel: mrcnn_forward.12
$region0: #{mrcnn_forward.12}
  #allocation0 [shape = 'u32[]', space=smem, size = 0x4, offset = 0x4, fixed_abs, tag = 'smem constant byte address 0x4 - core index']
  #allocation1 [shape = 'u32[144,128]{1,0:T(1,128)}', space=vmem, size = 0x12000, scoped, tag = 'internal scratch']
  %s0 = inlined_call_operand.vmem [shape: bf16[48,8,64], index: 0, kind: input, shape index: {}]
  %s1 = inlined_call_operand.vmem [shape: bf16[48,64], index: 1, kind: output, shape index: {}]
  %s2 = sld [smem:[#allocation0]]
  $region14: #{mrcnn_forward.12} parent=0
    _
  %s4 = ssub.s32 1, %s2
  %s5 = scalar_select 0, %s4, %s2
  // Predicated region
  $region2: #{mrcnn_forward.12} parent=0 // pred_check
    _
  $region3: #{mrcnn_forward.12} parent=0 // pred_check_branch
    %7 = sbr.rel (0) target = $region5
  $region4: #{mrcnn_forward.12} parent=0 // pred_region
    _
  $region5: #{mrcnn_forward.12} parent=0 // pred_fallthru
    _
  %v9 = vld [vmem:[%s0] sm:$0xf]
  %v10 = vld [vmem:[%s0 + $0x4] sm:$0xf]
  %v11 = vld [vmem:[%s0 + $0x8] sm:$0xf]
  %v12 = vld [vmem:[%s0 + $0xc] sm:$0xf]
  %v13 = vld [vmem:[%s0 + $0x10] sm:$0xf]
  %v14 = vld [vmem:[%s0 + $0x14] sm:$0xf]
  %v15 = vld [vmem:[%s0 + $0x18] sm:$0xf]
  %v16 = vld [vmem:[%s0 + $0x1c] sm:$0xf]
  %v17 = vld [vmem:[%s0 + $0x20] sm:$0xf]
  %v18 = vld [vmem:[%s0 + $0x24] sm:$0xf]
  %v19 = vld [vmem:[%s0 + $0x28] sm:$0xf]
  %v20 = vld [vmem:[%s0 + $0x2c] sm:$0xf]
  %v21 = vld [vmem:[%s0 + $0x30] sm:$0xf]
  %v22 = vld [vmem:[%s0 + $0x34] sm:$0xf]
  %v23 = vld [vmem:[%s0 + $0x38] sm:$0xf]
  %v24 = vld [vmem:[%s0 + $0x3c] sm:$0xf]
  %v25 = vld [vmem:[%s0 + $0x40] sm:$0xf]
  %v26 = vld [vmem:[%s0 + $0x44] sm:$0xf]
  %v27 = vld [vmem:[%s0 + $0x48] sm:$0xf]
  %v28 = vld [vmem:[%s0 + $0x4c] sm:$0xf]
  %v29 = vld [vmem:[%s0 + $0x50] sm:$0xf]
  %v30 = vld [vmem:[%s0 + $0x54] sm:$0xf]
  %v31 = vld [vmem:[%s0 + $0x58] sm:$0xf]
  %v32 = vld [vmem:[%s0 + $0x5c] sm:$0xf]
  %v33 = vld [vmem:[%s0 + $0x60] sm:$0xf]
  %v34 = vld [vmem:[%s0 + $0x64] sm:$0xf]
  %v35 = vld [vmem:[%s0 + $0x68] sm:$0xf]
  %v36 = vld [vmem:[%s0 + $0x6c] sm:$0xf]
  %v37 = vld [vmem:[%s0 + $0x70] sm:$0xf]
  %v38 = vld [vmem:[%s0 + $0x74] sm:$0xf]
  %v39 = vld [vmem:[%s0 + $0x78] sm:$0xf]
  %v40 = vld [vmem:[%s0 + $0x7c] sm:$0xf]
  %v41 = vld [vmem:[%s0 + $0x80] sm:$0xf]
  %v42 = vld [vmem:[%s0 + $0x84] sm:$0xf]
  %v43 = vld [vmem:[%s0 + $0x88] sm:$0xf]
  %v44 = vld [vmem:[%s0 + $0x8c] sm:$0xf]
  %v45 = vld [vmem:[%s0 + $0x90] sm:$0xf]
  %v46 = vld [vmem:[%s0 + $0x94] sm:$0xf]
  %v47 = vld [vmem:[%s0 + $0x98] sm:$0xf]
  %v48 = vld [vmem:[%s0 + $0x9c] sm:$0xf]
  %v49 = vld [vmem:[%s0 + $0xa0] sm:$0xf]
  %v50 = vld [vmem:[%s0 + $0xa4] sm:$0xf]
  %v51 = vld [vmem:[%s0 + $0xa8] sm:$0xf]
  %v52 = vld [vmem:[%s0 + $0xac] sm:$0xf]
  %v53 = vld [vmem:[%s0 + $0xb0] sm:$0xf]
  %v54 = vld [vmem:[%s0 + $0xb4] sm:$0xf]
  %v55 = vld [vmem:[%s0 + $0xb8] sm:$0xf]
  %v56 = vld [vmem:[%s0 + $0xbc] sm:$0xf]
  %vm57 = vcmask 519168
  %v60 = vsel %vm57, %v9, 4286644096
  %v62 = vunpack.i.l.bf16 %v60
  %v63 = vunpack.i.h.bf16 %v60
  %v64 = vmax.f32 %v62, %v63
  %v65 = vrot.slane %v64, 4
  %v66 = vmax.f32 %v64, %v65
  %v67 = vrot.slane %v66, 2
  %v68 = vmax.f32 %v66, %v67
  %v69 = vrot.slane %v68, 1
  %v70 = vmax.f32 %v68, %v69
  %v71 = vpack.i.bf16 %v70, %v70
  %v73 = vsel %vm57, %v10, 4286644096
  %v75 = vunpack.i.l.bf16 %v73
  %v76 = vunpack.i.h.bf16 %v73
  %v77 = vmax.f32 %v75, %v76
  %v78 = vrot.slane %v77, 4
  %v79 = vmax.f32 %v77, %v78
  %v80 = vrot.slane %v79, 2
  %v81 = vmax.f32 %v79, %v80
  %v82 = vrot.slane %v81, 1
  %v83 = vmax.f32 %v81, %v82
  %v84 = vpack.i.bf16 %v83, %v83
  %v86 = vsel %vm57, %v11, 4286644096
  %v88 = vunpack.i.l.bf16 %v86
  %v89 = vunpack.i.h.bf16 %v86
  %v90 = vmax.f32 %v88, %v89
  %v91 = vrot.slane %v90, 4
  %v92 = vmax.f32 %v90, %v91
  %v93 = vrot.slane %v92, 2
  %v94 = vmax.f32 %v92, %v93
  %v95 = vrot.slane %v94, 1
  %v96 = vmax.f32 %v94, %v95
  %v97 = vpack.i.bf16 %v96, %v96
  %v99 = vsel %vm57, %v12, 4286644096
  %v101 = vunpack.i.l.bf16 %v99
  %v102 = vunpack.i.h.bf16 %v99
  %v103 = vmax.f32 %v101, %v102
  %v104 = vrot.slane %v103, 4
  %v105 = vmax.f32 %v103, %v104
  %v106 = vrot.slane %v105, 2
  %v107 = vmax.f32 %v105, %v106
  %v108 = vrot.slane %v107, 1
  %v109 = vmax.f32 %v107, %v108
  %v110 = vpack.i.bf16 %v109, %v109
  %v112 = vsel %vm57, %v13, 4286644096
  %v114 = vunpack.i.l.bf16 %v112
  %v115 = vunpack.i.h.bf16 %v112
  %v116 = vmax.f32 %v114, %v115
  %v117 = vrot.slane %v116, 4
  %v118 = vmax.f32 %v116, %v117
  %v119 = vrot.slane %v118, 2
  %v120 = vmax.f32 %v118, %v119
  %v121 = vrot.slane %v120, 1
  %v122 = vmax.f32 %v120, %v121
  %v123 = vpack.i.bf16 %v122, %v122
  %v125 = vsel %vm57, %v14, 4286644096
  %v127 = vunpack.i.l.bf16 %v125
  %v128 = vunpack.i.h.bf16 %v125
  %v129 = vmax.f32 %v127, %v128
  %v130 = vrot.slane %v129, 4
  %v131 = vmax.f32 %v129, %v130
  %v132 = vrot.slane %v131, 2
  %v133 = vmax.f32 %v131, %v132
  %v134 = vrot.slane %v133, 1
  %v135 = vmax.f32 %v133, %v134
  %v136 = vpack.i.bf16 %v135, %v135
  %v138 = vsel %vm57, %v15, 4286644096
  %v140 = vunpack.i.l.bf16 %v138
  %v141 = vunpack.i.h.bf16 %v138
  %v142 = vmax.f32 %v140, %v141
  %v143 = vrot.slane %v142, 4
  %v144 = vmax.f32 %v142, %v143
  %v145 = vrot.slane %v144, 2
  %v146 = vmax.f32 %v144, %v145
  %v147 = vrot.slane %v146, 1
  %v148 = vmax.f32 %v146, %v147
  %v149 = vpack.i.bf16 %v148, %v148
  %v151 = vsel %vm57, %v16, 4286644096
  %v153 = vunpack.i.l.bf16 %v151
  %v154 = vunpack.i.h.bf16 %v151
  %v155 = vmax.f32 %v153, %v154
  %v156 = vrot.slane %v155, 4
  %v157 = vmax.f32 %v155, %v156
  %v158 = vrot.slane %v157, 2
  %v159 = vmax.f32 %v157, %v158
  %v160 = vrot.slane %v159, 1
  %v161 = vmax.f32 %v159, %v160
  %v162 = vpack.i.bf16 %v161, %v161
  %v164 = vsel %vm57, %v17, 4286644096
  %v166 = vunpack.i.l.bf16 %v164
  %v167 = vunpack.i.h.bf16 %v164
  %v168 = vmax.f32 %v166, %v167
  %v169 = vrot.slane %v168, 4
  %v170 = vmax.f32 %v168, %v169
  %v171 = vrot.slane %v170, 2
  %v172 = vmax.f32 %v170, %v171
  %v173 = vrot.slane %v172, 1
  %v174 = vmax.f32 %v172, %v173
  %v175 = vpack.i.bf16 %v174, %v174
  %v177 = vsel %vm57, %v18, 4286644096
  %v179 = vunpack.i.l.bf16 %v177
  %v180 = vunpack.i.h.bf16 %v177
  %v181 = vmax.f32 %v179, %v180
  %v182 = vrot.slane %v181, 4
  %v183 = vmax.f32 %v181, %v182
  %v184 = vrot.slane %v183, 2
  %v185 = vmax.f32 %v183, %v184
  %v186 = vrot.slane %v185, 1
  %v187 = vmax.f32 %v185, %v186
  %v188 = vpack.i.bf16 %v187, %v187
  %v190 = vsel %vm57, %v19, 4286644096
  %v192 = vunpack.i.l.bf16 %v190
  %v193 = vunpack.i.h.bf16 %v190
  %v194 = vmax.f32 %v192, %v193
  %v195 = vrot.slane %v194, 4
  %v196 = vmax.f32 %v194, %v195
  %v197 = vrot.slane %v196, 2
  %v198 = vmax.f32 %v196, %v197
  %v199 = vrot.slane %v198, 1
  %v200 = vmax.f32 %v198, %v199
  %v201 = vpack.i.bf16 %v200, %v200
  %v203 = vsel %vm57, %v20, 4286644096
  %v205 = vunpack.i.l.bf16 %v203
  %v206 = vunpack.i.h.bf16 %v203
  %v207 = vmax.f32 %v205, %v206
  %v208 = vrot.slane %v207, 4
  %v209 = vmax.f32 %v207, %v208
  %v210 = vrot.slane %v209, 2
  %v211 = vmax.f32 %v209, %v210
  %v212 = vrot.slane %v211, 1
  %v213 = vmax.f32 %v211, %v212
  %v214 = vpack.i.bf16 %v213, %v213
  %v216 = vsel %vm57, %v21, 4286644096
  %v218 = vunpack.i.l.bf16 %v216
  %v219 = vunpack.i.h.bf16 %v216
  %v220 = vmax.f32 %v218, %v219
  %v221 = vrot.slane %v220, 4
  %v222 = vmax.f32 %v220, %v221
  %v223 = vrot.slane %v222, 2
  %v224 = vmax.f32 %v222, %v223
  %v225 = vrot.slane %v224, 1
  %v226 = vmax.f32 %v224, %v225
  %v227 = vpack.i.bf16 %v226, %v226
  %v229 = vsel %vm57, %v22, 4286644096
  %v231 = vunpack.i.l.bf16 %v229
  %v232 = vunpack.i.h.bf16 %v229
  %v233 = vmax.f32 %v231, %v232
  %v234 = vrot.slane %v233, 4
  %v235 = vmax.f32 %v233, %v234
  %v236 = vrot.slane %v235, 2
  %v237 = vmax.f32 %v235, %v236
  %v238 = vrot.slane %v237, 1
  %v239 = vmax.f32 %v237, %v238
  %v240 = vpack.i.bf16 %v239, %v239
  %v242 = vsel %vm57, %v23, 4286644096
  %v244 = vunpack.i.l.bf16 %v242
  %v245 = vunpack.i.h.bf16 %v242
  %v246 = vmax.f32 %v244, %v245
  %v247 = vrot.slane %v246, 4
  %v248 = vmax.f32 %v246, %v247
  %v249 = vrot.slane %v248, 2
  %v250 = vmax.f32 %v248, %v249
  %v251 = vrot.slane %v250, 1
  %v252 = vmax.f32 %v250, %v251
  %v253 = vpack.i.bf16 %v252, %v252
  %v255 = vsel %vm57, %v24, 4286644096
  %v257 = vunpack.i.l.bf16 %v255
  %v258 = vunpack.i.h.bf16 %v255
  %v259 = vmax.f32 %v257, %v258
  %v260 = vrot.slane %v259, 4
  %v261 = vmax.f32 %v259, %v260
  %v262 = vrot.slane %v261, 2
  %v263 = vmax.f32 %v261, %v262
  %v264 = vrot.slane %v263, 1
  %v265 = vmax.f32 %v263, %v264
  %v266 = vpack.i.bf16 %v265, %v265
  %v268 = vsel %vm57, %v25, 4286644096
  %v270 = vunpack.i.l.bf16 %v268
  %v271 = vunpack.i.h.bf16 %v268
  %v272 = vmax.f32 %v270, %v271
  %v273 = vrot.slane %v272, 4
  %v274 = vmax.f32 %v272, %v273
  %v275 = vrot.slane %v274, 2
  %v276 = vmax.f32 %v274, %v275
  %v277 = vrot.slane %v276, 1
  %v278 = vmax.f32 %v276, %v277
  %v279 = vpack.i.bf16 %v278, %v278
  %v281 = vsel %vm57, %v26, 4286644096
  %v283 = vunpack.i.l.bf16 %v281
  %v284 = vunpack.i.h.bf16 %v281
  %v285 = vmax.f32 %v283, %v284
  %v286 = vrot.slane %v285, 4
  %v287 = vmax.f32 %v285, %v286
  %v288 = vrot.slane %v287, 2
  %v289 = vmax.f32 %v287, %v288
  %v290 = vrot.slane %v289, 1
  %v291 = vmax.f32 %v289, %v290
  %v292 = vpack.i.bf16 %v291, %v291
  %v294 = vsel %vm57, %v27, 4286644096
  %v296 = vunpack.i.l.bf16 %v294
  %v297 = vunpack.i.h.bf16 %v294
  %v298 = vmax.f32 %v296, %v297
  %v299 = vrot.slane %v298, 4
  %v300 = vmax.f32 %v298, %v299
  %v301 = vrot.slane %v300, 2
  %v302 = vmax.f32 %v300, %v301
  %v303 = vrot.slane %v302, 1
  %v304 = vmax.f32 %v302, %v303
  %v305 = vpack.i.bf16 %v304, %v304
  %v307 = vsel %vm57, %v28, 4286644096
  %v309 = vunpack.i.l.bf16 %v307
  %v310 = vunpack.i.h.bf16 %v307
  %v311 = vmax.f32 %v309, %v310
  %v312 = vrot.slane %v311, 4
  %v313 = vmax.f32 %v311, %v312
  %v314 = vrot.slane %v313, 2
  %v315 = vmax.f32 %v313, %v314
  %v316 = vrot.slane %v315, 1
  %v317 = vmax.f32 %v315, %v316
  %v318 = vpack.i.bf16 %v317, %v317
  %v320 = vsel %vm57, %v29, 4286644096
  %v322 = vunpack.i.l.bf16 %v320
  %v323 = vunpack.i.h.bf16 %v320
  %v324 = vmax.f32 %v322, %v323
  %v325 = vrot.slane %v324, 4
  %v326 = vmax.f32 %v324, %v325
  %v327 = vrot.slane %v326, 2
  %v328 = vmax.f32 %v326, %v327
  %v329 = vrot.slane %v328, 1
  %v330 = vmax.f32 %v328, %v329
  %v331 = vpack.i.bf16 %v330, %v330
  %v333 = vsel %vm57, %v30, 4286644096
  %v335 = vunpack.i.l.bf16 %v333
  %v336 = vunpack.i.h.bf16 %v333
  %v337 = vmax.f32 %v335, %v336
  %v338 = vrot.slane %v337, 4
  %v339 = vmax.f32 %v337, %v338
  %v340 = vrot.slane %v339, 2
  %v341 = vmax.f32 %v339, %v340
  %v342 = vrot.slane %v341, 1
  %v343 = vmax.f32 %v341, %v342
  %v344 = vpack.i.bf16 %v343, %v343
  %v346 = vsel %vm57, %v31, 4286644096
  %v348 = vunpack.i.l.bf16 %v346
  %v349 = vunpack.i.h.bf16 %v346
  %v350 = vmax.f32 %v348, %v349
  %v351 = vrot.slane %v350, 4
  %v352 = vmax.f32 %v350, %v351
  %v353 = vrot.slane %v352, 2
  %v354 = vmax.f32 %v352, %v353
  %v355 = vrot.slane %v354, 1
  %v356 = vmax.f32 %v354, %v355
  %v357 = vpack.i.bf16 %v356, %v356
  %v359 = vsel %vm57, %v32, 4286644096
  %v361 = vunpack.i.l.bf16 %v359
  %v362 = vunpack.i.h.bf16 %v359
  %v363 = vmax.f32 %v361, %v362
  %v364 = vrot.slane %v363, 4
  %v365 = vmax.f32 %v363, %v364
  %v366 = vrot.slane %v365, 2
  %v367 = vmax.f32 %v365, %v366
  %v368 = vrot.slane %v367, 1
  %v369 = vmax.f32 %v367, %v368
  %v370 = vpack.i.bf16 %v369, %v369
  %v372 = vsel %vm57, %v33, 4286644096
  %v374 = vunpack.i.l.bf16 %v372
  %v375 = vunpack.i.h.bf16 %v372
  %v376 = vmax.f32 %v374, %v375
  %v377 = vrot.slane %v376, 4
  %v378 = vmax.f32 %v376, %v377
  %v379 = vrot.slane %v378, 2
  %v380 = vmax.f32 %v378, %v379
  %v381 = vrot.slane %v380, 1
  %v382 = vmax.f32 %v380, %v381
  %v383 = vpack.i.bf16 %v382, %v382
  %v385 = vsel %vm57, %v34, 4286644096
  %v387 = vunpack.i.l.bf16 %v385
  %v388 = vunpack.i.h.bf16 %v385
  %v389 = vmax.f32 %v387, %v388
  %v390 = vrot.slane %v389, 4
  %v391 = vmax.f32 %v389, %v390
  %v392 = vrot.slane %v391, 2
  %v393 = vmax.f32 %v391, %v392
  %v394 = vrot.slane %v393, 1
  %v395 = vmax.f32 %v393, %v394
  %v396 = vpack.i.bf16 %v395, %v395
  %v398 = vsel %vm57, %v35, 4286644096
  %v400 = vunpack.i.l.bf16 %v398
  %v401 = vunpack.i.h.bf16 %v398
  %v402 = vmax.f32 %v400, %v401
  %v403 = vrot.slane %v402, 4
  %v404 = vmax.f32 %v402, %v403
  %v405 = vrot.slane %v404, 2
  %v406 = vmax.f32 %v404, %v405
  %v407 = vrot.slane %v406, 1
  %v408 = vmax.f32 %v406, %v407
  %v409 = vpack.i.bf16 %v408, %v408
  %v411 = vsel %vm57, %v36, 4286644096
  %v413 = vunpack.i.l.bf16 %v411
  %v414 = vunpack.i.h.bf16 %v411
  %v415 = vmax.f32 %v413, %v414
  %v416 = vrot.slane %v415, 4
  %v417 = vmax.f32 %v415, %v416
  %v418 = vrot.slane %v417, 2
  %v419 = vmax.f32 %v417, %v418
  %v420 = vrot.slane %v419, 1
  %v421 = vmax.f32 %v419, %v420
  %v422 = vpack.i.bf16 %v421, %v421
  %v424 = vsel %vm57, %v37, 4286644096
  %v426 = vunpack.i.l.bf16 %v424
  %v427 = vunpack.i.h.bf16 %v424
  %v428 = vmax.f32 %v426, %v427
  %v429 = vrot.slane %v428, 4
  %v430 = vmax.f32 %v428, %v429
  %v431 = vrot.slane %v430, 2
  %v432 = vmax.f32 %v430, %v431
  %v433 = vrot.slane %v432, 1
  %v434 = vmax.f32 %v432, %v433
  %v435 = vpack.i.bf16 %v434, %v434
  %v437 = vsel %vm57, %v38, 4286644096
  %v439 = vunpack.i.l.bf16 %v437
  %v440 = vunpack.i.h.bf16 %v437
  %v441 = vmax.f32 %v439, %v440
  %v442 = vrot.slane %v441, 4
  %v443 = vmax.f32 %v441, %v442
  %v444 = vrot.slane %v443, 2
  %v445 = vmax.f32 %v443, %v444
  %v446 = vrot.slane %v445, 1
  %v447 = vmax.f32 %v445, %v446
  %v448 = vpack.i.bf16 %v447, %v447
  %v450 = vsel %vm57, %v39, 4286644096
  %v452 = vunpack.i.l.bf16 %v450
  %v453 = vunpack.i.h.bf16 %v450
  %v454 = vmax.f32 %v452, %v453
  %v455 = vrot.slane %v454, 4
  %v456 = vmax.f32 %v454, %v455
  %v457 = vrot.slane %v456, 2
  %v458 = vmax.f32 %v456, %v457
  %v459 = vrot.slane %v458, 1
  %v460 = vmax.f32 %v458, %v459
  %v461 = vpack.i.bf16 %v460, %v460
  %v463 = vsel %vm57, %v40, 4286644096
  %v465 = vunpack.i.l.bf16 %v463
  %v466 = vunpack.i.h.bf16 %v463
  %v467 = vmax.f32 %v465, %v466
  %v468 = vrot.slane %v467, 4
  %v469 = vmax.f32 %v467, %v468
  %v470 = vrot.slane %v469, 2
  %v471 = vmax.f32 %v469, %v470
  %v472 = vrot.slane %v471, 1
  %v473 = vmax.f32 %v471, %v472
  %v474 = vpack.i.bf16 %v473, %v473
  %v476 = vsel %vm57, %v41, 4286644096
  %v478 = vunpack.i.l.bf16 %v476
  %v479 = vunpack.i.h.bf16 %v476
  %v480 = vmax.f32 %v478, %v479
  %v481 = vrot.slane %v480, 4
  %v482 = vmax.f32 %v480, %v481
  %v483 = vrot.slane %v482, 2
  %v484 = vmax.f32 %v482, %v483
  %v485 = vrot.slane %v484, 1
  %v486 = vmax.f32 %v484, %v485
  %v487 = vpack.i.bf16 %v486, %v486
  %v489 = vsel %vm57, %v42, 4286644096
  %v491 = vunpack.i.l.bf16 %v489
  %v492 = vunpack.i.h.bf16 %v489
  %v493 = vmax.f32 %v491, %v492
  %v494 = vrot.slane %v493, 4
  %v495 = vmax.f32 %v493, %v494
  %v496 = vrot.slane %v495, 2
  %v497 = vmax.f32 %v495, %v496
  %v498 = vrot.slane %v497, 1
  %v499 = vmax.f32 %v497, %v498
  %v500 = vpack.i.bf16 %v499, %v499
  %v502 = vsel %vm57, %v43, 4286644096
  %v504 = vunpack.i.l.bf16 %v502
  %v505 = vunpack.i.h.bf16 %v502
  %v506 = vmax.f32 %v504, %v505
  %v507 = vrot.slane %v506, 4
  %v508 = vmax.f32 %v506, %v507
  %v509 = vrot.slane %v508, 2
  %v510 = vmax.f32 %v508, %v509
  %v511 = vrot.slane %v510, 1
  %v512 = vmax.f32 %v510, %v511
  %v513 = vpack.i.bf16 %v512, %v512
  %v515 = vsel %vm57, %v44, 4286644096
  %v517 = vunpack.i.l.bf16 %v515
  %v518 = vunpack.i.h.bf16 %v515
  %v519 = vmax.f32 %v517, %v518
  %v520 = vrot.slane %v519, 4
  %v521 = vmax.f32 %v519, %v520
  %v522 = vrot.slane %v521, 2
  %v523 = vmax.f32 %v521, %v522
  %v524 = vrot.slane %v523, 1
  %v525 = vmax.f32 %v523, %v524
  %v526 = vpack.i.bf16 %v525, %v525
  %v528 = vsel %vm57, %v45, 4286644096
  %v530 = vunpack.i.l.bf16 %v528
  %v531 = vunpack.i.h.bf16 %v528
  %v532 = vmax.f32 %v530, %v531
  %v533 = vrot.slane %v532, 4
  %v534 = vmax.f32 %v532, %v533
  %v535 = vrot.slane %v534, 2
  %v536 = vmax.f32 %v534, %v535
  %v537 = vrot.slane %v536, 1
  %v538 = vmax.f32 %v536, %v537
  %v539 = vpack.i.bf16 %v538, %v538
  %v541 = vsel %vm57, %v46, 4286644096
  %v543 = vunpack.i.l.bf16 %v541
  %v544 = vunpack.i.h.bf16 %v541
  %v545 = vmax.f32 %v543, %v544
  %v546 = vrot.slane %v545, 4
  %v547 = vmax.f32 %v545, %v546
  %v548 = vrot.slane %v547, 2
  %v549 = vmax.f32 %v547, %v548
  %v550 = vrot.slane %v549, 1
  %v551 = vmax.f32 %v549, %v550
  %v552 = vpack.i.bf16 %v551, %v551
  %v554 = vsel %vm57, %v47, 4286644096
  %v556 = vunpack.i.l.bf16 %v554
  %v557 = vunpack.i.h.bf16 %v554
  %v558 = vmax.f32 %v556, %v557
  %v559 = vrot.slane %v558, 4
  %v560 = vmax.f32 %v558, %v559
  %v561 = vrot.slane %v560, 2
  %v562 = vmax.f32 %v560, %v561
  %v563 = vrot.slane %v562, 1
  %v564 = vmax.f32 %v562, %v563
  %v565 = vpack.i.bf16 %v564, %v564
  %v567 = vsel %vm57, %v48, 4286644096
  %v569 = vunpack.i.l.bf16 %v567
  %v570 = vunpack.i.h.bf16 %v567
  %v571 = vmax.f32 %v569, %v570
  %v572 = vrot.slane %v571, 4
  %v573 = vmax.f32 %v571, %v572
  %v574 = vrot.slane %v573, 2
  %v575 = vmax.f32 %v573, %v574
  %v576 = vrot.slane %v575, 1
  %v577 = vmax.f32 %v575, %v576
  %v578 = vpack.i.bf16 %v577, %v577
  %v580 = vsel %vm57, %v49, 4286644096
  %v582 = vunpack.i.l.bf16 %v580
  %v583 = vunpack.i.h.bf16 %v580
  %v584 = vmax.f32 %v582, %v583
  %v585 = vrot.slane %v584, 4
  %v586 = vmax.f32 %v584, %v585
  %v587 = vrot.slane %v586, 2
  %v588 = vmax.f32 %v586, %v587
  %v589 = vrot.slane %v588, 1
  %v590 = vmax.f32 %v588, %v589
  %v591 = vpack.i.bf16 %v590, %v590
  %v593 = vsel %vm57, %v50, 4286644096
  %v595 = vunpack.i.l.bf16 %v593
  %v596 = vunpack.i.h.bf16 %v593
  %v597 = vmax.f32 %v595, %v596
  %v598 = vrot.slane %v597, 4
  %v599 = vmax.f32 %v597, %v598
  %v600 = vrot.slane %v599, 2
  %v601 = vmax.f32 %v599, %v600
  %v602 = vrot.slane %v601, 1
  %v603 = vmax.f32 %v601, %v602
  %v604 = vpack.i.bf16 %v603, %v603
  %v606 = vsel %vm57, %v51, 4286644096
  %v608 = vunpack.i.l.bf16 %v606
  %v609 = vunpack.i.h.bf16 %v606
  %v610 = vmax.f32 %v608, %v609
  %v611 = vrot.slane %v610, 4
  %v612 = vmax.f32 %v610, %v611
  %v613 = vrot.slane %v612, 2
  %v614 = vmax.f32 %v612, %v613
  %v615 = vrot.slane %v614, 1
  %v616 = vmax.f32 %v614, %v615
  %v617 = vpack.i.bf16 %v616, %v616
  %v619 = vsel %vm57, %v52, 4286644096
  %v621 = vunpack.i.l.bf16 %v619
  %v622 = vunpack.i.h.bf16 %v619
  %v623 = vmax.f32 %v621, %v622
  %v624 = vrot.slane %v623, 4
  %v625 = vmax.f32 %v623, %v624
  %v626 = vrot.slane %v625, 2
  %v627 = vmax.f32 %v625, %v626
  %v628 = vrot.slane %v627, 1
  %v629 = vmax.f32 %v627, %v628
  %v630 = vpack.i.bf16 %v629, %v629
  %v632 = vsel %vm57, %v53, 4286644096
  %v634 = vunpack.i.l.bf16 %v632
  %v635 = vunpack.i.h.bf16 %v632
  %v636 = vmax.f32 %v634, %v635
  %v637 = vrot.slane %v636, 4
  %v638 = vmax.f32 %v636, %v637
  %v639 = vrot.slane %v638, 2
  %v640 = vmax.f32 %v638, %v639
  %v641 = vrot.slane %v640, 1
  %v642 = vmax.f32 %v640, %v641
  %v643 = vpack.i.bf16 %v642, %v642
  %v645 = vsel %vm57, %v54, 4286644096
  %v647 = vunpack.i.l.bf16 %v645
  %v648 = vunpack.i.h.bf16 %v645
  %v649 = vmax.f32 %v647, %v648
  %v650 = vrot.slane %v649, 4
  %v651 = vmax.f32 %v649, %v650
  %v652 = vrot.slane %v651, 2
  %v653 = vmax.f32 %v651, %v652
  %v654 = vrot.slane %v653, 1
  %v655 = vmax.f32 %v653, %v654
  %v656 = vpack.i.bf16 %v655, %v655
  %v658 = vsel %vm57, %v55, 4286644096
  %v660 = vunpack.i.l.bf16 %v658
  %v661 = vunpack.i.h.bf16 %v658
  %v662 = vmax.f32 %v660, %v661
  %v663 = vrot.slane %v662, 4
  %v664 = vmax.f32 %v662, %v663
  %v665 = vrot.slane %v664, 2
  %v666 = vmax.f32 %v664, %v665
  %v667 = vrot.slane %v666, 1
  %v668 = vmax.f32 %v666, %v667
  %v669 = vpack.i.bf16 %v668, %v668
  %v671 = vsel %vm57, %v56, 4286644096
  %v673 = vunpack.i.l.bf16 %v671
  %v674 = vunpack.i.h.bf16 %v671
  %v675 = vmax.f32 %v673, %v674
  %v676 = vrot.slane %v675, 4
  %v677 = vmax.f32 %v675, %v676
  %v678 = vrot.slane %v677, 2
  %v679 = vmax.f32 %v677, %v678
  %v680 = vrot.slane %v679, 1
  %v681 = vmax.f32 %v679, %v680
  %v682 = vpack.i.bf16 %v681, %v681
  %v731 = vunpack.c.l.b16 %v71
  %v732 = vunpack.c.l.b16 %v84
  %v733 = vunpack.c.l.b16 %v97
  %v734 = vunpack.c.l.b16 %v110
  %v735 = vunpack.c.l.b16 %v123
  %v736 = vunpack.c.l.b16 %v136
  %v737 = vunpack.c.l.b16 %v149
  %v738 = vunpack.c.l.b16 %v162
  %v739 = vunpack.c.l.b16 %v175
  %v740 = vunpack.c.l.b16 %v188
  %v741 = vunpack.c.l.b16 %v201
  %v742 = vunpack.c.l.b16 %v214
  %v743 = vunpack.c.l.b16 %v227
  %v744 = vunpack.c.l.b16 %v240
  %v745 = vunpack.c.l.b16 %v253
  %v746 = vunpack.c.l.b16 %v266
  %v747 = vunpack.c.l.b16 %v279
  %v748 = vunpack.c.l.b16 %v292
  %v749 = vunpack.c.l.b16 %v305
  %v750 = vunpack.c.l.b16 %v318
  %v751 = vunpack.c.l.b16 %v331
  %v752 = vunpack.c.l.b16 %v344
  %v753 = vunpack.c.l.b16 %v357
  %v754 = vunpack.c.l.b16 %v370
  %v755 = vunpack.c.l.b16 %v383
  %v756 = vunpack.c.l.b16 %v396
  %v757 = vunpack.c.l.b16 %v409
  %v758 = vunpack.c.l.b16 %v422
  %v759 = vunpack.c.l.b16 %v435
  %v760 = vunpack.c.l.b16 %v448
  %v761 = vunpack.c.l.b16 %v461
  %v762 = vunpack.c.l.b16 %v474
  %v763 = vunpack.c.l.b16 %v487
  %v764 = vunpack.c.l.b16 %v500
  %v765 = vunpack.c.l.b16 %v513
  %v766 = vunpack.c.l.b16 %v526
  %v767 = vunpack.c.l.b16 %v539
  %v768 = vunpack.c.l.b16 %v552
  %v769 = vunpack.c.l.b16 %v565
  %v770 = vunpack.c.l.b16 %v578
  %v771 = vunpack.c.l.b16 %v591
  %v772 = vunpack.c.l.b16 %v604
  %v773 = vunpack.c.l.b16 %v617
  %v774 = vunpack.c.l.b16 %v630
  %v775 = vunpack.c.l.b16 %v643
  %v776 = vunpack.c.l.b16 %v656
  %v777 = vunpack.c.l.b16 %v669
  %v778 = vunpack.c.l.b16 %v682
  %v779 = vpack.c.b16 %v731, %v731
  %v780 = vpack.c.b16 %v732, %v732
  %v781 = vpack.c.b16 %v733, %v733
  %v782 = vpack.c.b16 %v734, %v734
  %v783 = vpack.c.b16 %v735, %v735
  %v784 = vpack.c.b16 %v736, %v736
  %v785 = vpack.c.b16 %v737, %v737
  %v786 = vpack.c.b16 %v738, %v738
  %v787 = vpack.c.b16 %v739, %v739
  %v788 = vpack.c.b16 %v740, %v740
  %v789 = vpack.c.b16 %v741, %v741
  %v790 = vpack.c.b16 %v742, %v742
  %v791 = vpack.c.b16 %v743, %v743
  %v792 = vpack.c.b16 %v744, %v744
  %v793 = vpack.c.b16 %v745, %v745
  %v794 = vpack.c.b16 %v746, %v746
  %v795 = vpack.c.b16 %v747, %v747
  %v796 = vpack.c.b16 %v748, %v748
  %v797 = vpack.c.b16 %v749, %v749
  %v798 = vpack.c.b16 %v750, %v750
  %v799 = vpack.c.b16 %v751, %v751
  %v800 = vpack.c.b16 %v752, %v752
  %v801 = vpack.c.b16 %v753, %v753
  %v802 = vpack.c.b16 %v754, %v754
  %v803 = vpack.c.b16 %v755, %v755
  %v804 = vpack.c.b16 %v756, %v756
  %v805 = vpack.c.b16 %v757, %v757
  %v806 = vpack.c.b16 %v758, %v758
  %v807 = vpack.c.b16 %v759, %v759
  %v808 = vpack.c.b16 %v760, %v760
  %v809 = vpack.c.b16 %v761, %v761
  %v810 = vpack.c.b16 %v762, %v762
  %v811 = vpack.c.b16 %v763, %v763
  %v812 = vpack.c.b16 %v764, %v764
  %v813 = vpack.c.b16 %v765, %v765
  %v814 = vpack.c.b16 %v766, %v766
  %v815 = vpack.c.b16 %v767, %v767
  %v816 = vpack.c.b16 %v768, %v768
  %v817 = vpack.c.b16 %v769, %v769
  %v818 = vpack.c.b16 %v770, %v770
  %v819 = vpack.c.b16 %v771, %v771
  %v820 = vpack.c.b16 %v772, %v772
  %v821 = vpack.c.b16 %v773, %v773
  %v822 = vpack.c.b16 %v774, %v774
  %v823 = vpack.c.b16 %v775, %v775
  %v824 = vpack.c.b16 %v776, %v776
  %v825 = vpack.c.b16 %v777, %v777
  %v826 = vpack.c.b16 %v778, %v778
  %v827 = vunpack.c.l.b16 %v779
  %v828 = vunpack.c.l.b16 %v780
  %v829 = vunpack.c.l.b16 %v781
  %v830 = vunpack.c.l.b16 %v782
  %v831 = vunpack.c.l.b16 %v783
  %v832 = vunpack.c.l.b16 %v784
  %v833 = vunpack.c.l.b16 %v785
  %v834 = vunpack.c.l.b16 %v786
  %v835 = vunpack.c.l.b16 %v787
  %v836 = vunpack.c.l.b16 %v788
  %v837 = vunpack.c.l.b16 %v789
  %v838 = vunpack.c.l.b16 %v790
  %v839 = vunpack.c.l.b16 %v791
  %v840 = vunpack.c.l.b16 %v792
  %v841 = vunpack.c.l.b16 %v793
  %v842 = vunpack.c.l.b16 %v794
  %v843 = vunpack.c.l.b16 %v795
  %v844 = vunpack.c.l.b16 %v796
  %v845 = vunpack.c.l.b16 %v797
  %v846 = vunpack.c.l.b16 %v798
  %v847 = vunpack.c.l.b16 %v799
  %v848 = vunpack.c.l.b16 %v800
  %v849 = vunpack.c.l.b16 %v801
  %v850 = vunpack.c.l.b16 %v802
  %v851 = vunpack.c.l.b16 %v803
  %v852 = vunpack.c.l.b16 %v804
  %v853 = vunpack.c.l.b16 %v805
  %v854 = vunpack.c.l.b16 %v806
  %v855 = vunpack.c.l.b16 %v807
  %v856 = vunpack.c.l.b16 %v808
  %v857 = vunpack.c.l.b16 %v809
  %v858 = vunpack.c.l.b16 %v810
  %v859 = vunpack.c.l.b16 %v811
  %v860 = vunpack.c.l.b16 %v812
  %v861 = vunpack.c.l.b16 %v813
  %v862 = vunpack.c.l.b16 %v814
  %v863 = vunpack.c.l.b16 %v815
  %v864 = vunpack.c.l.b16 %v816
  %v865 = vunpack.c.l.b16 %v817
  %v866 = vunpack.c.l.b16 %v818
  %v867 = vunpack.c.l.b16 %v819
  %v868 = vunpack.c.l.b16 %v820
  %v869 = vunpack.c.l.b16 %v821
  %v870 = vunpack.c.l.b16 %v822
  %v871 = vunpack.c.l.b16 %v823
  %v872 = vunpack.c.l.b16 %v824
  %v873 = vunpack.c.l.b16 %v825
  %v874 = vunpack.c.l.b16 %v826
  %vm875 = vcmask 1041409
  %v876 = vsel %vm875, %v828, %v827
  %vm877 = vcmask 1042434
  %v878 = vsel %vm877, %v829, %v876
  %vm879 = vcmask 1043459
  %v880 = vsel %vm879, %v830, %v878
  %vm881 = vcmask 1044484
  %v882 = vsel %vm881, %v831, %v880
  %vm883 = vcmask 1045509
  %v884 = vsel %vm883, %v832, %v882
  %vm885 = vcmask 1046534
  %v886 = vsel %vm885, %v833, %v884
  %vm887 = vcmask 1047559
  %v888 = vsel %vm887, %v834, %v886
  %v889 = vsel %vm875, %v836, %v835
  %v890 = vsel %vm877, %v837, %v889
  %v891 = vsel %vm879, %v838, %v890
  %v892 = vsel %vm881, %v839, %v891
  %v893 = vsel %vm883, %v840, %v892
  %v894 = vsel %vm885, %v841, %v893
  %v895 = vsel %vm887, %v842, %v894
  %v896 = vsel %vm875, %v844, %v843
  %v897 = vsel %vm877, %v845, %v896
  %v898 = vsel %vm879, %v846, %v897
  %v899 = vsel %vm881, %v847, %v898
  %v900 = vsel %vm883, %v848, %v899
  %v901 = vsel %vm885, %v849, %v900
  %v902 = vsel %vm887, %v850, %v901
  %v903 = vsel %vm875, %v852, %v851
  %v904 = vsel %vm877, %v853, %v903
  %v905 = vsel %vm879, %v854, %v904
  %v906 = vsel %vm881, %v855, %v905
  %v907 = vsel %vm883, %v856, %v906
  %v908 = vsel %vm885, %v857, %v907
  %v909 = vsel %vm887, %v858, %v908
  %v910 = vsel %vm875, %v860, %v859
  %v911 = vsel %vm877, %v861, %v910
  %v912 = vsel %vm879, %v862, %v911
  %v913 = vsel %vm881, %v863, %v912
  %v914 = vsel %vm883, %v864, %v913
  %v915 = vsel %vm885, %v865, %v914
  %v916 = vsel %vm887, %v866, %v915
  %v917 = vsel %vm875, %v868, %v867
  %v918 = vsel %vm877, %v869, %v917
  %v919 = vsel %vm879, %v870, %v918
  %v920 = vsel %vm881, %v871, %v919
  %v921 = vsel %vm883, %v872, %v920
  %v922 = vsel %vm885, %v873, %v921
  %v923 = vsel %vm887, %v874, %v922
  %v924 = vpack.c.b16 %v888, %v888
  %v925 = vpack.c.b16 %v895, %v895
  %v926 = vpack.c.b16 %v902, %v902
  %v927 = vpack.c.b16 %v909, %v909
  %v928 = vpack.c.b16 %v916, %v916
  %v929 = vpack.c.b16 %v923, %v923
  %936 = vst.msk [vmem:[%s1] sm:$0xf] %vm57, %v924
  %937 = vst.msk [vmem:[%s1 + $0x4] sm:$0xf] %vm57, %v925
  %938 = vst.msk [vmem:[%s1 + $0x8] sm:$0xf] %vm57, %v926
  %939 = vst.msk [vmem:[%s1 + $0xc] sm:$0xf] %vm57, %v927
  %940 = vst.msk [vmem:[%s1 + $0x10] sm:$0xf] %vm57, %v928
  %941 = vst.msk [vmem:[%s1 + $0x14] sm:$0xf] %vm57, %v929
  // Predicated region
  $region6: #{mrcnn_forward.12} parent=0 // pred_check
    _
  $region7: #{mrcnn_forward.12} parent=0 // pred_check_branch
    %943 = sbr.rel (0) target = $region9
  $region8: #{mrcnn_forward.12} parent=0 // pred_region
    _
  $region9: #{mrcnn_forward.12} parent=0 // pred_fallthru
    _
  // Predicated region
  $region10: #{mrcnn_forward.12} parent=0 // pred_check
    _
  $region11: #{mrcnn_forward.12} parent=0 // pred_check_branch
    %945 = sbr.rel (0) target = $region13
  $region12: #{mrcnn_forward.12} parent=0 // pred_region
    _
  $region13: #{mrcnn_forward.12} parent=0 // pred_fallthru
    _

// kernel: mrcnn_forward.13
$region0: #{mrcnn_forward.13}
  #allocation0 [shape = 'u32[]', space=smem, size = 0x4, offset = 0x4, fixed_abs, tag = 'smem constant byte address 0x4 - core index']
  #allocation1 [shape = 'u32[144,128]{1,0:T(1,128)}', space=vmem, size = 0x12000, scoped, tag = 'internal scratch']
  %s0 = inlined_call_operand.vmem [shape: bf16[48,512], index: 0, kind: input, shape index: {}]
  %s1 = inlined_call_operand.vmem [shape: bf16[512,128], index: 1, kind: input, shape index: {}]
  %s2 = inlined_call_operand.vmem [shape: f32[1,128], index: 2, kind: input, shape index: {}]
  %s3 = inlined_call_operand.vmem [shape: f32[1,128], index: 3, kind: input, shape index: {}]
  %s4 = inlined_call_operand.vmem [shape: bf16[48,128], index: 4, kind: output, shape index: {}]
  %s5 = sld [smem:[#allocation0]]
  $region26: #{mrcnn_forward.13} parent=0
    _
  %s7 = ssub.s32 1, %s5
  %s8 = scalar_select 0, %s7, %s5
  // Predicated region
  $region2: #{mrcnn_forward.13} parent=0 // pred_check
    _
  $region3: #{mrcnn_forward.13} parent=0 // pred_check_branch
    %10 = sbr.rel (0) target = $region5
  $region4: #{mrcnn_forward.13} parent=0 // pred_region
    _
  $region5: #{mrcnn_forward.13} parent=0 // pred_fallthru
    _
  // Predicated region
  $region6: #{mrcnn_forward.13} parent=0 // pred_check
    _
  $region7: #{mrcnn_forward.13} parent=0 // pred_check_branch
    %12 = sbr.rel (0) target = $region9
  $region8: #{mrcnn_forward.13} parent=0 // pred_region
    _
  $region9: #{mrcnn_forward.13} parent=0 // pred_fallthru
    _
  // Predicated region
  $region10: #{mrcnn_forward.13} parent=0 // pred_check
    _
  $region11: #{mrcnn_forward.13} parent=0 // pred_check_branch
    %14 = sbr.rel (0) target = $region13
  $region12: #{mrcnn_forward.13} parent=0 // pred_region
    _
  $region13: #{mrcnn_forward.13} parent=0 // pred_fallthru
    _
  // Predicated region
  $region14: #{mrcnn_forward.13} parent=0 // pred_check
    _
  $region15: #{mrcnn_forward.13} parent=0 // pred_check_branch
    %16 = sbr.rel (0) target = $region17
  $region16: #{mrcnn_forward.13} parent=0 // pred_region
    _
  $region17: #{mrcnn_forward.13} parent=0 // pred_fallthru
    _
  %v18 = vld [vmem:[%s0] sm:$0xff]
  %v19 = vld [vmem:[%s0 + $0x8] sm:$0xff]
  %v20 = vld [vmem:[%s0 + $0x10] sm:$0xff]
  %v21 = vld [vmem:[%s0 + $0x18] sm:$0xff]
  %v22 = vld [vmem:[%s0 + $0x20] sm:$0xff]
  %v23 = vld [vmem:[%s0 + $0x28] sm:$0xff]
  %v24 = vld [vmem:[%s0 + $0x30] sm:$0xff]
  %v25 = vld [vmem:[%s0 + $0x38] sm:$0xff]
  %v26 = vld [vmem:[%s0 + $0x40] sm:$0xff]
  %v27 = vld [vmem:[%s0 + $0x48] sm:$0xff]
  %v28 = vld [vmem:[%s0 + $0x50] sm:$0xff]
  %v29 = vld [vmem:[%s0 + $0x58] sm:$0xff]
  %v30 = vld [vmem:[%s1] sm:$0xf]
  %v31 = vld [vmem:[%s1 + $0x4] sm:$0xf]
  %v32 = vld [vmem:[%s1 + $0x8] sm:$0xf]
  %v33 = vld [vmem:[%s1 + $0xc] sm:$0xf]
  %v34 = vld [vmem:[%s1 + $0x10] sm:$0xf]
  %v35 = vld [vmem:[%s1 + $0x14] sm:$0xf]
  %v36 = vld [vmem:[%s1 + $0x18] sm:$0xf]
  %v37 = vld [vmem:[%s1 + $0x1c] sm:$0xf]
  %v38 = vld [vmem:[%s1 + $0x20] sm:$0xf]
  %v39 = vld [vmem:[%s1 + $0x24] sm:$0xf]
  %v40 = vld [vmem:[%s1 + $0x28] sm:$0xf]
  %v41 = vld [vmem:[%s1 + $0x2c] sm:$0xf]
  %v42 = vld [vmem:[%s1 + $0x30] sm:$0xf]
  %v43 = vld [vmem:[%s1 + $0x34] sm:$0xf]
  %v44 = vld [vmem:[%s1 + $0x38] sm:$0xf]
  %v45 = vld [vmem:[%s1 + $0x3c] sm:$0xf]
  %v46 = vld [vmem:[%s1 + $0x40] sm:$0xf]
  %v47 = vld [vmem:[%s1 + $0x44] sm:$0xf]
  %v48 = vld [vmem:[%s1 + $0x48] sm:$0xf]
  %v49 = vld [vmem:[%s1 + $0x4c] sm:$0xf]
  %v50 = vld [vmem:[%s1 + $0x50] sm:$0xf]
  %v51 = vld [vmem:[%s1 + $0x54] sm:$0xf]
  %v52 = vld [vmem:[%s1 + $0x58] sm:$0xf]
  %v53 = vld [vmem:[%s1 + $0x5c] sm:$0xf]
  %v54 = vld [vmem:[%s1 + $0x60] sm:$0xf]
  %v55 = vld [vmem:[%s1 + $0x64] sm:$0xf]
  %v56 = vld [vmem:[%s1 + $0x68] sm:$0xf]
  %v57 = vld [vmem:[%s1 + $0x6c] sm:$0xf]
  %v58 = vld [vmem:[%s1 + $0x70] sm:$0xf]
  %v59 = vld [vmem:[%s1 + $0x74] sm:$0xf]
  %v60 = vld [vmem:[%s1 + $0x78] sm:$0xf]
  %v61 = vld [vmem:[%s1 + $0x7c] sm:$0xf]
  %v62 = vld [vmem:[%s1 + $0x80] sm:$0xf]
  %v63 = vld [vmem:[%s1 + $0x84] sm:$0xf]
  %v64 = vld [vmem:[%s1 + $0x88] sm:$0xf]
  %v65 = vld [vmem:[%s1 + $0x8c] sm:$0xf]
  %v66 = vld [vmem:[%s1 + $0x90] sm:$0xf]
  %v67 = vld [vmem:[%s1 + $0x94] sm:$0xf]
  %v68 = vld [vmem:[%s1 + $0x98] sm:$0xf]
  %v69 = vld [vmem:[%s1 + $0x9c] sm:$0xf]
  %v70 = vld [vmem:[%s1 + $0xa0] sm:$0xf]
  %v71 = vld [vmem:[%s1 + $0xa4] sm:$0xf]
  %v72 = vld [vmem:[%s1 + $0xa8] sm:$0xf]
  %v73 = vld [vmem:[%s1 + $0xac] sm:$0xf]
  %v74 = vld [vmem:[%s1 + $0xb0] sm:$0xf]
  %v75 = vld [vmem:[%s1 + $0xb4] sm:$0xf]
  %v76 = vld [vmem:[%s1 + $0xb8] sm:$0xf]
  %v77 = vld [vmem:[%s1 + $0xbc] sm:$0xf]
  %v78 = vld [vmem:[%s1 + $0xc0] sm:$0xf]
  %v79 = vld [vmem:[%s1 + $0xc4] sm:$0xf]
  %v80 = vld [vmem:[%s1 + $0xc8] sm:$0xf]
  %v81 = vld [vmem:[%s1 + $0xcc] sm:$0xf]
  %v82 = vld [vmem:[%s1 + $0xd0] sm:$0xf]
  %v83 = vld [vmem:[%s1 + $0xd4] sm:$0xf]
  %v84 = vld [vmem:[%s1 + $0xd8] sm:$0xf]
  %v85 = vld [vmem:[%s1 + $0xdc] sm:$0xf]
  %v86 = vld [vmem:[%s1 + $0xe0] sm:$0xf]
  %v87 = vld [vmem:[%s1 + $0xe4] sm:$0xf]
  %v88 = vld [vmem:[%s1 + $0xe8] sm:$0xf]
  %v89 = vld [vmem:[%s1 + $0xec] sm:$0xf]
  %v90 = vld [vmem:[%s1 + $0xf0] sm:$0xf]
  %v91 = vld [vmem:[%s1 + $0xf4] sm:$0xf]
  %v92 = vld [vmem:[%s1 + $0xf8] sm:$0xf]
  %v93 = vld [vmem:[%s1 + $0xfc] sm:$0xf]
  %v106 = vunpack.c.l.b16 %v18
  %v107 = vunpack.c.h.b16 %v18
  %v108 = vunpack.c.l.b16 %v19
  %v109 = vunpack.c.h.b16 %v19
  %v110 = vunpack.c.l.b16 %v20
  %v111 = vunpack.c.h.b16 %v20
  %v112 = vunpack.c.l.b16 %v21
  %v113 = vunpack.c.h.b16 %v21
  %v114 = vunpack.c.l.b16 %v22
  %v115 = vunpack.c.h.b16 %v22
  %v116 = vunpack.c.l.b16 %v23
  %v117 = vunpack.c.h.b16 %v23
  %v118 = vunpack.c.l.b16 %v24
  %v119 = vunpack.c.h.b16 %v24
  %v120 = vunpack.c.l.b16 %v25
  %v121 = vunpack.c.h.b16 %v25
  %v122 = vunpack.c.l.b16 %v26
  %v123 = vunpack.c.h.b16 %v26
  %v124 = vunpack.c.l.b16 %v27
  %v125 = vunpack.c.h.b16 %v27
  %v126 = vunpack.c.l.b16 %v28
  %v127 = vunpack.c.h.b16 %v28
  %v128 = vunpack.c.l.b16 %v29
  %v129 = vunpack.c.h.b16 %v29
  %v130 = vpack.c.b16 %v110, %v106
  %v131 = vpack.c.b16 %v111, %v107
  %v132 = vpack.c.b16 %v112, %v108
  %v133 = vpack.c.b16 %v113, %v109
  %v134 = vpack.c.b16 %v118, %v114
  %v135 = vpack.c.b16 %v119, %v115
  %v136 = vpack.c.b16 %v120, %v116
  %v137 = vpack.c.b16 %v121, %v117
  %v138 = vpack.c.b16 %v126, %v122
  %v139 = vpack.c.b16 %v127, %v123
  %v140 = vpack.c.b16 %v128, %v124
  %v141 = vpack.c.b16 %v129, %v125
  %v218 = vunpack.c.l.b16 %v30
  %v219 = vunpack.c.l.b16 %v31
  %v220 = vunpack.c.l.b16 %v32
  %v221 = vunpack.c.l.b16 %v33
  %v222 = vunpack.c.l.b16 %v34
  %v223 = vunpack.c.l.b16 %v35
  %v224 = vunpack.c.l.b16 %v36
  %v225 = vunpack.c.l.b16 %v37
  %v226 = vunpack.c.l.b16 %v38
  %v227 = vunpack.c.l.b16 %v39
  %v228 = vunpack.c.l.b16 %v40
  %v229 = vunpack.c.l.b16 %v41
  %v230 = vunpack.c.l.b16 %v42
  %v231 = vunpack.c.l.b16 %v43
  %v232 = vunpack.c.l.b16 %v44
  %v233 = vunpack.c.l.b16 %v45
  %v234 = vunpack.c.l.b16 %v46
  %v235 = vunpack.c.l.b16 %v47
  %v236 = vunpack.c.l.b16 %v48
  %v237 = vunpack.c.l.b16 %v49
  %v238 = vunpack.c.l.b16 %v50
  %v239 = vunpack.c.l.b16 %v51
  %v240 = vunpack.c.l.b16 %v52
  %v241 = vunpack.c.l.b16 %v53
  %v242 = vunpack.c.l.b16 %v54
  %v243 = vunpack.c.l.b16 %v55
  %v244 = vunpack.c.l.b16 %v56
  %v245 = vunpack.c.l.b16 %v57
  %v246 = vunpack.c.l.b16 %v58
  %v247 = vunpack.c.l.b16 %v59
  %v248 = vunpack.c.l.b16 %v60
  %v249 = vunpack.c.l.b16 %v61
  %v250 = vunpack.c.l.b16 %v62
  %v251 = vunpack.c.l.b16 %v63
  %v252 = vunpack.c.l.b16 %v64
  %v253 = vunpack.c.l.b16 %v65
  %v254 = vunpack.c.l.b16 %v66
  %v255 = vunpack.c.l.b16 %v67
  %v256 = vunpack.c.l.b16 %v68
  %v257 = vunpack.c.l.b16 %v69
  %v258 = vunpack.c.l.b16 %v70
  %v259 = vunpack.c.l.b16 %v71
  %v260 = vunpack.c.l.b16 %v72
  %v261 = vunpack.c.l.b16 %v73
  %v262 = vunpack.c.l.b16 %v74
  %v263 = vunpack.c.l.b16 %v75
  %v264 = vunpack.c.l.b16 %v76
  %v265 = vunpack.c.l.b16 %v77
  %v266 = vunpack.c.l.b16 %v78
  %v267 = vunpack.c.l.b16 %v79
  %v268 = vunpack.c.l.b16 %v80
  %v269 = vunpack.c.l.b16 %v81
  %v270 = vunpack.c.l.b16 %v82
  %v271 = vunpack.c.l.b16 %v83
  %v272 = vunpack.c.l.b16 %v84
  %v273 = vunpack.c.l.b16 %v85
  %v274 = vunpack.c.l.b16 %v86
  %v275 = vunpack.c.l.b16 %v87
  %v276 = vunpack.c.l.b16 %v88
  %v277 = vunpack.c.l.b16 %v89
  %v278 = vunpack.c.l.b16 %v90
  %v279 = vunpack.c.l.b16 %v91
  %v280 = vunpack.c.l.b16 %v92
  %v281 = vunpack.c.l.b16 %v93
  %v282 = vpack.c.b16 %v219, %v218
  %v283 = vpack.c.b16 %v221, %v220
  %v284 = vpack.c.b16 %v223, %v222
  %v285 = vpack.c.b16 %v225, %v224
  %v286 = vpack.c.b16 %v227, %v226
  %v287 = vpack.c.b16 %v229, %v228
  %v288 = vpack.c.b16 %v231, %v230
  %v289 = vpack.c.b16 %v233, %v232
  %v290 = vpack.c.b16 %v235, %v234
  %v291 = vpack.c.b16 %v237, %v236
  %v292 = vpack.c.b16 %v239, %v238
  %v293 = vpack.c.b16 %v241, %v240
  %v294 = vpack.c.b16 %v243, %v242
  %v295 = vpack.c.b16 %v245, %v244
  %v296 = vpack.c.b16 %v247, %v246
  %v297 = vpack.c.b16 %v249, %v248
  %v298 = vpack.c.b16 %v251, %v250
  %v299 = vpack.c.b16 %v253, %v252
  %v300 = vpack.c.b16 %v255, %v254
  %v301 = vpack.c.b16 %v257, %v256
  %v302 = vpack.c.b16 %v259, %v258
  %v303 = vpack.c.b16 %v261, %v260
  %v304 = vpack.c.b16 %v263, %v262
  %v305 = vpack.c.b16 %v265, %v264
  %v306 = vpack.c.b16 %v267, %v266
  %v307 = vpack.c.b16 %v269, %v268
  %v308 = vpack.c.b16 %v271, %v270
  %v309 = vpack.c.b16 %v273, %v272
  %v310 = vpack.c.b16 %v275, %v274
  %v311 = vpack.c.b16 %v277, %v276
  %v312 = vpack.c.b16 %v279, %v278
  %v313 = vpack.c.b16 %v281, %v280
  %346 = vmatprep.subr.bf16.mxu0 0
  %347 = vmatpush1.bf16.msra.mxu0 %v282
  %348 = vmatprep.subr.bf16.mxu0 0
  %349 = vmatpush1.bf16.msra.mxu0 %v283
  %350 = vmatprep.subr.bf16.mxu0 0
  %351 = vmatpush1.bf16.msra.mxu0 %v284
  %352 = vmatprep.subr.bf16.mxu0 0
  %353 = vmatpush1.bf16.msra.mxu0 %v285
  %354 = vmatprep.subr.bf16.mxu0 0
  %355 = vmatpush1.bf16.msra.mxu0 %v286
  %356 = vmatprep.subr.bf16.mxu0 0
  %357 = vmatpush1.bf16.msra.mxu0 %v287
  %358 = vmatprep.subr.bf16.mxu0 0
  %359 = vmatpush1.bf16.msra.mxu0 %v288
  %360 = vmatprep.subr.bf16.mxu0 0
  %361 = vmatpush1.bf16.msra.mxu0 %v289
  %362 = vmatprep.subr.bf16.mxu0 0
  %363 = vmatpush1.bf16.msra.mxu0 %v290
  %364 = vmatprep.subr.bf16.mxu0 0
  %365 = vmatpush1.bf16.msra.mxu0 %v291
  %366 = vmatprep.subr.bf16.mxu0 0
  %367 = vmatpush1.bf16.msra.mxu0 %v292
  %368 = vmatprep.subr.bf16.mxu0 0
  %369 = vmatpush1.bf16.msra.mxu0 %v293
  %370 = vmatprep.subr.bf16.mxu0 0
  %371 = vmatpush1.bf16.msra.mxu0 %v294
  %372 = vmatprep.subr.bf16.mxu0 0
  %373 = vmatpush1.bf16.msra.mxu0 %v295
  %374 = vmatprep.subr.bf16.mxu0 0
  %375 = vmatpush1.bf16.msra.mxu0 %v296
  %376 = vmatprep.subr.bf16.mxu0 0
  %377 = vmatpush1.bf16.msra.mxu0 %v297
  %378 = vmatprep.mubr.bf16.mxu0 %v131
  %379 = vmatmul.mubr.bf16.gmra.mrb[0].mxu0 %v130
  %v380 = vpop.f32.mrb[0].mxu0
  %v381 = vadd.f32 0.0, %v380
  %v382 = vpop.f32.mrb[0].mxu0
  %v383 = vpop.f32.mrb[0].mxu0
  %v384 = vadd.f32 0.0, %v383
  %v385 = vpop.f32.mrb[0].mxu0
  %386 = vmatprep.mubr.bf16.mxu0 %v135
  %387 = vmatmul.mubr.bf16.gmra.mrb[0].mxu0 %v134
  %v388 = vpop.f32.mrb[0].mxu0
  %v389 = vadd.f32 0.0, %v388
  %v390 = vpop.f32.mrb[0].mxu0
  %v391 = vpop.f32.mrb[0].mxu0
  %v392 = vadd.f32 0.0, %v391
  %v393 = vpop.f32.mrb[0].mxu0
  %394 = vmatprep.mubr.bf16.mxu0 %v139
  %395 = vmatmul.mubr.bf16.gmra.mrb[0].mxu0 %v138
  %v396 = vpop.f32.mrb[0].mxu0
  %v397 = vadd.f32 0.0, %v396
  %v398 = vpop.f32.mrb[0].mxu0
  %v399 = vpop.f32.mrb[0].mxu0
  %v400 = vadd.f32 0.0, %v399
  %v401 = vpop.f32.mrb[0].mxu0
  %402 = vdwg.mxu0
  %403 = vmatprep.subr.bf16.mxu0 0
  %404 = vmatpush1.bf16.msra.mxu0 %v298
  %405 = vmatprep.subr.bf16.mxu0 0
  %406 = vmatpush1.bf16.msra.mxu0 %v299
  %407 = vmatprep.subr.bf16.mxu0 0
  %408 = vmatpush1.bf16.msra.mxu0 %v300
  %409 = vmatprep.subr.bf16.mxu0 0
  %410 = vmatpush1.bf16.msra.mxu0 %v301
  %411 = vmatprep.subr.bf16.mxu0 0
  %412 = vmatpush1.bf16.msra.mxu0 %v302
  %413 = vmatprep.subr.bf16.mxu0 0
  %414 = vmatpush1.bf16.msra.mxu0 %v303
  %415 = vmatprep.subr.bf16.mxu0 0
  %416 = vmatpush1.bf16.msra.mxu0 %v304
  %417 = vmatprep.subr.bf16.mxu0 0
  %418 = vmatpush1.bf16.msra.mxu0 %v305
  %419 = vmatprep.subr.bf16.mxu0 0
  %420 = vmatpush1.bf16.msra.mxu0 %v306
  %421 = vmatprep.subr.bf16.mxu0 0
  %422 = vmatpush1.bf16.msra.mxu0 %v307
  %423 = vmatprep.subr.bf16.mxu0 0
  %424 = vmatpush1.bf16.msra.mxu0 %v308
  %425 = vmatprep.subr.bf16.mxu0 0
  %426 = vmatpush1.bf16.msra.mxu0 %v309
  %427 = vmatprep.subr.bf16.mxu0 0
  %428 = vmatpush1.bf16.msra.mxu0 %v310
  %429 = vmatprep.subr.bf16.mxu0 0
  %430 = vmatpush1.bf16.msra.mxu0 %v311
  %431 = vmatprep.subr.bf16.mxu0 0
  %432 = vmatpush1.bf16.msra.mxu0 %v312
  %433 = vmatprep.subr.bf16.mxu0 0
  %434 = vmatpush1.bf16.msra.mxu0 %v313
  %435 = vmatprep.mubr.bf16.mxu0 %v133
  %436 = vmatmul.mubr.bf16.gmra.mrb[0].mxu0 %v132
  %v437 = vpop.f32.mrb[0].mxu0
  %v438 = vadd.f32 %v381, %v437
  %v439 = vpop.f32.mrb[0].mxu0
  %v440 = vpop.f32.mrb[0].mxu0
  %v441 = vadd.f32 %v384, %v440
  %v442 = vpop.f32.mrb[0].mxu0
  %443 = vmatprep.mubr.bf16.mxu0 %v137
  %444 = vmatmul.mubr.bf16.gmra.mrb[0].mxu0 %v136
  %v445 = vpop.f32.mrb[0].mxu0
  %v446 = vadd.f32 %v389, %v445
  %v447 = vpop.f32.mrb[0].mxu0
  %v448 = vpop.f32.mrb[0].mxu0
  %v449 = vadd.f32 %v392, %v448
  %v450 = vpop.f32.mrb[0].mxu0
  %451 = vmatprep.mubr.bf16.mxu0 %v141
  %452 = vmatmul.mubr.bf16.gmra.mrb[0].mxu0 %v140
  %v453 = vpop.f32.mrb[0].mxu0
  %v454 = vadd.f32 %v397, %v453
  %v455 = vpop.f32.mrb[0].mxu0
  %v456 = vpop.f32.mrb[0].mxu0
  %v457 = vadd.f32 %v400, %v456
  %v458 = vpop.f32.mrb[0].mxu0
  %459 = vdwg.mxu0
  %v460 = vld [vmem:[%s2] sm:$0x1]
  %v462 = vlaneseq
  %v463 = vshrl.u32 %v462, 7
  %v464 = vsub.s32 0, %v463
  %v465 = vrot.slane %v460, %v464
  %v467 = vmul.f32 %v438, %v465
  %v468 = vmul.f32 %v441, %v465
  %v469 = vmul.f32 %v446, %v465
  %v470 = vmul.f32 %v449, %v465
  %v471 = vmul.f32 %v454, %v465
  %v472 = vmul.f32 %v457, %v465
  %v473 = vld [vmem:[%s3] sm:$0x1]
  %v475 = vlaneseq
  %v476 = vshrl.u32 %v475, 7
  %v477 = vsub.s32 0, %v476
  %v478 = vrot.slane %v473, %v477
  %v480 = vadd.f32 %v467, %v478
  %v481 = vadd.f32 %v468, %v478
  %v482 = vadd.f32 %v469, %v478
  %v483 = vadd.f32 %v470, %v478
  %v484 = vadd.f32 %v471, %v478
  %v485 = vadd.f32 %v472, %v478
  %v486 = vmul.f32 %v480, 0.5
  %v487 = vmul.f32 %v481, 0.5
  %v488 = vmul.f32 %v482, 0.5
  %v489 = vmul.f32 %v483, 0.5
  %v490 = vmul.f32 %v484, 0.5
  %v491 = vmul.f32 %v485, 0.5
  %v492 = vmul.f32 %v480, 0.70710677
  %v493 = vmul.f32 %v481, 0.70710677
  %v494 = vmul.f32 %v482, 0.70710677
  %v495 = vmul.f32 %v483, 0.70710677
  %v496 = vmul.f32 %v484, 0.70710677
  %v497 = vmul.f32 %v485, 0.70710677
  %v498 = vand.u32 2147483647, %v492
  %v499 = vand.u32 2147483647, %v493
  %v500 = vand.u32 2147483647, %v494
  %v501 = vand.u32 2147483647, %v495
  %v502 = vand.u32 2147483647, %v496
  %v503 = vand.u32 2147483647, %v497
  %v504 = vmul.f32 %v498, 0.3275911
  %v505 = vmul.f32 %v499, 0.3275911
  %v506 = vmul.f32 %v500, 0.3275911
  %v507 = vmul.f32 %v501, 0.3275911
  %v508 = vmul.f32 %v502, 0.3275911
  %v509 = vmul.f32 %v503, 0.3275911
  %v510 = vadd.f32 %v504, 1.0
  %v511 = vadd.f32 %v505, 1.0
  %v512 = vadd.f32 %v506, 1.0
  %v513 = vadd.f32 %v507, 1.0
  %v514 = vadd.f32 %v508, 1.0
  %v515 = vadd.f32 %v509, 1.0
  %v516 = vrcp.pop %v510
  %v517 = vrcp.pop %v511
  %v518 = vrcp.pop %v512
  %v519 = vrcp.pop %v513
  %v520 = vrcp.pop %v514
  %v521 = vrcp.pop %v515
  %v522 = vmul.f32 %v516, 1.0614054
  %v523 = vmul.f32 %v517, 1.0614054
  %v524 = vmul.f32 %v518, 1.0614054
  %v525 = vmul.f32 %v519, 1.0614054
  %v526 = vmul.f32 %v520, 1.0614054
  %v527 = vmul.f32 %v521, 1.0614054
  %v528 = vadd.f32 %v522, -1.4531521
  %v529 = vadd.f32 %v523, -1.4531521
  %v530 = vadd.f32 %v524, -1.4531521
  %v531 = vadd.f32 %v525, -1.4531521
  %v532 = vadd.f32 %v526, -1.4531521
  %v533 = vadd.f32 %v527, -1.4531521
  %v534 = vmul.f32 %v516, %v528
  %v535 = vmul.f32 %v517, %v529
  %v536 = vmul.f32 %v518, %v530
  %v537 = vmul.f32 %v519, %v531
  %v538 = vmul.f32 %v520, %v532
  %v539 = vmul.f32 %v521, %v533
  %v540 = vadd.f32 %v534, 1.4214138
  %v541 = vadd.f32 %v535, 1.4214138
  %v542 = vadd.f32 %v536, 1.4214138
  %v543 = vadd.f32 %v537, 1.4214138
  %v544 = vadd.f32 %v538, 1.4214138
  %v545 = vadd.f32 %v539, 1.4214138
  %v546 = vmul.f32 %v516, %v540
  %v547 = vmul.f32 %v517, %v541
  %v548 = vmul.f32 %v518, %v542
  %v549 = vmul.f32 %v519, %v543
  %v550 = vmul.f32 %v520, %v544
  %v551 = vmul.f32 %v521, %v545
  %v552 = vadd.f32 %v546, -0.28449672
  %v553 = vadd.f32 %v547, -0.28449672
  %v554 = vadd.f32 %v548, -0.28449672
  %v555 = vadd.f32 %v549, -0.28449672
  %v556 = vadd.f32 %v550, -0.28449672
  %v557 = vadd.f32 %v551, -0.28449672
  %v558 = vmul.f32 %v516, %v552
  %v559 = vmul.f32 %v517, %v553
  %v560 = vmul.f32 %v518, %v554
  %v561 = vmul.f32 %v519, %v555
  %v562 = vmul.f32 %v520, %v556
  %v563 = vmul.f32 %v521, %v557
  %v564 = vadd.f32 %v558, 0.2548296
  %v565 = vadd.f32 %v559, 0.2548296
  %v566 = vadd.f32 %v560, 0.2548296
  %v567 = vadd.f32 %v561, 0.2548296
  %v568 = vadd.f32 %v562, 0.2548296
  %v569 = vadd.f32 %v563, 0.2548296
  %v570 = vmul.f32 %v516, %v564
  %v571 = vmul.f32 %v517, %v565
  %v572 = vmul.f32 %v518, %v566
  %v573 = vmul.f32 %v519, %v567
  %v574 = vmul.f32 %v520, %v568
  %v575 = vmul.f32 %v521, %v569
  %v576 = vsub.f32 0.0, %v498
  %v577 = vsub.f32 0.0, %v499
  %v578 = vsub.f32 0.0, %v500
  %v579 = vsub.f32 0.0, %v501
  %v580 = vsub.f32 0.0, %v502
  %v581 = vsub.f32 0.0, %v503
  %v582 = vmul.f32 %v576, %v498
  %v583 = vmul.f32 %v577, %v499
  %v584 = vmul.f32 %v578, %v500
  %v585 = vmul.f32 %v579, %v501
  %v586 = vmul.f32 %v580, %v502
  %v587 = vmul.f32 %v581, %v503
  %v588 = vmul.f32 %v582, 1.442695
  %v589 = vpow.pop %v588
  %v590 = vmul.f32 %v583, 1.442695
  %v591 = vpow.pop %v590
  %v592 = vmul.f32 %v584, 1.442695
  %v593 = vpow.pop %v592
  %v594 = vmul.f32 %v585, 1.442695
  %v595 = vpow.pop %v594
  %v596 = vmul.f32 %v586, 1.442695
  %v597 = vpow.pop %v596
  %v598 = vmul.f32 %v587, 1.442695
  %v599 = vpow.pop %v598
  %v600 = vmul.f32 %v570, %v589
  %v601 = vmul.f32 %v571, %v591
  %v602 = vmul.f32 %v572, %v593
  %v603 = vmul.f32 %v573, %v595
  %v604 = vmul.f32 %v574, %v597
  %v605 = vmul.f32 %v575, %v599
  %v606 = vsub.f32 1.0, %v600
  %v607 = vsub.f32 1.0, %v601
  %v608 = vsub.f32 1.0, %v602
  %v609 = vsub.f32 1.0, %v603
  %v610 = vsub.f32 1.0, %v604
  %v611 = vsub.f32 1.0, %v605
  %vm612 = vcmp.ge.f32.partialorder %v492, 0.0
  %vm613 = vcmp.ge.f32.partialorder %v493, 0.0
  %vm614 = vcmp.ge.f32.partialorder %v494, 0.0
  %vm615 = vcmp.ge.f32.partialorder %v495, 0.0
  %vm616 = vcmp.ge.f32.partialorder %v496, 0.0
  %vm617 = vcmp.ge.f32.partialorder %v497, 0.0
  %v618 = vsub.f32 0.0, %v606
  %v619 = vsub.f32 0.0, %v607
  %v620 = vsub.f32 0.0, %v608
  %v621 = vsub.f32 0.0, %v609
  %v622 = vsub.f32 0.0, %v610
  %v623 = vsub.f32 0.0, %v611
  %v624 = vsel %vm612, %v606, %v618
  %v625 = vsel %vm613, %v607, %v619
  %v626 = vsel %vm614, %v608, %v620
  %v627 = vsel %vm615, %v609, %v621
  %v628 = vsel %vm616, %v610, %v622
  %v629 = vsel %vm617, %v611, %v623
  %v630 = vadd.f32 %v624, 1.0
  %v631 = vadd.f32 %v625, 1.0
  %v632 = vadd.f32 %v626, 1.0
  %v633 = vadd.f32 %v627, 1.0
  %v634 = vadd.f32 %v628, 1.0
  %v635 = vadd.f32 %v629, 1.0
  %v636 = vmul.f32 %v486, %v630
  %v637 = vmul.f32 %v487, %v631
  %v638 = vmul.f32 %v488, %v632
  %v639 = vmul.f32 %v489, %v633
  %v640 = vmul.f32 %v490, %v634
  %v641 = vmul.f32 %v491, %v635
  %v642 = vpack.c.bf16 %v637, %v636
  %v643 = vpack.c.bf16 %v639, %v638
  %v644 = vpack.c.bf16 %v641, %v640
  %v648 = vunpack.c.l.b16 %v642
  %v649 = vunpack.c.h.b16 %v642
  %v650 = vunpack.c.l.b16 %v643
  %v651 = vunpack.c.h.b16 %v643
  %v652 = vunpack.c.l.b16 %v644
  %v653 = vunpack.c.h.b16 %v644
  %v654 = vpack.c.b16 %v648, %v648
  %v655 = vpack.c.b16 %v649, %v649
  %v656 = vpack.c.b16 %v650, %v650
  %v657 = vpack.c.b16 %v651, %v651
  %v658 = vpack.c.b16 %v652, %v652
  %v659 = vpack.c.b16 %v653, %v653
  %666 = vst [vmem:[%s4] sm:$0xf] %v654
  %667 = vst [vmem:[%s4 + $0x4] sm:$0xf] %v655
  %668 = vst [vmem:[%s4 + $0x8] sm:$0xf] %v656
  %669 = vst [vmem:[%s4 + $0xc] sm:$0xf] %v657
  %670 = vst [vmem:[%s4 + $0x10] sm:$0xf] %v658
  %671 = vst [vmem:[%s4 + $0x14] sm:$0xf] %v659
  // Predicated region
  $region18: #{mrcnn_forward.13} parent=0 // pred_check
    _
  $region19: #{mrcnn_forward.13} parent=0 // pred_check_branch
    %673 = sbr.rel (0) target = $region21
  $region20: #{mrcnn_forward.13} parent=0 // pred_region
    _
  $region21: #{mrcnn_forward.13} parent=0 // pred_fallthru
    _
  // Predicated region
  $region22: #{mrcnn_forward.13} parent=0 // pred_check
    _
  $region23: #{mrcnn_forward.13} parent=0 // pred_check_branch
    %675 = sbr.rel (0) target = $region25
  $region24: #{mrcnn_forward.13} parent=0 // pred_region
    _
  $region25: #{mrcnn_forward.13} parent=0 // pred_fallthru
    _

// kernel: mrcnn_forward.14
$region0: #{mrcnn_forward.14}
  #allocation0 [shape = 'u32[]', space=smem, size = 0x4, offset = 0x4, fixed_abs, tag = 'smem constant byte address 0x4 - core index']
  #allocation1 [shape = 'u32[144,128]{1,0:T(1,128)}', space=vmem, size = 0x12000, scoped, tag = 'internal scratch']
  %s0 = inlined_call_operand.vmem [shape: bf16[48,1024], index: 0, kind: input, shape index: {}]
  %s1 = inlined_call_operand.vmem [shape: bf16[1024,128], index: 1, kind: input, shape index: {}]
  %s2 = inlined_call_operand.vmem [shape: f32[1,128], index: 2, kind: input, shape index: {}]
  %s3 = inlined_call_operand.vmem [shape: f32[1,128], index: 3, kind: input, shape index: {}]
  %s4 = inlined_call_operand.vmem [shape: bf16[48,128], index: 4, kind: output, shape index: {}]
  %s5 = sld [smem:[#allocation0]]
  $region26: #{mrcnn_forward.14} parent=0
    _
  %s7 = ssub.s32 1, %s5
  %s8 = scalar_select 0, %s7, %s5
  // Predicated region
  $region2: #{mrcnn_forward.14} parent=0 // pred_check
    _
  $region3: #{mrcnn_forward.14} parent=0 // pred_check_branch
    %10 = sbr.rel (0) target = $region5
  $region4: #{mrcnn_forward.14} parent=0 // pred_region
    _
  $region5: #{mrcnn_forward.14} parent=0 // pred_fallthru
    _
  // Predicated region
  $region6: #{mrcnn_forward.14} parent=0 // pred_check
    _
  $region7: #{mrcnn_forward.14} parent=0 // pred_check_branch
    %12 = sbr.rel (0) target = $region9
  $region8: #{mrcnn_forward.14} parent=0 // pred_region
    _
  $region9: #{mrcnn_forward.14} parent=0 // pred_fallthru
    _
  // Predicated region
  $region10: #{mrcnn_forward.14} parent=0 // pred_check
    _
  $region11: #{mrcnn_forward.14} parent=0 // pred_check_branch
    %14 = sbr.rel (0) target = $region13
  $region12: #{mrcnn_forward.14} parent=0 // pred_region
    _
  $region13: #{mrcnn_forward.14} parent=0 // pred_fallthru
    _
  // Predicated region
  $region14: #{mrcnn_forward.14} parent=0 // pred_check
    _
  $region15: #{mrcnn_forward.14} parent=0 // pred_check_branch
    %16 = sbr.rel (0) target = $region17
  $region16: #{mrcnn_forward.14} parent=0 // pred_region
    _
  $region17: #{mrcnn_forward.14} parent=0 // pred_fallthru
    _
  %v18 = vld [vmem:[%s0] sm:$0xff]
  %v19 = vld [vmem:[%s0 + $0x8] sm:$0xff]
  %v20 = vld [vmem:[%s0 + $0x10] sm:$0xff]
  %v21 = vld [vmem:[%s0 + $0x18] sm:$0xff]
  %v22 = vld [vmem:[%s0 + $0x20] sm:$0xff]
  %v23 = vld [vmem:[%s0 + $0x28] sm:$0xff]
  %v24 = vld [vmem:[%s0 + $0x30] sm:$0xff]
  %v25 = vld [vmem:[%s0 + $0x38] sm:$0xff]
  %v26 = vld [vmem:[%s0 + $0x40] sm:$0xff]
  %v27 = vld [vmem:[%s0 + $0x48] sm:$0xff]
  %v28 = vld [vmem:[%s0 + $0x50] sm:$0xff]
  %v29 = vld [vmem:[%s0 + $0x58] sm:$0xff]
  %v30 = vld [vmem:[%s0 + $0x60] sm:$0xff]
  %v31 = vld [vmem:[%s0 + $0x68] sm:$0xff]
  %v32 = vld [vmem:[%s0 + $0x70] sm:$0xff]
  %v33 = vld [vmem:[%s0 + $0x78] sm:$0xff]
  %v34 = vld [vmem:[%s0 + $0x80] sm:$0xff]
  %v35 = vld [vmem:[%s0 + $0x88] sm:$0xff]
  %v36 = vld [vmem:[%s0 + $0x90] sm:$0xff]
  %v37 = vld [vmem:[%s0 + $0x98] sm:$0xff]
  %v38 = vld [vmem:[%s0 + $0xa0] sm:$0xff]
  %v39 = vld [vmem:[%s0 + $0xa8] sm:$0xff]
  %v40 = vld [vmem:[%s0 + $0xb0] sm:$0xff]
  %v41 = vld [vmem:[%s0 + $0xb8] sm:$0xff]
  %v42 = vld [vmem:[%s1] sm:$0xf]
  %v43 = vld [vmem:[%s1 + $0x4] sm:$0xf]
  %v44 = vld [vmem:[%s1 + $0x8] sm:$0xf]
  %v45 = vld [vmem:[%s1 + $0xc] sm:$0xf]
  %v46 = vld [vmem:[%s1 + $0x10] sm:$0xf]
  %v47 = vld [vmem:[%s1 + $0x14] sm:$0xf]
  %v48 = vld [vmem:[%s1 + $0x18] sm:$0xf]
  %v49 = vld [vmem:[%s1 + $0x1c] sm:$0xf]
  %v50 = vld [vmem:[%s1 + $0x20] sm:$0xf]
  %v51 = vld [vmem:[%s1 + $0x24] sm:$0xf]
  %v52 = vld [vmem:[%s1 + $0x28] sm:$0xf]
  %v53 = vld [vmem:[%s1 + $0x2c] sm:$0xf]
  %v54 = vld [vmem:[%s1 + $0x30] sm:$0xf]
  %v55 = vld [vmem:[%s1 + $0x34] sm:$0xf]
  %v56 = vld [vmem:[%s1 + $0x38] sm:$0xf]
  %v57 = vld [vmem:[%s1 + $0x3c] sm:$0xf]
  %v58 = vld [vmem:[%s1 + $0x40] sm:$0xf]
  %v59 = vld [vmem:[%s1 + $0x44] sm:$0xf]
  %v60 = vld [vmem:[%s1 + $0x48] sm:$0xf]
  %v61 = vld [vmem:[%s1 + $0x4c] sm:$0xf]
  %v62 = vld [vmem:[%s1 + $0x50] sm:$0xf]
  %v63 = vld [vmem:[%s1 + $0x54] sm:$0xf]
  %v64 = vld [vmem:[%s1 + $0x58] sm:$0xf]
  %v65 = vld [vmem:[%s1 + $0x5c] sm:$0xf]
  %v66 = vld [vmem:[%s1 + $0x60] sm:$0xf]
  %v67 = vld [vmem:[%s1 + $0x64] sm:$0xf]
  %v68 = vld [vmem:[%s1 + $0x68] sm:$0xf]
  %v69 = vld [vmem:[%s1 + $0x6c] sm:$0xf]
  %v70 = vld [vmem:[%s1 + $0x70] sm:$0xf]
  %v71 = vld [vmem:[%s1 + $0x74] sm:$0xf]
  %v72 = vld [vmem:[%s1 + $0x78] sm:$0xf]
  %v73 = vld [vmem:[%s1 + $0x7c] sm:$0xf]
  %v74 = vld [vmem:[%s1 + $0x80] sm:$0xf]
  %v75 = vld [vmem:[%s1 + $0x84] sm:$0xf]
  %v76 = vld [vmem:[%s1 + $0x88] sm:$0xf]
  %v77 = vld [vmem:[%s1 + $0x8c] sm:$0xf]
  %v78 = vld [vmem:[%s1 + $0x90] sm:$0xf]
  %v79 = vld [vmem:[%s1 + $0x94] sm:$0xf]
  %v80 = vld [vmem:[%s1 + $0x98] sm:$0xf]
  %v81 = vld [vmem:[%s1 + $0x9c] sm:$0xf]
  %v82 = vld [vmem:[%s1 + $0xa0] sm:$0xf]
  %v83 = vld [vmem:[%s1 + $0xa4] sm:$0xf]
  %v84 = vld [vmem:[%s1 + $0xa8] sm:$0xf]
  %v85 = vld [vmem:[%s1 + $0xac] sm:$0xf]
  %v86 = vld [vmem:[%s1 + $0xb0] sm:$0xf]
  %v87 = vld [vmem:[%s1 + $0xb4] sm:$0xf]
  %v88 = vld [vmem:[%s1 + $0xb8] sm:$0xf]
  %v89 = vld [vmem:[%s1 + $0xbc] sm:$0xf]
  %v90 = vld [vmem:[%s1 + $0xc0] sm:$0xf]
  %v91 = vld [vmem:[%s1 + $0xc4] sm:$0xf]
  %v92 = vld [vmem:[%s1 + $0xc8] sm:$0xf]
  %v93 = vld [vmem:[%s1 + $0xcc] sm:$0xf]
  %v94 = vld [vmem:[%s1 + $0xd0] sm:$0xf]
  %v95 = vld [vmem:[%s1 + $0xd4] sm:$0xf]
  %v96 = vld [vmem:[%s1 + $0xd8] sm:$0xf]
  %v97 = vld [vmem:[%s1 + $0xdc] sm:$0xf]
  %v98 = vld [vmem:[%s1 + $0xe0] sm:$0xf]
  %v99 = vld [vmem:[%s1 + $0xe4] sm:$0xf]
  %v100 = vld [vmem:[%s1 + $0xe8] sm:$0xf]
  %v101 = vld [vmem:[%s1 + $0xec] sm:$0xf]
  %v102 = vld [vmem:[%s1 + $0xf0] sm:$0xf]
  %v103 = vld [vmem:[%s1 + $0xf4] sm:$0xf]
  %v104 = vld [vmem:[%s1 + $0xf8] sm:$0xf]
  %v105 = vld [vmem:[%s1 + $0xfc] sm:$0xf]
  %v106 = vld [vmem:[%s1 + $0x100] sm:$0xf]
  %v107 = vld [vmem:[%s1 + $0x104] sm:$0xf]
  %v108 = vld [vmem:[%s1 + $0x108] sm:$0xf]
  %v109 = vld [vmem:[%s1 + $0x10c] sm:$0xf]
  %v110 = vld [vmem:[%s1 + $0x110] sm:$0xf]
  %v111 = vld [vmem:[%s1 + $0x114] sm:$0xf]
  %v112 = vld [vmem:[%s1 + $0x118] sm:$0xf]
  %v113 = vld [vmem:[%s1 + $0x11c] sm:$0xf]
  %v114 = vld [vmem:[%s1 + $0x120] sm:$0xf]
  %v115 = vld [vmem:[%s1 + $0x124] sm:$0xf]
  %v116 = vld [vmem:[%s1 + $0x128] sm:$0xf]
  %v117 = vld [vmem:[%s1 + $0x12c] sm:$0xf]
  %v118 = vld [vmem:[%s1 + $0x130] sm:$0xf]
  %v119 = vld [vmem:[%s1 + $0x134] sm:$0xf]
  %v120 = vld [vmem:[%s1 + $0x138] sm:$0xf]
  %v121 = vld [vmem:[%s1 + $0x13c] sm:$0xf]
  %v122 = vld [vmem:[%s1 + $0x140] sm:$0xf]
  %v123 = vld [vmem:[%s1 + $0x144] sm:$0xf]
  %v124 = vld [vmem:[%s1 + $0x148] sm:$0xf]
  %v125 = vld [vmem:[%s1 + $0x14c] sm:$0xf]
  %v126 = vld [vmem:[%s1 + $0x150] sm:$0xf]
  %v127 = vld [vmem:[%s1 + $0x154] sm:$0xf]
  %v128 = vld [vmem:[%s1 + $0x158] sm:$0xf]
  %v129 = vld [vmem:[%s1 + $0x15c] sm:$0xf]
  %v130 = vld [vmem:[%s1 + $0x160] sm:$0xf]
  %v131 = vld [vmem:[%s1 + $0x164] sm:$0xf]
  %v132 = vld [vmem:[%s1 + $0x168] sm:$0xf]
  %v133 = vld [vmem:[%s1 + $0x16c] sm:$0xf]
  %v134 = vld [vmem:[%s1 + $0x170] sm:$0xf]
  %v135 = vld [vmem:[%s1 + $0x174] sm:$0xf]
  %v136 = vld [vmem:[%s1 + $0x178] sm:$0xf]
  %v137 = vld [vmem:[%s1 + $0x17c] sm:$0xf]
  %v138 = vld [vmem:[%s1 + $0x180] sm:$0xf]
  %v139 = vld [vmem:[%s1 + $0x184] sm:$0xf]
  %v140 = vld [vmem:[%s1 + $0x188] sm:$0xf]
  %v141 = vld [vmem:[%s1 + $0x18c] sm:$0xf]
  %v142 = vld [vmem:[%s1 + $0x190] sm:$0xf]
  %v143 = vld [vmem:[%s1 + $0x194] sm:$0xf]
  %v144 = vld [vmem:[%s1 + $0x198] sm:$0xf]
  %v145 = vld [vmem:[%s1 + $0x19c] sm:$0xf]
  %v146 = vld [vmem:[%s1 + $0x1a0] sm:$0xf]
  %v147 = vld [vmem:[%s1 + $0x1a4] sm:$0xf]
  %v148 = vld [vmem:[%s1 + $0x1a8] sm:$0xf]
  %v149 = vld [vmem:[%s1 + $0x1ac] sm:$0xf]
  %v150 = vld [vmem:[%s1 + $0x1b0] sm:$0xf]
  %v151 = vld [vmem:[%s1 + $0x1b4] sm:$0xf]
  %v152 = vld [vmem:[%s1 + $0x1b8] sm:$0xf]
  %v153 = vld [vmem:[%s1 + $0x1bc] sm:$0xf]
  %v154 = vld [vmem:[%s1 + $0x1c0] sm:$0xf]
  %v155 = vld [vmem:[%s1 + $0x1c4] sm:$0xf]
  %v156 = vld [vmem:[%s1 + $0x1c8] sm:$0xf]
  %v157 = vld [vmem:[%s1 + $0x1cc] sm:$0xf]
  %v158 = vld [vmem:[%s1 + $0x1d0] sm:$0xf]
  %v159 = vld [vmem:[%s1 + $0x1d4] sm:$0xf]
  %v160 = vld [vmem:[%s1 + $0x1d8] sm:$0xf]
  %v161 = vld [vmem:[%s1 + $0x1dc] sm:$0xf]
  %v162 = vld [vmem:[%s1 + $0x1e0] sm:$0xf]
  %v163 = vld [vmem:[%s1 + $0x1e4] sm:$0xf]
  %v164 = vld [vmem:[%s1 + $0x1e8] sm:$0xf]
  %v165 = vld [vmem:[%s1 + $0x1ec] sm:$0xf]
  %v166 = vld [vmem:[%s1 + $0x1f0] sm:$0xf]
  %v167 = vld [vmem:[%s1 + $0x1f4] sm:$0xf]
  %v168 = vld [vmem:[%s1 + $0x1f8] sm:$0xf]
  %v169 = vld [vmem:[%s1 + $0x1fc] sm:$0xf]
  %v194 = vunpack.c.l.b16 %v18
  %v195 = vunpack.c.h.b16 %v18
  %v196 = vunpack.c.l.b16 %v19
  %v197 = vunpack.c.h.b16 %v19
  %v198 = vunpack.c.l.b16 %v20
  %v199 = vunpack.c.h.b16 %v20
  %v200 = vunpack.c.l.b16 %v21
  %v201 = vunpack.c.h.b16 %v21
  %v202 = vunpack.c.l.b16 %v22
  %v203 = vunpack.c.h.b16 %v22
  %v204 = vunpack.c.l.b16 %v23
  %v205 = vunpack.c.h.b16 %v23
  %v206 = vunpack.c.l.b16 %v24
  %v207 = vunpack.c.h.b16 %v24
  %v208 = vunpack.c.l.b16 %v25
  %v209 = vunpack.c.h.b16 %v25
  %v210 = vunpack.c.l.b16 %v26
  %v211 = vunpack.c.h.b16 %v26
  %v212 = vunpack.c.l.b16 %v27
  %v213 = vunpack.c.h.b16 %v27
  %v214 = vunpack.c.l.b16 %v28
  %v215 = vunpack.c.h.b16 %v28
  %v216 = vunpack.c.l.b16 %v29
  %v217 = vunpack.c.h.b16 %v29
  %v218 = vunpack.c.l.b16 %v30
  %v219 = vunpack.c.h.b16 %v30
  %v220 = vunpack.c.l.b16 %v31
  %v221 = vunpack.c.h.b16 %v31
  %v222 = vunpack.c.l.b16 %v32
  %v223 = vunpack.c.h.b16 %v32
  %v224 = vunpack.c.l.b16 %v33
  %v225 = vunpack.c.h.b16 %v33
  %v226 = vunpack.c.l.b16 %v34
  %v227 = vunpack.c.h.b16 %v34
  %v228 = vunpack.c.l.b16 %v35
  %v229 = vunpack.c.h.b16 %v35
  %v230 = vunpack.c.l.b16 %v36
  %v231 = vunpack.c.h.b16 %v36
  %v232 = vunpack.c.l.b16 %v37
  %v233 = vunpack.c.h.b16 %v37
  %v234 = vunpack.c.l.b16 %v38
  %v235 = vunpack.c.h.b16 %v38
  %v236 = vunpack.c.l.b16 %v39
  %v237 = vunpack.c.h.b16 %v39
  %v238 = vunpack.c.l.b16 %v40
  %v239 = vunpack.c.h.b16 %v40
  %v240 = vunpack.c.l.b16 %v41
  %v241 = vunpack.c.h.b16 %v41
  %v242 = vpack.c.b16 %v202, %v194
  %v243 = vpack.c.b16 %v203, %v195
  %v244 = vpack.c.b16 %v204, %v196
  %v245 = vpack.c.b16 %v205, %v197
  %v246 = vpack.c.b16 %v206, %v198
  %v247 = vpack.c.b16 %v207, %v199
  %v248 = vpack.c.b16 %v208, %v200
  %v249 = vpack.c.b16 %v209, %v201
  %v250 = vpack.c.b16 %v218, %v210
  %v251 = vpack.c.b16 %v219, %v211
  %v252 = vpack.c.b16 %v220, %v212
  %v253 = vpack.c.b16 %v221, %v213
  %v254 = vpack.c.b16 %v222, %v214
  %v255 = vpack.c.b16 %v223, %v215
  %v256 = vpack.c.b16 %v224, %v216
  %v257 = vpack.c.b16 %v225, %v217
  %v258 = vpack.c.b16 %v234, %v226
  %v259 = vpack.c.b16 %v235, %v227
  %v260 = vpack.c.b16 %v236, %v228
  %v261 = vpack.c.b16 %v237, %v229
  %v262 = vpack.c.b16 %v238, %v230
  %v263 = vpack.c.b16 %v239, %v231
  %v264 = vpack.c.b16 %v240, %v232
  %v265 = vpack.c.b16 %v241, %v233
  %v418 = vunpack.c.l.b16 %v42
  %v419 = vunpack.c.l.b16 %v43
  %v420 = vunpack.c.l.b16 %v44
  %v421 = vunpack.c.l.b16 %v45
  %v422 = vunpack.c.l.b16 %v46
  %v423 = vunpack.c.l.b16 %v47
  %v424 = vunpack.c.l.b16 %v48
  %v425 = vunpack.c.l.b16 %v49
  %v426 = vunpack.c.l.b16 %v50
  %v427 = vunpack.c.l.b16 %v51
  %v428 = vunpack.c.l.b16 %v52
  %v429 = vunpack.c.l.b16 %v53
  %v430 = vunpack.c.l.b16 %v54
  %v431 = vunpack.c.l.b16 %v55
  %v432 = vunpack.c.l.b16 %v56
  %v433 = vunpack.c.l.b16 %v57
  %v434 = vunpack.c.l.b16 %v58
  %v435 = vunpack.c.l.b16 %v59
  %v436 = vunpack.c.l.b16 %v60
  %v437 = vunpack.c.l.b16 %v61
  %v438 = vunpack.c.l.b16 %v62
  %v439 = vunpack.c.l.b16 %v63
  %v440 = vunpack.c.l.b16 %v64
  %v441 = vunpack.c.l.b16 %v65
  %v442 = vunpack.c.l.b16 %v66
  %v443 = vunpack.c.l.b16 %v67
  %v444 = vunpack.c.l.b16 %v68
  %v445 = vunpack.c.l.b16 %v69
  %v446 = vunpack.c.l.b16 %v70
  %v447 = vunpack.c.l.b16 %v71
  %v448 = vunpack.c.l.b16 %v72
  %v449 = vunpack.c.l.b16 %v73
  %v450 = vunpack.c.l.b16 %v74
  %v451 = vunpack.c.l.b16 %v75
  %v452 = vunpack.c.l.b16 %v76
  %v453 = vunpack.c.l.b16 %v77
  %v454 = vunpack.c.l.b16 %v78
  %v455 = vunpack.c.l.b16 %v79
  %v456 = vunpack.c.l.b16 %v80
  %v457 = vunpack.c.l.b16 %v81
  %v458 = vunpack.c.l.b16 %v82
  %v459 = vunpack.c.l.b16 %v83
  %v460 = vunpack.c.l.b16 %v84
  %v461 = vunpack.c.l.b16 %v85
  %v462 = vunpack.c.l.b16 %v86
  %v463 = vunpack.c.l.b16 %v87
  %v464 = vunpack.c.l.b16 %v88
  %v465 = vunpack.c.l.b16 %v89
  %v466 = vunpack.c.l.b16 %v90
  %v467 = vunpack.c.l.b16 %v91
  %v468 = vunpack.c.l.b16 %v92
  %v469 = vunpack.c.l.b16 %v93
  %v470 = vunpack.c.l.b16 %v94
  %v471 = vunpack.c.l.b16 %v95
  %v472 = vunpack.c.l.b16 %v96
  %v473 = vunpack.c.l.b16 %v97
  %v474 = vunpack.c.l.b16 %v98
  %v475 = vunpack.c.l.b16 %v99
  %v476 = vunpack.c.l.b16 %v100
  %v477 = vunpack.c.l.b16 %v101
  %v478 = vunpack.c.l.b16 %v102
  %v479 = vunpack.c.l.b16 %v103
  %v480 = vunpack.c.l.b16 %v104
  %v481 = vunpack.c.l.b16 %v105
  %v482 = vunpack.c.l.b16 %v106
  %v483 = vunpack.c.l.b16 %v107
  %v484 = vunpack.c.l.b16 %v108
  %v485 = vunpack.c.l.b16 %v109
  %v486 = vunpack.c.l.b16 %v110
  %v487 = vunpack.c.l.b16 %v111
  %v488 = vunpack.c.l.b16 %v112
  %v489 = vunpack.c.l.b16 %v113
  %v490 = vunpack.c.l.b16 %v114
  %v491 = vunpack.c.l.b16 %v115
  %v492 = vunpack.c.l.b16 %v116
  %v493 = vunpack.c.l.b16 %v117
  %v494 = vunpack.c.l.b16 %v118
  %v495 = vunpack.c.l.b16 %v119
  %v496 = vunpack.c.l.b16 %v120
  %v497 = vunpack.c.l.b16 %v121
  %v498 = vunpack.c.l.b16 %v122
  %v499 = vunpack.c.l.b16 %v123
  %v500 = vunpack.c.l.b16 %v124
  %v501 = vunpack.c.l.b16 %v125
  %v502 = vunpack.c.l.b16 %v126
  %v503 = vunpack.c.l.b16 %v127
  %v504 = vunpack.c.l.b16 %v128
  %v505 = vunpack.c.l.b16 %v129
  %v506 = vunpack.c.l.b16 %v130
  %v507 = vunpack.c.l.b16 %v131
  %v508 = vunpack.c.l.b16 %v132
  %v509 = vunpack.c.l.b16 %v133
  %v510 = vunpack.c.l.b16 %v134
  %v511 = vunpack.c.l.b16 %v135
  %v512 = vunpack.c.l.b16 %v136
  %v513 = vunpack.c.l.b16 %v137
  %v514 = vunpack.c.l.b16 %v138
  %v515 = vunpack.c.l.b16 %v139
  %v516 = vunpack.c.l.b16 %v140
  %v517 = vunpack.c.l.b16 %v141
  %v518 = vunpack.c.l.b16 %v142
  %v519 = vunpack.c.l.b16 %v143
  %v520 = vunpack.c.l.b16 %v144
  %v521 = vunpack.c.l.b16 %v145
  %v522 = vunpack.c.l.b16 %v146
  %v523 = vunpack.c.l.b16 %v147
  %v524 = vunpack.c.l.b16 %v148
  %v525 = vunpack.c.l.b16 %v149
  %v526 = vunpack.c.l.b16 %v150
  %v527 = vunpack.c.l.b16 %v151
  %v528 = vunpack.c.l.b16 %v152
  %v529 = vunpack.c.l.b16 %v153
  %v530 = vunpack.c.l.b16 %v154
  %v531 = vunpack.c.l.b16 %v155
  %v532 = vunpack.c.l.b16 %v156
  %v533 = vunpack.c.l.b16 %v157
  %v534 = vunpack.c.l.b16 %v158
  %v535 = vunpack.c.l.b16 %v159
  %v536 = vunpack.c.l.b16 %v160
  %v537 = vunpack.c.l.b16 %v161
  %v538 = vunpack.c.l.b16 %v162
  %v539 = vunpack.c.l.b16 %v163
  %v540 = vunpack.c.l.b16 %v164
  %v541 = vunpack.c.l.b16 %v165
  %v542 = vunpack.c.l.b16 %v166
  %v543 = vunpack.c.l.b16 %v167
  %v544 = vunpack.c.l.b16 %v168
  %v545 = vunpack.c.l.b16 %v169
  %v546 = vpack.c.b16 %v419, %v418
  %v547 = vpack.c.b16 %v421, %v420
  %v548 = vpack.c.b16 %v423, %v422
  %v549 = vpack.c.b16 %v425, %v424
  %v550 = vpack.c.b16 %v427, %v426
  %v551 = vpack.c.b16 %v429, %v428
  %v552 = vpack.c.b16 %v431, %v430
  %v553 = vpack.c.b16 %v433, %v432
  %v554 = vpack.c.b16 %v435, %v434
  %v555 = vpack.c.b16 %v437, %v436
  %v556 = vpack.c.b16 %v439, %v438
  %v557 = vpack.c.b16 %v441, %v440
  %v558 = vpack.c.b16 %v443, %v442
  %v559 = vpack.c.b16 %v445, %v444
  %v560 = vpack.c.b16 %v447, %v446
  %v561 = vpack.c.b16 %v449, %v448
  %v562 = vpack.c.b16 %v451, %v450
  %v563 = vpack.c.b16 %v453, %v452
  %v564 = vpack.c.b16 %v455, %v454
  %v565 = vpack.c.b16 %v457, %v456
  %v566 = vpack.c.b16 %v459, %v458
  %v567 = vpack.c.b16 %v461, %v460
  %v568 = vpack.c.b16 %v463, %v462
  %v569 = vpack.c.b16 %v465, %v464
  %v570 = vpack.c.b16 %v467, %v466
  %v571 = vpack.c.b16 %v469, %v468
  %v572 = vpack.c.b16 %v471, %v470
  %v573 = vpack.c.b16 %v473, %v472
  %v574 = vpack.c.b16 %v475, %v474
  %v575 = vpack.c.b16 %v477, %v476
  %v576 = vpack.c.b16 %v479, %v478
  %v577 = vpack.c.b16 %v481, %v480
  %v578 = vpack.c.b16 %v483, %v482
  %v579 = vpack.c.b16 %v485, %v484
  %v580 = vpack.c.b16 %v487, %v486
  %v581 = vpack.c.b16 %v489, %v488
  %v582 = vpack.c.b16 %v491, %v490
  %v583 = vpack.c.b16 %v493, %v492
  %v584 = vpack.c.b16 %v495, %v494
  %v585 = vpack.c.b16 %v497, %v496
  %v586 = vpack.c.b16 %v499, %v498
  %v587 = vpack.c.b16 %v501, %v500
  %v588 = vpack.c.b16 %v503, %v502
  %v589 = vpack.c.b16 %v505, %v504
  %v590 = vpack.c.b16 %v507, %v506
  %v591 = vpack.c.b16 %v509, %v508
  %v592 = vpack.c.b16 %v511, %v510
  %v593 = vpack.c.b16 %v513, %v512
  %v594 = vpack.c.b16 %v515, %v514
  %v595 = vpack.c.b16 %v517, %v516
  %v596 = vpack.c.b16 %v519, %v518
  %v597 = vpack.c.b16 %v521, %v520
  %v598 = vpack.c.b16 %v523, %v522
  %v599 = vpack.c.b16 %v525, %v524
  %v600 = vpack.c.b16 %v527, %v526
  %v601 = vpack.c.b16 %v529, %v528
  %v602 = vpack.c.b16 %v531, %v530
  %v603 = vpack.c.b16 %v533, %v532
  %v604 = vpack.c.b16 %v535, %v534
  %v605 = vpack.c.b16 %v537, %v536
  %v606 = vpack.c.b16 %v539, %v538
  %v607 = vpack.c.b16 %v541, %v540
  %v608 = vpack.c.b16 %v543, %v542
  %v609 = vpack.c.b16 %v545, %v544
  %674 = vmatprep.subr.bf16.mxu0 0
  %675 = vmatpush1.bf16.msra.mxu0 %v546
  %676 = vmatprep.subr.bf16.mxu0 0
  %677 = vmatpush1.bf16.msra.mxu0 %v547
  %678 = vmatprep.subr.bf16.mxu0 0
  %679 = vmatpush1.bf16.msra.mxu0 %v548
  %680 = vmatprep.subr.bf16.mxu0 0
  %681 = vmatpush1.bf16.msra.mxu0 %v549
  %682 = vmatprep.subr.bf16.mxu0 0
  %683 = vmatpush1.bf16.msra.mxu0 %v550
  %684 = vmatprep.subr.bf16.mxu0 0
  %685 = vmatpush1.bf16.msra.mxu0 %v551
  %686 = vmatprep.subr.bf16.mxu0 0
  %687 = vmatpush1.bf16.msra.mxu0 %v552
  %688 = vmatprep.subr.bf16.mxu0 0
  %689 = vmatpush1.bf16.msra.mxu0 %v553
  %690 = vmatprep.subr.bf16.mxu0 0
  %691 = vmatpush1.bf16.msra.mxu0 %v554
  %692 = vmatprep.subr.bf16.mxu0 0
  %693 = vmatpush1.bf16.msra.mxu0 %v555
  %694 = vmatprep.subr.bf16.mxu0 0
  %695 = vmatpush1.bf16.msra.mxu0 %v556
  %696 = vmatprep.subr.bf16.mxu0 0
  %697 = vmatpush1.bf16.msra.mxu0 %v557
  %698 = vmatprep.subr.bf16.mxu0 0
  %699 = vmatpush1.bf16.msra.mxu0 %v558
  %700 = vmatprep.subr.bf16.mxu0 0
  %701 = vmatpush1.bf16.msra.mxu0 %v559
  %702 = vmatprep.subr.bf16.mxu0 0
  %703 = vmatpush1.bf16.msra.mxu0 %v560
  %704 = vmatprep.subr.bf16.mxu0 0
  %705 = vmatpush1.bf16.msra.mxu0 %v561
  %706 = vmatprep.mubr.bf16.mxu0 %v243
  %707 = vmatmul.mubr.bf16.gmra.mrb[0].mxu0 %v242
  %v708 = vpop.f32.mrb[0].mxu0
  %v709 = vadd.f32 0.0, %v708
  %v710 = vpop.f32.mrb[0].mxu0
  %v711 = vpop.f32.mrb[0].mxu0
  %v712 = vadd.f32 0.0, %v711
  %v713 = vpop.f32.mrb[0].mxu0
  %714 = vmatprep.mubr.bf16.mxu0 %v251
  %715 = vmatmul.mubr.bf16.gmra.mrb[0].mxu0 %v250
  %v716 = vpop.f32.mrb[0].mxu0
  %v717 = vadd.f32 0.0, %v716
  %v718 = vpop.f32.mrb[0].mxu0
  %v719 = vpop.f32.mrb[0].mxu0
  %v720 = vadd.f32 0.0, %v719
  %v721 = vpop.f32.mrb[0].mxu0
  %722 = vmatprep.mubr.bf16.mxu0 %v259
  %723 = vmatmul.mubr.bf16.gmra.mrb[0].mxu0 %v258
  %v724 = vpop.f32.mrb[0].mxu0
  %v725 = vadd.f32 0.0, %v724
  %v726 = vpop.f32.mrb[0].mxu0
  %v727 = vpop.f32.mrb[0].mxu0
  %v728 = vadd.f32 0.0, %v727
  %v729 = vpop.f32.mrb[0].mxu0
  %730 = vdwg.mxu0
  %731 = vmatprep.subr.bf16.mxu0 0
  %732 = vmatpush1.bf16.msra.mxu0 %v562
  %733 = vmatprep.subr.bf16.mxu0 0
  %734 = vmatpush1.bf16.msra.mxu0 %v563
  %735 = vmatprep.subr.bf16.mxu0 0
  %736 = vmatpush1.bf16.msra.mxu0 %v564
  %737 = vmatprep.subr.bf16.mxu0 0
  %738 = vmatpush1.bf16.msra.mxu0 %v565
  %739 = vmatprep.subr.bf16.mxu0 0
  %740 = vmatpush1.bf16.msra.mxu0 %v566
  %741 = vmatprep.subr.bf16.mxu0 0
  %742 = vmatpush1.bf16.msra.mxu0 %v567
  %743 = vmatprep.subr.bf16.mxu0 0
  %744 = vmatpush1.bf16.msra.mxu0 %v568
  %745 = vmatprep.subr.bf16.mxu0 0
  %746 = vmatpush1.bf16.msra.mxu0 %v569
  %747 = vmatprep.subr.bf16.mxu0 0
  %748 = vmatpush1.bf16.msra.mxu0 %v570
  %749 = vmatprep.subr.bf16.mxu0 0
  %750 = vmatpush1.bf16.msra.mxu0 %v571
  %751 = vmatprep.subr.bf16.mxu0 0
  %752 = vmatpush1.bf16.msra.mxu0 %v572
  %753 = vmatprep.subr.bf16.mxu0 0
  %754 = vmatpush1.bf16.msra.mxu0 %v573
  %755 = vmatprep.subr.bf16.mxu0 0
  %756 = vmatpush1.bf16.msra.mxu0 %v574
  %757 = vmatprep.subr.bf16.mxu0 0
  %758 = vmatpush1.bf16.msra.mxu0 %v575
  %759 = vmatprep.subr.bf16.mxu0 0
  %760 = vmatpush1.bf16.msra.mxu0 %v576
  %761 = vmatprep.subr.bf16.mxu0 0
  %762 = vmatpush1.bf16.msra.mxu0 %v577
  %763 = vmatprep.mubr.bf16.mxu0 %v245
  %764 = vmatmul.mubr.bf16.gmra.mrb[0].mxu0 %v244
  %v765 = vpop.f32.mrb[0].mxu0
  %v766 = vadd.f32 %v709, %v765
  %v767 = vpop.f32.mrb[0].mxu0
  %v768 = vpop.f32.mrb[0].mxu0
  %v769 = vadd.f32 %v712, %v768
  %v770 = vpop.f32.mrb[0].mxu0
  %771 = vmatprep.mubr.bf16.mxu0 %v253
  %772 = vmatmul.mubr.bf16.gmra.mrb[0].mxu0 %v252
  %v773 = vpop.f32.mrb[0].mxu0
  %v774 = vadd.f32 %v717, %v773
  %v775 = vpop.f32.mrb[0].mxu0
  %v776 = vpop.f32.mrb[0].mxu0
  %v777 = vadd.f32 %v720, %v776
  %v778 = vpop.f32.mrb[0].mxu0
  %779 = vmatprep.mubr.bf16.mxu0 %v261
  %780 = vmatmul.mubr.bf16.gmra.mrb[0].mxu0 %v260
  %v781 = vpop.f32.mrb[0].mxu0
  %v782 = vadd.f32 %v725, %v781
  %v783 = vpop.f32.mrb[0].mxu0
  %v784 = vpop.f32.mrb[0].mxu0
  %v785 = vadd.f32 %v728, %v784
  %v786 = vpop.f32.mrb[0].mxu0
  %787 = vdwg.mxu0
  %788 = vmatprep.subr.bf16.mxu0 0
  %789 = vmatpush1.bf16.msra.mxu0 %v578
  %790 = vmatprep.subr.bf16.mxu0 0
  %791 = vmatpush1.bf16.msra.mxu0 %v579
  %792 = vmatprep.subr.bf16.mxu0 0
  %793 = vmatpush1.bf16.msra.mxu0 %v580
  %794 = vmatprep.subr.bf16.mxu0 0
  %795 = vmatpush1.bf16.msra.mxu0 %v581
  %796 = vmatprep.subr.bf16.mxu0 0
  %797 = vmatpush1.bf16.msra.mxu0 %v582
  %798 = vmatprep.subr.bf16.mxu0 0
  %799 = vmatpush1.bf16.msra.mxu0 %v583
  %800 = vmatprep.subr.bf16.mxu0 0
  %801 = vmatpush1.bf16.msra.mxu0 %v584
  %802 = vmatprep.subr.bf16.mxu0 0
  %803 = vmatpush1.bf16.msra.mxu0 %v585
  %804 = vmatprep.subr.bf16.mxu0 0
  %805 = vmatpush1.bf16.msra.mxu0 %v586
  %806 = vmatprep.subr.bf16.mxu0 0
  %807 = vmatpush1.bf16.msra.mxu0 %v587
  %808 = vmatprep.subr.bf16.mxu0 0
  %809 = vmatpush1.bf16.msra.mxu0 %v588
  %810 = vmatprep.subr.bf16.mxu0 0
  %811 = vmatpush1.bf16.msra.mxu0 %v589
  %812 = vmatprep.subr.bf16.mxu0 0
  %813 = vmatpush1.bf16.msra.mxu0 %v590
  %814 = vmatprep.subr.bf16.mxu0 0
  %815 = vmatpush1.bf16.msra.mxu0 %v591
  %816 = vmatprep.subr.bf16.mxu0 0
  %817 = vmatpush1.bf16.msra.mxu0 %v592
  %818 = vmatprep.subr.bf16.mxu0 0
  %819 = vmatpush1.bf16.msra.mxu0 %v593
  %820 = vmatprep.mubr.bf16.mxu0 %v247
  %821 = vmatmul.mubr.bf16.gmra.mrb[0].mxu0 %v246
  %v822 = vpop.f32.mrb[0].mxu0
  %v823 = vadd.f32 %v766, %v822
  %v824 = vpop.f32.mrb[0].mxu0
  %v825 = vpop.f32.mrb[0].mxu0
  %v826 = vadd.f32 %v769, %v825
  %v827 = vpop.f32.mrb[0].mxu0
  %828 = vmatprep.mubr.bf16.mxu0 %v255
  %829 = vmatmul.mubr.bf16.gmra.mrb[0].mxu0 %v254
  %v830 = vpop.f32.mrb[0].mxu0
  %v831 = vadd.f32 %v774, %v830
  %v832 = vpop.f32.mrb[0].mxu0
  %v833 = vpop.f32.mrb[0].mxu0
  %v834 = vadd.f32 %v777, %v833
  %v835 = vpop.f32.mrb[0].mxu0
  %836 = vmatprep.mubr.bf16.mxu0 %v263
  %837 = vmatmul.mubr.bf16.gmra.mrb[0].mxu0 %v262
  %v838 = vpop.f32.mrb[0].mxu0
  %v839 = vadd.f32 %v782, %v838
  %v840 = vpop.f32.mrb[0].mxu0
  %v841 = vpop.f32.mrb[0].mxu0
  %v842 = vadd.f32 %v785, %v841
  %v843 = vpop.f32.mrb[0].mxu0
  %844 = vdwg.mxu0
  %845 = vmatprep.subr.bf16.mxu0 0
  %846 = vmatpush1.bf16.msra.mxu0 %v594
  %847 = vmatprep.subr.bf16.mxu0 0
  %848 = vmatpush1.bf16.msra.mxu0 %v595
  %849 = vmatprep.subr.bf16.mxu0 0
  %850 = vmatpush1.bf16.msra.mxu0 %v596
  %851 = vmatprep.subr.bf16.mxu0 0
  %852 = vmatpush1.bf16.msra.mxu0 %v597
  %853 = vmatprep.subr.bf16.mxu0 0
  %854 = vmatpush1.bf16.msra.mxu0 %v598
  %855 = vmatprep.subr.bf16.mxu0 0
  %856 = vmatpush1.bf16.msra.mxu0 %v599
  %857 = vmatprep.subr.bf16.mxu0 0
  %858 = vmatpush1.bf16.msra.mxu0 %v600
  %859 = vmatprep.subr.bf16.mxu0 0
  %860 = vmatpush1.bf16.msra.mxu0 %v601
  %861 = vmatprep.subr.bf16.mxu0 0
  %862 = vmatpush1.bf16.msra.mxu0 %v602
  %863 = vmatprep.subr.bf16.mxu0 0
  %864 = vmatpush1.bf16.msra.mxu0 %v603
  %865 = vmatprep.subr.bf16.mxu0 0
  %866 = vmatpush1.bf16.msra.mxu0 %v604
  %867 = vmatprep.subr.bf16.mxu0 0
  %868 = vmatpush1.bf16.msra.mxu0 %v605
  %869 = vmatprep.subr.bf16.mxu0 0
  %870 = vmatpush1.bf16.msra.mxu0 %v606
  %871 = vmatprep.subr.bf16.mxu0 0
  %872 = vmatpush1.bf16.msra.mxu0 %v607
  %873 = vmatprep.subr.bf16.mxu0 0
  %874 = vmatpush1.bf16.msra.mxu0 %v608
  %875 = vmatprep.subr.bf16.mxu0 0
  %876 = vmatpush1.bf16.msra.mxu0 %v609
  %877 = vmatprep.mubr.bf16.mxu0 %v249
  %878 = vmatmul.mubr.bf16.gmra.mrb[0].mxu0 %v248
  %v879 = vpop.f32.mrb[0].mxu0
  %v880 = vadd.f32 %v823, %v879
  %v881 = vpop.f32.mrb[0].mxu0
  %v882 = vpop.f32.mrb[0].mxu0
  %v883 = vadd.f32 %v826, %v882
  %v884 = vpop.f32.mrb[0].mxu0
  %885 = vmatprep.mubr.bf16.mxu0 %v257
  %886 = vmatmul.mubr.bf16.gmra.mrb[0].mxu0 %v256
  %v887 = vpop.f32.mrb[0].mxu0
  %v888 = vadd.f32 %v831, %v887
  %v889 = vpop.f32.mrb[0].mxu0
  %v890 = vpop.f32.mrb[0].mxu0
  %v891 = vadd.f32 %v834, %v890
  %v892 = vpop.f32.mrb[0].mxu0
  %893 = vmatprep.mubr.bf16.mxu0 %v265
  %894 = vmatmul.mubr.bf16.gmra.mrb[0].mxu0 %v264
  %v895 = vpop.f32.mrb[0].mxu0
  %v896 = vadd.f32 %v839, %v895
  %v897 = vpop.f32.mrb[0].mxu0
  %v898 = vpop.f32.mrb[0].mxu0
  %v899 = vadd.f32 %v842, %v898
  %v900 = vpop.f32.mrb[0].mxu0
  %901 = vdwg.mxu0
  %v902 = vld [vmem:[%s2] sm:$0x1]
  %v904 = vlaneseq
  %v905 = vshrl.u32 %v904, 7
  %v906 = vsub.s32 0, %v905
  %v907 = vrot.slane %v902, %v906
  %v909 = vmul.f32 %v880, %v907
  %v910 = vmul.f32 %v883, %v907
  %v911 = vmul.f32 %v888, %v907
  %v912 = vmul.f32 %v891, %v907
  %v913 = vmul.f32 %v896, %v907
  %v914 = vmul.f32 %v899, %v907
  %v915 = vld [vmem:[%s3] sm:$0x1]
  %v917 = vlaneseq
  %v918 = vshrl.u32 %v917, 7
  %v919 = vsub.s32 0, %v918
  %v920 = vrot.slane %v915, %v919
  %v922 = vadd.f32 %v909, %v920
  %v923 = vadd.f32 %v910, %v920
  %v924 = vadd.f32 %v911, %v920
  %v925 = vadd.f32 %v912, %v920
  %v926 = vadd.f32 %v913, %v920
  %v927 = vadd.f32 %v914, %v920
  %v928 = vmul.f32 %v922, 0.5
  %v929 = vmul.f32 %v923, 0.5
  %v930 = vmul.f32 %v924, 0.5
  %v931 = vmul.f32 %v925, 0.5
  %v932 = vmul.f32 %v926, 0.5
  %v933 = vmul.f32 %v927, 0.5
  %v934 = vmul.f32 %v922, 0.70710677
  %v935 = vmul.f32 %v923, 0.70710677
  %v936 = vmul.f32 %v924, 0.70710677
  %v937 = vmul.f32 %v925, 0.70710677
  %v938 = vmul.f32 %v926, 0.70710677
  %v939 = vmul.f32 %v927, 0.70710677
  %v940 = vand.u32 2147483647, %v934
  %v941 = vand.u32 2147483647, %v935
  %v942 = vand.u32 2147483647, %v936
  %v943 = vand.u32 2147483647, %v937
  %v944 = vand.u32 2147483647, %v938
  %v945 = vand.u32 2147483647, %v939
  %v946 = vmul.f32 %v940, 0.3275911
  %v947 = vmul.f32 %v941, 0.3275911
  %v948 = vmul.f32 %v942, 0.3275911
  %v949 = vmul.f32 %v943, 0.3275911
  %v950 = vmul.f32 %v944, 0.3275911
  %v951 = vmul.f32 %v945, 0.3275911
  %v952 = vadd.f32 %v946, 1.0
  %v953 = vadd.f32 %v947, 1.0
  %v954 = vadd.f32 %v948, 1.0
  %v955 = vadd.f32 %v949, 1.0
  %v956 = vadd.f32 %v950, 1.0
  %v957 = vadd.f32 %v951, 1.0
  %v958 = vrcp.pop %v952
  %v959 = vrcp.pop %v953
  %v960 = vrcp.pop %v954
  %v961 = vrcp.pop %v955
  %v962 = vrcp.pop %v956
  %v963 = vrcp.pop %v957
  %v964 = vmul.f32 %v958, 1.0614054
  %v965 = vmul.f32 %v959, 1.0614054
  %v966 = vmul.f32 %v960, 1.0614054
  %v967 = vmul.f32 %v961, 1.0614054
  %v968 = vmul.f32 %v962, 1.0614054
  %v969 = vmul.f32 %v963, 1.0614054
  %v970 = vadd.f32 %v964, -1.4531521
  %v971 = vadd.f32 %v965, -1.4531521
  %v972 = vadd.f32 %v966, -1.4531521
  %v973 = vadd.f32 %v967, -1.4531521
  %v974 = vadd.f32 %v968, -1.4531521
  %v975 = vadd.f32 %v969, -1.4531521
  %v976 = vmul.f32 %v958, %v970
  %v977 = vmul.f32 %v959, %v971
  %v978 = vmul.f32 %v960, %v972
  %v979 = vmul.f32 %v961, %v973
  %v980 = vmul.f32 %v962, %v974
  %v981 = vmul.f32 %v963, %v975
  %v982 = vadd.f32 %v976, 1.4214138
  %v983 = vadd.f32 %v977, 1.4214138
  %v984 = vadd.f32 %v978, 1.4214138
  %v985 = vadd.f32 %v979, 1.4214138
  %v986 = vadd.f32 %v980, 1.4214138
  %v987 = vadd.f32 %v981, 1.4214138
  %v988 = vmul.f32 %v958, %v982
  %v989 = vmul.f32 %v959, %v983
  %v990 = vmul.f32 %v960, %v984
  %v991 = vmul.f32 %v961, %v985
  %v992 = vmul.f32 %v962, %v986
  %v993 = vmul.f32 %v963, %v987
  %v994 = vadd.f32 %v988, -0.28449672
  %v995 = vadd.f32 %v989, -0.28449672
  %v996 = vadd.f32 %v990, -0.28449672
  %v997 = vadd.f32 %v991, -0.28449672
  %v998 = vadd.f32 %v992, -0.28449672
  %v999 = vadd.f32 %v993, -0.28449672
  %v1000 = vmul.f32 %v958, %v994
  %v1001 = vmul.f32 %v959, %v995
  %v1002 = vmul.f32 %v960, %v996
  %v1003 = vmul.f32 %v961, %v997
  %v1004 = vmul.f32 %v962, %v998
  %v1005 = vmul.f32 %v963, %v999
  %v1006 = vadd.f32 %v1000, 0.2548296
  %v1007 = vadd.f32 %v1001, 0.2548296
  %v1008 = vadd.f32 %v1002, 0.2548296
  %v1009 = vadd.f32 %v1003, 0.2548296
  %v1010 = vadd.f32 %v1004, 0.2548296
  %v1011 = vadd.f32 %v1005, 0.2548296
  %v1012 = vmul.f32 %v958, %v1006
  %v1013 = vmul.f32 %v959, %v1007
  %v1014 = vmul.f32 %v960, %v1008
  %v1015 = vmul.f32 %v961, %v1009
  %v1016 = vmul.f32 %v962, %v1010
  %v1017 = vmul.f32 %v963, %v1011
  %v1018 = vsub.f32 0.0, %v940
  %v1019 = vsub.f32 0.0, %v941
  %v1020 = vsub.f32 0.0, %v942
  %v1021 = vsub.f32 0.0, %v943
  %v1022 = vsub.f32 0.0, %v944
  %v1023 = vsub.f32 0.0, %v945
  %v1024 = vmul.f32 %v1018, %v940
  %v1025 = vmul.f32 %v1019, %v941
  %v1026 = vmul.f32 %v1020, %v942
  %v1027 = vmul.f32 %v1021, %v943
  %v1028 = vmul.f32 %v1022, %v944
  %v1029 = vmul.f32 %v1023, %v945
  %v1030 = vmul.f32 %v1024, 1.442695
  %v1031 = vpow.pop %v1030
  %v1032 = vmul.f32 %v1025, 1.442695
  %v1033 = vpow.pop %v1032
  %v1034 = vmul.f32 %v1026, 1.442695
  %v1035 = vpow.pop %v1034
  %v1036 = vmul.f32 %v1027, 1.442695
  %v1037 = vpow.pop %v1036
  %v1038 = vmul.f32 %v1028, 1.442695
  %v1039 = vpow.pop %v1038
  %v1040 = vmul.f32 %v1029, 1.442695
  %v1041 = vpow.pop %v1040
  %v1042 = vmul.f32 %v1012, %v1031
  %v1043 = vmul.f32 %v1013, %v1033
  %v1044 = vmul.f32 %v1014, %v1035
  %v1045 = vmul.f32 %v1015, %v1037
  %v1046 = vmul.f32 %v1016, %v1039
  %v1047 = vmul.f32 %v1017, %v1041
  %v1048 = vsub.f32 1.0, %v1042
  %v1049 = vsub.f32 1.0, %v1043
  %v1050 = vsub.f32 1.0, %v1044
  %v1051 = vsub.f32 1.0, %v1045
  %v1052 = vsub.f32 1.0, %v1046
  %v1053 = vsub.f32 1.0, %v1047
  %vm1054 = vcmp.ge.f32.partialorder %v934, 0.0
  %vm1055 = vcmp.ge.f32.partialorder %v935, 0.0
  %vm1056 = vcmp.ge.f32.partialorder %v936, 0.0
  %vm1057 = vcmp.ge.f32.partialorder %v937, 0.0
  %vm1058 = vcmp.ge.f32.partialorder %v938, 0.0
  %vm1059 = vcmp.ge.f32.partialorder %v939, 0.0
  %v1060 = vsub.f32 0.0, %v1048
  %v1061 = vsub.f32 0.0, %v1049
  %v1062 = vsub.f32 0.0, %v1050
  %v1063 = vsub.f32 0.0, %v1051
  %v1064 = vsub.f32 0.0, %v1052
  %v1065 = vsub.f32 0.0, %v1053
  %v1066 = vsel %vm1054, %v1048, %v1060
  %v1067 = vsel %vm1055, %v1049, %v1061
  %v1068 = vsel %vm1056, %v1050, %v1062
  %v1069 = vsel %vm1057, %v1051, %v1063
  %v1070 = vsel %vm1058, %v1052, %v1064
  %v1071 = vsel %vm1059, %v1053, %v1065
  %v1072 = vadd.f32 %v1066, 1.0
  %v1073 = vadd.f32 %v1067, 1.0
  %v1074 = vadd.f32 %v1068, 1.0
  %v1075 = vadd.f32 %v1069, 1.0
  %v1076 = vadd.f32 %v1070, 1.0
  %v1077 = vadd.f32 %v1071, 1.0
  %v1078 = vmul.f32 %v928, %v1072
  %v1079 = vmul.f32 %v929, %v1073
  %v1080 = vmul.f32 %v930, %v1074
  %v1081 = vmul.f32 %v931, %v1075
  %v1082 = vmul.f32 %v932, %v1076
  %v1083 = vmul.f32 %v933, %v1077
  %v1084 = vpack.c.bf16 %v1079, %v1078
  %v1085 = vpack.c.bf16 %v1081, %v1080
  %v1086 = vpack.c.bf16 %v1083, %v1082
  %v1090 = vunpack.c.l.b16 %v1084
  %v1091 = vunpack.c.h.b16 %v1084
  %v1092 = vunpack.c.l.b16 %v1085
  %v1093 = vunpack.c.h.b16 %v1085
  %v1094 = vunpack.c.l.b16 %v1086
  %v1095 = vunpack.c.h.b16 %v1086
  %v1096 = vpack.c.b16 %v1090, %v1090
  %v1097 = vpack.c.b16 %v1091, %v1091
  %v1098 = vpack.c.b16 %v1092, %v1092
  %v1099 = vpack.c.b16 %v1093, %v1093
  %v1100 = vpack.c.b16 %v1094, %v1094
  %v1101 = vpack.c.b16 %v1095, %v1095
  %1108 = vst [vmem:[%s4] sm:$0xf] %v1096
  %1109 = vst [vmem:[%s4 + $0x4] sm:$0xf] %v1097
  %1110 = vst [vmem:[%s4 + $0x8] sm:$0xf] %v1098
  %1111 = vst [vmem:[%s4 + $0xc] sm:$0xf] %v1099
  %1112 = vst [vmem:[%s4 + $0x10] sm:$0xf] %v1100
  %1113 = vst [vmem:[%s4 + $0x14] sm:$0xf] %v1101
  // Predicated region
  $region18: #{mrcnn_forward.14} parent=0 // pred_check
    _
  $region19: #{mrcnn_forward.14} parent=0 // pred_check_branch
    %1115 = sbr.rel (0) target = $region21
  $region20: #{mrcnn_forward.14} parent=0 // pred_region
    _
  $region21: #{mrcnn_forward.14} parent=0 // pred_fallthru
    _
  // Predicated region
  $region22: #{mrcnn_forward.14} parent=0 // pred_check
    _
  $region23: #{mrcnn_forward.14} parent=0 // pred_check_branch
    %1117 = sbr.rel (0) target = $region25
  $region24: #{mrcnn_forward.14} parent=0 // pred_region
    _
  $region25: #{mrcnn_forward.14} parent=0 // pred_fallthru
    _

// kernel: mrcnn_forward.15
$region0: #{mrcnn_forward.15}
  #allocation0 [shape = 'u32[]', space=smem, size = 0x4, offset = 0x4, fixed_abs, tag = 'smem constant byte address 0x4 - core index']
  #allocation1 [shape = 'u32[144,128]{1,0:T(1,128)}', space=vmem, size = 0x12000, scoped, tag = 'internal scratch']
  %s0 = inlined_call_operand.vmem [shape: bf16[16,4,128], index: 0, kind: input, shape index: {}]
  %s1 = inlined_call_operand.vmem [shape: bf16[16,128], index: 1, kind: output, shape index: {}]
  %s2 = sld [smem:[#allocation0]]
  $region14: #{mrcnn_forward.15} parent=0
    _
  %s4 = ssub.s32 1, %s2
  %s5 = scalar_select 0, %s4, %s2
  // Predicated region
  $region2: #{mrcnn_forward.15} parent=0 // pred_check
    _
  $region3: #{mrcnn_forward.15} parent=0 // pred_check_branch
    %7 = sbr.rel (0) target = $region5
  $region4: #{mrcnn_forward.15} parent=0 // pred_region
    _
  $region5: #{mrcnn_forward.15} parent=0 // pred_fallthru
    _
  %v9 = vld [vmem:[%s0] sm:$0x3]
  %v10 = vld [vmem:[%s0 + $0x2] sm:$0x3]
  %v11 = vld [vmem:[%s0 + $0x4] sm:$0x3]
  %v12 = vld [vmem:[%s0 + $0x6] sm:$0x3]
  %v13 = vld [vmem:[%s0 + $0x8] sm:$0x3]
  %v14 = vld [vmem:[%s0 + $0xa] sm:$0x3]
  %v15 = vld [vmem:[%s0 + $0xc] sm:$0x3]
  %v16 = vld [vmem:[%s0 + $0xe] sm:$0x3]
  %v17 = vld [vmem:[%s0 + $0x10] sm:$0x3]
  %v18 = vld [vmem:[%s0 + $0x12] sm:$0x3]
  %v19 = vld [vmem:[%s0 + $0x14] sm:$0x3]
  %v20 = vld [vmem:[%s0 + $0x16] sm:$0x3]
  %v21 = vld [vmem:[%s0 + $0x18] sm:$0x3]
  %v22 = vld [vmem:[%s0 + $0x1a] sm:$0x3]
  %v23 = vld [vmem:[%s0 + $0x1c] sm:$0x3]
  %v24 = vld [vmem:[%s0 + $0x1e] sm:$0x3]
  %vm25 = vcmask 1041408
  %v28 = vsel %vm25, %v9, 4286644096
  %v30 = vunpack.i.l.bf16 %v28
  %v31 = vunpack.i.h.bf16 %v28
  %v32 = vmax.f32 %v30, %v31
  %v33 = vrot.slane %v32, 4
  %v34 = vmax.f32 %v32, %v33
  %v35 = vrot.slane %v34, 2
  %v36 = vmax.f32 %v34, %v35
  %v37 = vrot.slane %v36, 1
  %v38 = vmax.f32 %v36, %v37
  %v39 = vpack.i.bf16 %v38, %v38
  %v41 = vsel %vm25, %v10, 4286644096
  %v43 = vunpack.i.l.bf16 %v41
  %v44 = vunpack.i.h.bf16 %v41
  %v45 = vmax.f32 %v43, %v44
  %v46 = vrot.slane %v45, 4
  %v47 = vmax.f32 %v45, %v46
  %v48 = vrot.slane %v47, 2
  %v49 = vmax.f32 %v47, %v48
  %v50 = vrot.slane %v49, 1
  %v51 = vmax.f32 %v49, %v50
  %v52 = vpack.i.bf16 %v51, %v51
  %v54 = vsel %vm25, %v11, 4286644096
  %v56 = vunpack.i.l.bf16 %v54
  %v57 = vunpack.i.h.bf16 %v54
  %v58 = vmax.f32 %v56, %v57
  %v59 = vrot.slane %v58, 4
  %v60 = vmax.f32 %v58, %v59
  %v61 = vrot.slane %v60, 2
  %v62 = vmax.f32 %v60, %v61
  %v63 = vrot.slane %v62, 1
  %v64 = vmax.f32 %v62, %v63
  %v65 = vpack.i.bf16 %v64, %v64
  %v67 = vsel %vm25, %v12, 4286644096
  %v69 = vunpack.i.l.bf16 %v67
  %v70 = vunpack.i.h.bf16 %v67
  %v71 = vmax.f32 %v69, %v70
  %v72 = vrot.slane %v71, 4
  %v73 = vmax.f32 %v71, %v72
  %v74 = vrot.slane %v73, 2
  %v75 = vmax.f32 %v73, %v74
  %v76 = vrot.slane %v75, 1
  %v77 = vmax.f32 %v75, %v76
  %v78 = vpack.i.bf16 %v77, %v77
  %v80 = vsel %vm25, %v13, 4286644096
  %v82 = vunpack.i.l.bf16 %v80
  %v83 = vunpack.i.h.bf16 %v80
  %v84 = vmax.f32 %v82, %v83
  %v85 = vrot.slane %v84, 4
  %v86 = vmax.f32 %v84, %v85
  %v87 = vrot.slane %v86, 2
  %v88 = vmax.f32 %v86, %v87
  %v89 = vrot.slane %v88, 1
  %v90 = vmax.f32 %v88, %v89
  %v91 = vpack.i.bf16 %v90, %v90
  %v93 = vsel %vm25, %v14, 4286644096
  %v95 = vunpack.i.l.bf16 %v93
  %v96 = vunpack.i.h.bf16 %v93
  %v97 = vmax.f32 %v95, %v96
  %v98 = vrot.slane %v97, 4
  %v99 = vmax.f32 %v97, %v98
  %v100 = vrot.slane %v99, 2
  %v101 = vmax.f32 %v99, %v100
  %v102 = vrot.slane %v101, 1
  %v103 = vmax.f32 %v101, %v102
  %v104 = vpack.i.bf16 %v103, %v103
  %v106 = vsel %vm25, %v15, 4286644096
  %v108 = vunpack.i.l.bf16 %v106
  %v109 = vunpack.i.h.bf16 %v106
  %v110 = vmax.f32 %v108, %v109
  %v111 = vrot.slane %v110, 4
  %v112 = vmax.f32 %v110, %v111
  %v113 = vrot.slane %v112, 2
  %v114 = vmax.f32 %v112, %v113
  %v115 = vrot.slane %v114, 1
  %v116 = vmax.f32 %v114, %v115
  %v117 = vpack.i.bf16 %v116, %v116
  %v119 = vsel %vm25, %v16, 4286644096
  %v121 = vunpack.i.l.bf16 %v119
  %v122 = vunpack.i.h.bf16 %v119
  %v123 = vmax.f32 %v121, %v122
  %v124 = vrot.slane %v123, 4
  %v125 = vmax.f32 %v123, %v124
  %v126 = vrot.slane %v125, 2
  %v127 = vmax.f32 %v125, %v126
  %v128 = vrot.slane %v127, 1
  %v129 = vmax.f32 %v127, %v128
  %v130 = vpack.i.bf16 %v129, %v129
  %v132 = vsel %vm25, %v17, 4286644096
  %v134 = vunpack.i.l.bf16 %v132
  %v135 = vunpack.i.h.bf16 %v132
  %v136 = vmax.f32 %v134, %v135
  %v137 = vrot.slane %v136, 4
  %v138 = vmax.f32 %v136, %v137
  %v139 = vrot.slane %v138, 2
  %v140 = vmax.f32 %v138, %v139
  %v141 = vrot.slane %v140, 1
  %v142 = vmax.f32 %v140, %v141
  %v143 = vpack.i.bf16 %v142, %v142
  %v145 = vsel %vm25, %v18, 4286644096
  %v147 = vunpack.i.l.bf16 %v145
  %v148 = vunpack.i.h.bf16 %v145
  %v149 = vmax.f32 %v147, %v148
  %v150 = vrot.slane %v149, 4
  %v151 = vmax.f32 %v149, %v150
  %v152 = vrot.slane %v151, 2
  %v153 = vmax.f32 %v151, %v152
  %v154 = vrot.slane %v153, 1
  %v155 = vmax.f32 %v153, %v154
  %v156 = vpack.i.bf16 %v155, %v155
  %v158 = vsel %vm25, %v19, 4286644096
  %v160 = vunpack.i.l.bf16 %v158
  %v161 = vunpack.i.h.bf16 %v158
  %v162 = vmax.f32 %v160, %v161
  %v163 = vrot.slane %v162, 4
  %v164 = vmax.f32 %v162, %v163
  %v165 = vrot.slane %v164, 2
  %v166 = vmax.f32 %v164, %v165
  %v167 = vrot.slane %v166, 1
  %v168 = vmax.f32 %v166, %v167
  %v169 = vpack.i.bf16 %v168, %v168
  %v171 = vsel %vm25, %v20, 4286644096
  %v173 = vunpack.i.l.bf16 %v171
  %v174 = vunpack.i.h.bf16 %v171
  %v175 = vmax.f32 %v173, %v174
  %v176 = vrot.slane %v175, 4
  %v177 = vmax.f32 %v175, %v176
  %v178 = vrot.slane %v177, 2
  %v179 = vmax.f32 %v177, %v178
  %v180 = vrot.slane %v179, 1
  %v181 = vmax.f32 %v179, %v180
  %v182 = vpack.i.bf16 %v181, %v181
  %v184 = vsel %vm25, %v21, 4286644096
  %v186 = vunpack.i.l.bf16 %v184
  %v187 = vunpack.i.h.bf16 %v184
  %v188 = vmax.f32 %v186, %v187
  %v189 = vrot.slane %v188, 4
  %v190 = vmax.f32 %v188, %v189
  %v191 = vrot.slane %v190, 2
  %v192 = vmax.f32 %v190, %v191
  %v193 = vrot.slane %v192, 1
  %v194 = vmax.f32 %v192, %v193
  %v195 = vpack.i.bf16 %v194, %v194
  %v197 = vsel %vm25, %v22, 4286644096
  %v199 = vunpack.i.l.bf16 %v197
  %v200 = vunpack.i.h.bf16 %v197
  %v201 = vmax.f32 %v199, %v200
  %v202 = vrot.slane %v201, 4
  %v203 = vmax.f32 %v201, %v202
  %v204 = vrot.slane %v203, 2
  %v205 = vmax.f32 %v203, %v204
  %v206 = vrot.slane %v205, 1
  %v207 = vmax.f32 %v205, %v206
  %v208 = vpack.i.bf16 %v207, %v207
  %v210 = vsel %vm25, %v23, 4286644096
  %v212 = vunpack.i.l.bf16 %v210
  %v213 = vunpack.i.h.bf16 %v210
  %v214 = vmax.f32 %v212, %v213
  %v215 = vrot.slane %v214, 4
  %v216 = vmax.f32 %v214, %v215
  %v217 = vrot.slane %v216, 2
  %v218 = vmax.f32 %v216, %v217
  %v219 = vrot.slane %v218, 1
  %v220 = vmax.f32 %v218, %v219
  %v221 = vpack.i.bf16 %v220, %v220
  %v223 = vsel %vm25, %v24, 4286644096
  %v225 = vunpack.i.l.bf16 %v223
  %v226 = vunpack.i.h.bf16 %v223
  %v227 = vmax.f32 %v225, %v226
  %v228 = vrot.slane %v227, 4
  %v229 = vmax.f32 %v227, %v228
  %v230 = vrot.slane %v229, 2
  %v231 = vmax.f32 %v229, %v230
  %v232 = vrot.slane %v231, 1
  %v233 = vmax.f32 %v231, %v232
  %v234 = vpack.i.bf16 %v233, %v233
  %v251 = vunpack.c.l.b16 %v39
  %v252 = vunpack.c.l.b16 %v52
  %v253 = vunpack.c.l.b16 %v65
  %v254 = vunpack.c.l.b16 %v78
  %v255 = vunpack.c.l.b16 %v91
  %v256 = vunpack.c.l.b16 %v104
  %v257 = vunpack.c.l.b16 %v117
  %v258 = vunpack.c.l.b16 %v130
  %v259 = vunpack.c.l.b16 %v143
  %v260 = vunpack.c.l.b16 %v156
  %v261 = vunpack.c.l.b16 %v169
  %v262 = vunpack.c.l.b16 %v182
  %v263 = vunpack.c.l.b16 %v195
  %v264 = vunpack.c.l.b16 %v208
  %v265 = vunpack.c.l.b16 %v221
  %v266 = vunpack.c.l.b16 %v234
  %v267 = vpack.c.b16 %v251, %v251
  %v268 = vpack.c.b16 %v252, %v252
  %v269 = vpack.c.b16 %v253, %v253
  %v270 = vpack.c.b16 %v254, %v254
  %v271 = vpack.c.b16 %v255, %v255
  %v272 = vpack.c.b16 %v256, %v256
  %v273 = vpack.c.b16 %v257, %v257
  %v274 = vpack.c.b16 %v258, %v258
  %v275 = vpack.c.b16 %v259, %v259
  %v276 = vpack.c.b16 %v260, %v260
  %v277 = vpack.c.b16 %v261, %v261
  %v278 = vpack.c.b16 %v262, %v262
  %v279 = vpack.c.b16 %v263, %v263
  %v280 = vpack.c.b16 %v264, %v264
  %v281 = vpack.c.b16 %v265, %v265
  %v282 = vpack.c.b16 %v266, %v266
  %v283 = vunpack.c.l.b16 %v267
  %v284 = vunpack.c.l.b16 %v268
  %v285 = vunpack.c.l.b16 %v269
  %v286 = vunpack.c.l.b16 %v270
  %v287 = vunpack.c.l.b16 %v271
  %v288 = vunpack.c.l.b16 %v272
  %v289 = vunpack.c.l.b16 %v273
  %v290 = vunpack.c.l.b16 %v274
  %v291 = vunpack.c.l.b16 %v275
  %v292 = vunpack.c.l.b16 %v276
  %v293 = vunpack.c.l.b16 %v277
  %v294 = vunpack.c.l.b16 %v278
  %v295 = vunpack.c.l.b16 %v279
  %v296 = vunpack.c.l.b16 %v280
  %v297 = vunpack.c.l.b16 %v281
  %v298 = vunpack.c.l.b16 %v282
  %vm299 = vcmask 1041409
  %v300 = vsel %vm299, %v284, %v283
  %vm301 = vcmask 1042434
  %v302 = vsel %vm301, %v285, %v300
  %vm303 = vcmask 1043459
  %v304 = vsel %vm303, %v286, %v302
  %vm305 = vcmask 1044484
  %v306 = vsel %vm305, %v287, %v304
  %vm307 = vcmask 1045509
  %v308 = vsel %vm307, %v288, %v306
  %vm309 = vcmask 1046534
  %v310 = vsel %vm309, %v289, %v308
  %vm311 = vcmask 1047559
  %v312 = vsel %vm311, %v290, %v310
  %v313 = vsel %vm299, %v292, %v291
  %v314 = vsel %vm301, %v293, %v313
  %v315 = vsel %vm303, %v294, %v314
  %v316 = vsel %vm305, %v295, %v315
  %v317 = vsel %vm307, %v296, %v316
  %v318 = vsel %vm309, %v297, %v317
  %v319 = vsel %vm311, %v298, %v318
  %v320 = vpack.c.b16 %v312, %v312
  %v321 = vpack.c.b16 %v319, %v319
  %324 = vst [vmem:[%s1] sm:$0xf] %v320
  %325 = vst [vmem:[%s1 + $0x4] sm:$0xf] %v321
  // Predicated region
  $region6: #{mrcnn_forward.15} parent=0 // pred_check
    _
  $region7: #{mrcnn_forward.15} parent=0 // pred_check_branch
    %327 = sbr.rel (0) target = $region9
  $region8: #{mrcnn_forward.15} parent=0 // pred_region
    _
  $region9: #{mrcnn_forward.15} parent=0 // pred_fallthru
    _
  // Predicated region
  $region10: #{mrcnn_forward.15} parent=0 // pred_check
    _
  $region11: #{mrcnn_forward.15} parent=0 // pred_check_branch
    %329 = sbr.rel (0) target = $region13
  $region12: #{mrcnn_forward.15} parent=0 // pred_region
    _
  $region13: #{mrcnn_forward.15} parent=0 // pred_fallthru
    _

// kernel: mrcnn_forward.21
$region0: #{mrcnn_forward.21}
  #allocation0 [shape = 'u32[]', space=smem, size = 0x4, offset = 0x4, fixed_abs, tag = 'smem constant byte address 0x4 - core index']
  #allocation1 [shape = 'u32[144,128]{1,0:T(1,128)}', space=vmem, size = 0x12000, scoped, tag = 'internal scratch']
  %s0 = inlined_call_operand.vmem [shape: bf16[18,128], index: 0, kind: input, shape index: {}]
  %s1 = inlined_call_operand.vmem [shape: f32[2,18], index: 1, kind: input, shape index: {}]
  %s2 = inlined_call_operand.vmem [shape: f32[18,2], index: 2, kind: input, shape index: {}]
  %s3 = inlined_call_operand.vmem [shape: bf16[128,128], index: 3, kind: input, shape index: {}]
  %s4 = inlined_call_operand.vmem [shape: f32[1,128], index: 4, kind: input, shape index: {}]
  %s5 = inlined_call_operand.vmem [shape: f32[1,128], index: 5, kind: input, shape index: {}]
  %s6 = inlined_call_operand.vmem [shape: bf16[128,128], index: 6, kind: input, shape index: {}]
  %s7 = inlined_call_operand.vmem [shape: f32[1,128], index: 7, kind: input, shape index: {}]
  %s8 = inlined_call_operand.vmem [shape: f32[1,128], index: 8, kind: input, shape index: {}]
  %s9 = inlined_call_operand.vmem [shape: f32[1,128], index: 9, kind: input, shape index: {}]
  %s10 = inlined_call_operand.vmem [shape: f32[1,128], index: 10, kind: input, shape index: {}]
  %s11 = inlined_call_operand.vmem [shape: bf16[128,128], index: 11, kind: input, shape index: {}]
  %s12 = inlined_call_operand.vmem [shape: f32[1,128], index: 12, kind: input, shape index: {}]
  %s13 = inlined_call_operand.vmem [shape: f32[1,128], index: 13, kind: input, shape index: {}]
  %s14 = inlined_call_operand.vmem [shape: f32[18,128], index: 14, kind: output, shape index: {}]
  %s15 = sld [smem:[#allocation0]]
  $region66: #{mrcnn_forward.21} parent=0
    _
  %s17 = ssub.s32 1, %s15
  %s18 = scalar_select 0, %s17, %s15
  // Predicated region
  $region2: #{mrcnn_forward.21} parent=0 // pred_check
    _
  $region3: #{mrcnn_forward.21} parent=0 // pred_check_branch
    %20 = sbr.rel (0) target = $region5
  $region4: #{mrcnn_forward.21} parent=0 // pred_region
    _
  $region5: #{mrcnn_forward.21} parent=0 // pred_fallthru
    _
  // Predicated region
  $region6: #{mrcnn_forward.21} parent=0 // pred_check
    _
  $region7: #{mrcnn_forward.21} parent=0 // pred_check_branch
    %22 = sbr.rel (0) target = $region9
  $region8: #{mrcnn_forward.21} parent=0 // pred_region
    _
  $region9: #{mrcnn_forward.21} parent=0 // pred_fallthru
    _
  // Predicated region
  $region10: #{mrcnn_forward.21} parent=0 // pred_check
    _
  $region11: #{mrcnn_forward.21} parent=0 // pred_check_branch
    %24 = sbr.rel (0) target = $region13
  $region12: #{mrcnn_forward.21} parent=0 // pred_region
    _
  $region13: #{mrcnn_forward.21} parent=0 // pred_fallthru
    _
  // Predicated region
  $region14: #{mrcnn_forward.21} parent=0 // pred_check
    _
  $region15: #{mrcnn_forward.21} parent=0 // pred_check_branch
    %26 = sbr.rel (0) target = $region17
  $region16: #{mrcnn_forward.21} parent=0 // pred_region
    _
  $region17: #{mrcnn_forward.21} parent=0 // pred_fallthru
    _
  // Predicated region
  $region18: #{mrcnn_forward.21} parent=0 // pred_check
    _
  $region19: #{mrcnn_forward.21} parent=0 // pred_check_branch
    %28 = sbr.rel (0) target = $region21
  $region20: #{mrcnn_forward.21} parent=0 // pred_region
    _
  $region21: #{mrcnn_forward.21} parent=0 // pred_fallthru
    _
  // Predicated region
  $region22: #{mrcnn_forward.21} parent=0 // pred_check
    _
  $region23: #{mrcnn_forward.21} parent=0 // pred_check_branch
    %30 = sbr.rel (0) target = $region25
  $region24: #{mrcnn_forward.21} parent=0 // pred_region
    _
  $region25: #{mrcnn_forward.21} parent=0 // pred_fallthru
    _
  // Predicated region
  $region26: #{mrcnn_forward.21} parent=0 // pred_check
    _
  $region27: #{mrcnn_forward.21} parent=0 // pred_check_branch
    %32 = sbr.rel (0) target = $region29
  $region28: #{mrcnn_forward.21} parent=0 // pred_region
    _
  $region29: #{mrcnn_forward.21} parent=0 // pred_fallthru
    _
  // Predicated region
  $region30: #{mrcnn_forward.21} parent=0 // pred_check
    _
  $region31: #{mrcnn_forward.21} parent=0 // pred_check_branch
    %34 = sbr.rel (0) target = $region33
  $region32: #{mrcnn_forward.21} parent=0 // pred_region
    _
  $region33: #{mrcnn_forward.21} parent=0 // pred_fallthru
    _
  // Predicated region
  $region34: #{mrcnn_forward.21} parent=0 // pred_check
    _
  $region35: #{mrcnn_forward.21} parent=0 // pred_check_branch
    %36 = sbr.rel (0) target = $region37
  $region36: #{mrcnn_forward.21} parent=0 // pred_region
    _
  $region37: #{mrcnn_forward.21} parent=0 // pred_fallthru
    _
  // Predicated region
  $region38: #{mrcnn_forward.21} parent=0 // pred_check
    _
  $region39: #{mrcnn_forward.21} parent=0 // pred_check_branch
    %38 = sbr.rel (0) target = $region41
  $region40: #{mrcnn_forward.21} parent=0 // pred_region
    _
  $region41: #{mrcnn_forward.21} parent=0 // pred_fallthru
    _
  // Predicated region
  $region42: #{mrcnn_forward.21} parent=0 // pred_check
    _
  $region43: #{mrcnn_forward.21} parent=0 // pred_check_branch
    %40 = sbr.rel (0) target = $region45
  $region44: #{mrcnn_forward.21} parent=0 // pred_region
    _
  $region45: #{mrcnn_forward.21} parent=0 // pred_fallthru
    _
  // Predicated region
  $region46: #{mrcnn_forward.21} parent=0 // pred_check
    _
  $region47: #{mrcnn_forward.21} parent=0 // pred_check_branch
    %42 = sbr.rel (0) target = $region49
  $region48: #{mrcnn_forward.21} parent=0 // pred_region
    _
  $region49: #{mrcnn_forward.21} parent=0 // pred_fallthru
    _
  // Predicated region
  $region50: #{mrcnn_forward.21} parent=0 // pred_check
    _
  $region51: #{mrcnn_forward.21} parent=0 // pred_check_branch
    %44 = sbr.rel (0) target = $region53
  $region52: #{mrcnn_forward.21} parent=0 // pred_region
    _
  $region53: #{mrcnn_forward.21} parent=0 // pred_fallthru
    _
  // Predicated region
  $region54: #{mrcnn_forward.21} parent=0 // pred_check
    _
  $region55: #{mrcnn_forward.21} parent=0 // pred_check_branch
    %46 = sbr.rel (0) target = $region57
  $region56: #{mrcnn_forward.21} parent=0 // pred_region
    _
  $region57: #{mrcnn_forward.21} parent=0 // pred_fallthru
    _
  %v48 = vld [vmem:[%s0] sm:$0xf]
  %v49 = vld [vmem:[%s0 + $0x4] sm:$0xf]
  %v50 = vld [vmem:[%s0 + $0x8] sm:$0x1]
  %v51 = vld [vmem:[%s3] sm:$0xf]
  %v52 = vld [vmem:[%s3 + $0x4] sm:$0xf]
  %v53 = vld [vmem:[%s3 + $0x8] sm:$0xf]
  %v54 = vld [vmem:[%s3 + $0xc] sm:$0xf]
  %v55 = vld [vmem:[%s3 + $0x10] sm:$0xf]
  %v56 = vld [vmem:[%s3 + $0x14] sm:$0xf]
  %v57 = vld [vmem:[%s3 + $0x18] sm:$0xf]
  %v58 = vld [vmem:[%s3 + $0x1c] sm:$0xf]
  %v59 = vld [vmem:[%s3 + $0x20] sm:$0xf]
  %v60 = vld [vmem:[%s3 + $0x24] sm:$0xf]
  %v61 = vld [vmem:[%s3 + $0x28] sm:$0xf]
  %v62 = vld [vmem:[%s3 + $0x2c] sm:$0xf]
  %v63 = vld [vmem:[%s3 + $0x30] sm:$0xf]
  %v64 = vld [vmem:[%s3 + $0x34] sm:$0xf]
  %v65 = vld [vmem:[%s3 + $0x38] sm:$0xf]
  %v66 = vld [vmem:[%s3 + $0x3c] sm:$0xf]
  %v70 = vunpack.c.l.b16 %v48
  %v71 = vunpack.c.l.b16 %v49
  %v72 = vunpack.c.l.b16 %v50
  %v73 = vpack.c.b16 %v71, %v70
  %v74 = vpack.c.b16 %v72, %v72
  %v93 = vunpack.c.l.b16 %v51
  %v94 = vunpack.c.l.b16 %v52
  %v95 = vunpack.c.l.b16 %v53
  %v96 = vunpack.c.l.b16 %v54
  %v97 = vunpack.c.l.b16 %v55
  %v98 = vunpack.c.l.b16 %v56
  %v99 = vunpack.c.l.b16 %v57
  %v100 = vunpack.c.l.b16 %v58
  %v101 = vunpack.c.l.b16 %v59
  %v102 = vunpack.c.l.b16 %v60
  %v103 = vunpack.c.l.b16 %v61
  %v104 = vunpack.c.l.b16 %v62
  %v105 = vunpack.c.l.b16 %v63
  %v106 = vunpack.c.l.b16 %v64
  %v107 = vunpack.c.l.b16 %v65
  %v108 = vunpack.c.l.b16 %v66
  %v109 = vpack.c.b16 %v94, %v93
  %v110 = vpack.c.b16 %v96, %v95
  %v111 = vpack.c.b16 %v98, %v97
  %v112 = vpack.c.b16 %v100, %v99
  %v113 = vpack.c.b16 %v102, %v101
  %v114 = vpack.c.b16 %v104, %v103
  %v115 = vpack.c.b16 %v106, %v105
  %v116 = vpack.c.b16 %v108, %v107
  %125 = vmatprep.subr.bf16.mxu0 0
  %126 = vmatpush1.bf16.msra.mxu0 %v109
  %127 = vmatprep.subr.bf16.mxu0 0
  %128 = vmatpush1.bf16.msra.mxu0 %v110
  %129 = vmatprep.subr.bf16.mxu0 0
  %130 = vmatpush1.bf16.msra.mxu0 %v111
  %131 = vmatprep.subr.bf16.mxu0 0
  %132 = vmatpush1.bf16.msra.mxu0 %v112
  %133 = vmatprep.subr.bf16.mxu0 0
  %134 = vmatpush1.bf16.msra.mxu0 %v113
  %135 = vmatprep.subr.bf16.mxu0 0
  %136 = vmatpush1.bf16.msra.mxu0 %v114
  %137 = vmatprep.subr.bf16.mxu0 0
  %138 = vmatpush1.bf16.msra.mxu0 %v115
  %139 = vmatprep.subr.bf16.mxu0 0
  %140 = vmatpush1.bf16.msra.mxu0 %v116
  %141 = vmatprep.subr.bf16.mxu0 0
  %142 = vmatpush1.bf16.msra.mxu0 0
  %143 = vmatprep.subr.bf16.mxu0 0
  %144 = vmatpush1.bf16.msra.mxu0 0
  %145 = vmatprep.subr.bf16.mxu0 0
  %146 = vmatpush1.bf16.msra.mxu0 0
  %147 = vmatprep.subr.bf16.mxu0 0
  %148 = vmatpush1.bf16.msra.mxu0 0
  %149 = vmatprep.subr.bf16.mxu0 0
  %150 = vmatpush1.bf16.msra.mxu0 0
  %151 = vmatprep.subr.bf16.mxu0 0
  %152 = vmatpush1.bf16.msra.mxu0 0
  %153 = vmatprep.subr.bf16.mxu0 0
  %154 = vmatpush1.bf16.msra.mxu0 0
  %155 = vmatprep.subr.bf16.mxu0 0
  %156 = vmatpush1.bf16.msra.mxu0 0
  %157 = vmatprep.mubr.bf16.mxu0 0
  %158 = vmatmul.mubr.bf16.gmra.mrb[0].mxu0 %v73
  %v159 = vpop.f32.mrb[0].mxu0
  %v160 = vadd.f32 0.0, %v159
  %v161 = vpop.f32.mrb[0].mxu0
  %v162 = vpop.f32.mrb[0].mxu0
  %v163 = vadd.f32 0.0, %v162
  %v164 = vpop.f32.mrb[0].mxu0
  %165 = vmatprep.mubr.bf16.mxu0 0
  %166 = vmatmul.mubr.bf16.gmra.mrb[0].mxu0 %v74
  %v167 = vpop.f32.mrb[0].mxu0
  %v168 = vadd.f32 0.0, %v167
  %v169 = vpop.f32.mrb[0].mxu0
  %v170 = vpop.f32.mrb[0].mxu0
  %v171 = vpop.f32.mrb[0].mxu0
  %172 = vdwg.mxu0
  %v173 = vld [vmem:[%s4] sm:$0x1]
  %v175 = vlaneseq
  %v176 = vshrl.u32 %v175, 7
  %v177 = vsub.s32 0, %v176
  %v178 = vrot.slane %v173, %v177
  %v180 = vmul.f32 %v160, %v178
  %v181 = vmul.f32 %v163, %v178
  %v182 = vmul.f32 %v168, %v178
  %v183 = vld [vmem:[%s5] sm:$0x1]
  %v185 = vlaneseq
  %v186 = vshrl.u32 %v185, 7
  %v187 = vsub.s32 0, %v186
  %v188 = vrot.slane %v183, %v187
  %v190 = vadd.f32 %v180, %v188
  %v191 = vadd.f32 %v181, %v188
  %v192 = vadd.f32 %v182, %v188
  %v193 = vmax.f32 %v190, 0.0
  %v194 = vmax.f32 %v191, 0.0
  %v195 = vmax.f32 %v192, 0.0
  %v196 = vpack.c.bf16 %v194, %v193
  %v197 = vpack.c.bf16 %v195, %v195
  %v198 = vld [vmem:[%s6] sm:$0xf]
  %v199 = vld [vmem:[%s6 + $0x4] sm:$0xf]
  %v200 = vld [vmem:[%s6 + $0x8] sm:$0xf]
  %v201 = vld [vmem:[%s6 + $0xc] sm:$0xf]
  %v202 = vld [vmem:[%s6 + $0x10] sm:$0xf]
  %v203 = vld [vmem:[%s6 + $0x14] sm:$0xf]
  %v204 = vld [vmem:[%s6 + $0x18] sm:$0xf]
  %v205 = vld [vmem:[%s6 + $0x1c] sm:$0xf]
  %v206 = vld [vmem:[%s6 + $0x20] sm:$0xf]
  %v207 = vld [vmem:[%s6 + $0x24] sm:$0xf]
  %v208 = vld [vmem:[%s6 + $0x28] sm:$0xf]
  %v209 = vld [vmem:[%s6 + $0x2c] sm:$0xf]
  %v210 = vld [vmem:[%s6 + $0x30] sm:$0xf]
  %v211 = vld [vmem:[%s6 + $0x34] sm:$0xf]
  %v212 = vld [vmem:[%s6 + $0x38] sm:$0xf]
  %v213 = vld [vmem:[%s6 + $0x3c] sm:$0xf]
  %v230 = vunpack.c.l.b16 %v198
  %v231 = vunpack.c.l.b16 %v199
  %v232 = vunpack.c.l.b16 %v200
  %v233 = vunpack.c.l.b16 %v201
  %v234 = vunpack.c.l.b16 %v202
  %v235 = vunpack.c.l.b16 %v203
  %v236 = vunpack.c.l.b16 %v204
  %v237 = vunpack.c.l.b16 %v205
  %v238 = vunpack.c.l.b16 %v206
  %v239 = vunpack.c.l.b16 %v207
  %v240 = vunpack.c.l.b16 %v208
  %v241 = vunpack.c.l.b16 %v209
  %v242 = vunpack.c.l.b16 %v210
  %v243 = vunpack.c.l.b16 %v211
  %v244 = vunpack.c.l.b16 %v212
  %v245 = vunpack.c.l.b16 %v213
  %v246 = vpack.c.b16 %v231, %v230
  %v247 = vpack.c.b16 %v233, %v232
  %v248 = vpack.c.b16 %v235, %v234
  %v249 = vpack.c.b16 %v237, %v236
  %v250 = vpack.c.b16 %v239, %v238
  %v251 = vpack.c.b16 %v241, %v240
  %v252 = vpack.c.b16 %v243, %v242
  %v253 = vpack.c.b16 %v245, %v244
  %262 = vmatprep.subr.bf16.mxu0 0
  %263 = vmatpush1.bf16.msra.mxu0 %v246
  %264 = vmatprep.subr.bf16.mxu0 0
  %265 = vmatpush1.bf16.msra.mxu0 %v247
  %266 = vmatprep.subr.bf16.mxu0 0
  %267 = vmatpush1.bf16.msra.mxu0 %v248
  %268 = vmatprep.subr.bf16.mxu0 0
  %269 = vmatpush1.bf16.msra.mxu0 %v249
  %270 = vmatprep.subr.bf16.mxu0 0
  %271 = vmatpush1.bf16.msra.mxu0 %v250
  %272 = vmatprep.subr.bf16.mxu0 0
  %273 = vmatpush1.bf16.msra.mxu0 %v251
  %274 = vmatprep.subr.bf16.mxu0 0
  %275 = vmatpush1.bf16.msra.mxu0 %v252
  %276 = vmatprep.subr.bf16.mxu0 0
  %277 = vmatpush1.bf16.msra.mxu0 %v253
  %278 = vmatprep.subr.bf16.mxu0 0
  %279 = vmatpush1.bf16.msra.mxu0 0
  %280 = vmatprep.subr.bf16.mxu0 0
  %281 = vmatpush1.bf16.msra.mxu0 0
  %282 = vmatprep.subr.bf16.mxu0 0
  %283 = vmatpush1.bf16.msra.mxu0 0
  %284 = vmatprep.subr.bf16.mxu0 0
  %285 = vmatpush1.bf16.msra.mxu0 0
  %286 = vmatprep.subr.bf16.mxu0 0
  %287 = vmatpush1.bf16.msra.mxu0 0
  %288 = vmatprep.subr.bf16.mxu0 0
  %289 = vmatpush1.bf16.msra.mxu0 0
  %290 = vmatprep.subr.bf16.mxu0 0
  %291 = vmatpush1.bf16.msra.mxu0 0
  %292 = vmatprep.subr.bf16.mxu0 0
  %293 = vmatpush1.bf16.msra.mxu0 0
  %294 = vmatprep.mubr.bf16.mxu0 0
  %295 = vmatmul.mubr.bf16.gmra.mrb[0].mxu0 %v196
  %v296 = vpop.f32.mrb[0].mxu0
  %v297 = vadd.f32 0.0, %v296
  %v298 = vpop.f32.mrb[0].mxu0
  %v299 = vpop.f32.mrb[0].mxu0
  %v300 = vadd.f32 0.0, %v299
  %v301 = vpop.f32.mrb[0].mxu0
  %302 = vmatprep.mubr.bf16.mxu0 0
  %303 = vmatmul.mubr.bf16.gmra.mrb[0].mxu0 %v197
  %v304 = vpop.f32.mrb[0].mxu0
  %v305 = vadd.f32 0.0, %v304
  %v306 = vpop.f32.mrb[0].mxu0
  %v307 = vpop.f32.mrb[0].mxu0
  %v308 = vpop.f32.mrb[0].mxu0
  %309 = vdwg.mxu0
  %v310 = vld [vmem:[%s7] sm:$0x1]
  %v312 = vlaneseq
  %v313 = vshrl.u32 %v312, 7
  %v314 = vsub.s32 0, %v313
  %v315 = vrot.slane %v310, %v314
  %v317 = vmul.f32 %v297, %v315
  %v318 = vmul.f32 %v300, %v315
  %v319 = vmul.f32 %v305, %v315
  %v320 = vld [vmem:[%s8] sm:$0x1]
  %v322 = vlaneseq
  %v323 = vshrl.u32 %v322, 7
  %v324 = vsub.s32 0, %v323
  %v325 = vrot.slane %v320, %v324
  %v327 = vadd.f32 %v317, %v325
  %v328 = vadd.f32 %v318, %v325
  %v329 = vadd.f32 %v319, %v325
  %v330 = vld [vmem:[%s1] sm:$0x3]
  %vm331 = vcmask 146432
  %v333 = vsel %vm331, %v330, 0
  %vm335 = vcmask 1041408
  %v337 = vsel %vm335, %v329, 0
  %339 = vmatprep.subr.mxu0 0.0
  %340 = vmatpush1.msra.mxu0 %v327
  %341 = vmatprep.subr.mxu0 0.0
  %342 = vmatpush1.msra.mxu0 %v328
  %343 = vmatprep.subr.mxu0 0.0
  %344 = vmatpush1.msra.mxu0 %v337
  %345 = vmatprep.subr.mxu0 0.0
  %346 = vmatpush1.msra.mxu0 0.0
  %347 = vmatprep.subr.mxu0 0.0
  %348 = vmatpush1.msra.mxu0 0.0
  %349 = vmatprep.subr.mxu0 0.0
  %350 = vmatpush1.msra.mxu0 0.0
  %351 = vmatprep.subr.mxu0 0.0
  %352 = vmatpush1.msra.mxu0 0.0
  %353 = vmatprep.subr.mxu0 0.0
  %354 = vmatpush1.msra.mxu0 0.0
  %355 = vmatprep.subr.mxu0 0.0
  %356 = vmatpush1.msra.mxu0 0.0
  %357 = vmatprep.subr.mxu0 0.0
  %358 = vmatpush1.msra.mxu0 0.0
  %359 = vmatprep.subr.mxu0 0.0
  %360 = vmatpush1.msra.mxu0 0.0
  %361 = vmatprep.subr.mxu0 0.0
  %362 = vmatpush1.msra.mxu0 0.0
  %363 = vmatprep.subr.mxu0 0.0
  %364 = vmatpush1.msra.mxu0 0.0
  %365 = vmatprep.subr.mxu0 0.0
  %366 = vmatpush1.msra.mxu0 0.0
  %367 = vmatprep.subr.mxu0 0.0
  %368 = vmatpush1.msra.mxu0 0.0
  %369 = vmatprep.subr.mxu0 0.0
  %370 = vmatpush1.msra.mxu0 0.0
  %371 = vmatprep.subr.mxu0 0.0
  %372 = vmatpush1.msra.mxu0 0.0
  %373 = vmatprep.subr.mxu0 0.0
  %374 = vmatpush1.msra.mxu0 0.0
  %375 = vmatprep.subr.mxu0 0.0
  %376 = vmatpush1.msra.mxu0 0.0
  %377 = vmatprep.subr.mxu0 0.0
  %378 = vmatpush1.msra.mxu0 0.0
  %379 = vmatprep.subr.mxu0 0.0
  %380 = vmatpush1.msra.mxu0 0.0
  %381 = vmatprep.subr.mxu0 0.0
  %382 = vmatpush1.msra.mxu0 0.0
  %383 = vmatprep.subr.mxu0 0.0
  %384 = vmatpush1.msra.mxu0 0.0
  %385 = vmatprep.subr.mxu0 0.0
  %386 = vmatpush1.msra.mxu0 0.0
  %387 = vmatprep.subr.mxu0 0.0
  %388 = vmatpush1.msra.mxu0 0.0
  %389 = vmatprep.subr.mxu0 0.0
  %390 = vmatpush1.msra.mxu0 0.0
  %391 = vmatprep.subr.mxu0 0.0
  %392 = vmatpush1.msra.mxu0 0.0
  %393 = vmatprep.subr.mxu0 0.0
  %394 = vmatpush1.msra.mxu0 0.0
  %395 = vmatprep.subr.mxu0 0.0
  %396 = vmatpush1.msra.mxu0 0.0
  %397 = vmatprep.subr.mxu0 0.0
  %398 = vmatpush1.msra.mxu0 0.0
  %399 = vmatprep.subr.mxu0 0.0
  %400 = vmatpush1.msra.mxu0 0.0
  %401 = vmatprep.subr.mxu0 0.0
  %402 = vmatpush1.msra.mxu0 0.0
  %403 = vmatprep.mubr.f32.mxu0 0.0
  %404 = vmatmul.mubr.f32.gmra.mrb[0].mxu0 %v333
  %v405 = vpop.f32.mrb[0].mxu0
  %v406 = vadd.f32 0.0, %v405
  %v407 = vpop.f32.mrb[0].mxu0
  %408 = vdwg.mxu0
  %v409 = vld [vmem:[%s9] sm:$0x1]
  %v411 = vlaneseq
  %v412 = vshrl.u32 %v411, 7
  %v413 = vsub.s32 0, %v412
  %v414 = vrot.slane %v409, %v413
  %v416 = vmul.f32 %v406, %v414
  %v417 = vsel %vm335, %v416, 0.0
  %418 = vadd.xlane.f32.xlu0 %v417
  %v419 = vpop.xlane.xlu0 %418
  %v420 = vmax.f32 %v419, 0.0
  %v421 = vld [vmem:[%s10] sm:$0x1]
  %v423 = vlaneseq
  %v424 = vshrl.u32 %v423, 7
  %v425 = vsub.s32 0, %v424
  %v426 = vrot.slane %v421, %v425
  %v428 = vmul.f32 %v420, %v426
  %v429 = vxor.u32 %v428, 2147483648
  %v430 = vmul.f32 %v429, 1.442695
  %v431 = vpow.pop %v430
  %v432 = vadd.f32 %v431, 1.0
  %v433 = vrcp.pop %v432
  %v434 = vmul.f32 1.0, %v433
  %v435 = vld [vmem:[%s2] sm:$0xff]
  %v436 = vld [vmem:[%s2 + $0x8] sm:$0xff]
  %v437 = vld [vmem:[%s2 + $0x10] sm:$0x3]
  %vm438 = vcmask 15360
  %v440 = vsel %vm438, %v435, 0
  %v443 = vsel %vm438, %v436, 0
  %v446 = vsel %vm438, %v437, 0
  %v449 = vsel %vm335, %v434, 0
  %451 = vmatprep.subr.mxu0 0.0
  %452 = vmatpush1.msra.mxu0 %v449
  %453 = vmatprep.subr.mxu0 0.0
  %454 = vmatpush1.msra.mxu0 0.0
  %455 = vmatprep.subr.mxu0 0.0
  %456 = vmatpush1.msra.mxu0 0.0
  %457 = vmatprep.subr.mxu0 0.0
  %458 = vmatpush1.msra.mxu0 0.0
  %459 = vmatprep.subr.mxu0 0.0
  %460 = vmatpush1.msra.mxu0 0.0
  %461 = vmatprep.subr.mxu0 0.0
  %462 = vmatpush1.msra.mxu0 0.0
  %463 = vmatprep.subr.mxu0 0.0
  %464 = vmatpush1.msra.mxu0 0.0
  %465 = vmatprep.subr.mxu0 0.0
  %466 = vmatpush1.msra.mxu0 0.0
  %467 = vmatprep.subr.mxu0 0.0
  %468 = vmatpush1.msra.mxu0 0.0
  %469 = vmatprep.subr.mxu0 0.0
  %470 = vmatpush1.msra.mxu0 0.0
  %471 = vmatprep.subr.mxu0 0.0
  %472 = vmatpush1.msra.mxu0 0.0
  %473 = vmatprep.subr.mxu0 0.0
  %474 = vmatpush1.msra.mxu0 0.0
  %475 = vmatprep.subr.mxu0 0.0
  %476 = vmatpush1.msra.mxu0 0.0
  %477 = vmatprep.subr.mxu0 0.0
  %478 = vmatpush1.msra.mxu0 0.0
  %479 = vmatprep.subr.mxu0 0.0
  %480 = vmatpush1.msra.mxu0 0.0
  %481 = vmatprep.subr.mxu0 0.0
  %482 = vmatpush1.msra.mxu0 0.0
  %483 = vmatprep.subr.mxu0 0.0
  %484 = vmatpush1.msra.mxu0 0.0
  %485 = vmatprep.subr.mxu0 0.0
  %486 = vmatpush1.msra.mxu0 0.0
  %487 = vmatprep.subr.mxu0 0.0
  %488 = vmatpush1.msra.mxu0 0.0
  %489 = vmatprep.subr.mxu0 0.0
  %490 = vmatpush1.msra.mxu0 0.0
  %491 = vmatprep.subr.mxu0 0.0
  %492 = vmatpush1.msra.mxu0 0.0
  %493 = vmatprep.subr.mxu0 0.0
  %494 = vmatpush1.msra.mxu0 0.0
  %495 = vmatprep.subr.mxu0 0.0
  %496 = vmatpush1.msra.mxu0 0.0
  %497 = vmatprep.subr.mxu0 0.0
  %498 = vmatpush1.msra.mxu0 0.0
  %499 = vmatprep.subr.mxu0 0.0
  %500 = vmatpush1.msra.mxu0 0.0
  %501 = vmatprep.subr.mxu0 0.0
  %502 = vmatpush1.msra.mxu0 0.0
  %503 = vmatprep.subr.mxu0 0.0
  %504 = vmatpush1.msra.mxu0 0.0
  %505 = vmatprep.subr.mxu0 0.0
  %506 = vmatpush1.msra.mxu0 0.0
  %507 = vmatprep.subr.mxu0 0.0
  %508 = vmatpush1.msra.mxu0 0.0
  %509 = vmatprep.subr.mxu0 0.0
  %510 = vmatpush1.msra.mxu0 0.0
  %511 = vmatprep.subr.mxu0 0.0
  %512 = vmatpush1.msra.mxu0 0.0
  %513 = vmatprep.subr.mxu0 0.0
  %514 = vmatpush1.msra.mxu0 0.0
  %515 = vmatprep.mubr.f32.mxu0 0.0
  %516 = vmatmul.mubr.f32.gmra.mrb[0].mxu0 %v440
  %v517 = vpop.f32.mrb[0].mxu0
  %v518 = vadd.f32 0.0, %v517
  %v519 = vpop.f32.mrb[0].mxu0
  %520 = vmatprep.mubr.f32.mxu0 0.0
  %521 = vmatmul.mubr.f32.gmra.mrb[0].mxu0 %v443
  %v522 = vpop.f32.mrb[0].mxu0
  %v523 = vadd.f32 0.0, %v522
  %v524 = vpop.f32.mrb[0].mxu0
  %525 = vmatprep.mubr.f32.mxu0 0.0
  %526 = vmatmul.mubr.f32.gmra.mrb[0].mxu0 %v446
  %v527 = vpop.f32.mrb[0].mxu0
  %v528 = vadd.f32 0.0, %v527
  %v529 = vpop.f32.mrb[0].mxu0
  %530 = vdwg.mxu0
  %v531 = vmul.f32 %v327, %v518
  %v532 = vmul.f32 %v328, %v523
  %v533 = vmul.f32 %v329, %v528
  %v534 = vld [vmem:[%s11] sm:$0xf]
  %v535 = vld [vmem:[%s11 + $0x4] sm:$0xf]
  %v536 = vld [vmem:[%s11 + $0x8] sm:$0xf]
  %v537 = vld [vmem:[%s11 + $0xc] sm:$0xf]
  %v538 = vld [vmem:[%s11 + $0x10] sm:$0xf]
  %v539 = vld [vmem:[%s11 + $0x14] sm:$0xf]
  %v540 = vld [vmem:[%s11 + $0x18] sm:$0xf]
  %v541 = vld [vmem:[%s11 + $0x1c] sm:$0xf]
  %v542 = vld [vmem:[%s11 + $0x20] sm:$0xf]
  %v543 = vld [vmem:[%s11 + $0x24] sm:$0xf]
  %v544 = vld [vmem:[%s11 + $0x28] sm:$0xf]
  %v545 = vld [vmem:[%s11 + $0x2c] sm:$0xf]
  %v546 = vld [vmem:[%s11 + $0x30] sm:$0xf]
  %v547 = vld [vmem:[%s11 + $0x34] sm:$0xf]
  %v548 = vld [vmem:[%s11 + $0x38] sm:$0xf]
  %v549 = vld [vmem:[%s11 + $0x3c] sm:$0xf]
  %v566 = vunpack.c.l.b16 %v534
  %v567 = vunpack.c.l.b16 %v535
  %v568 = vunpack.c.l.b16 %v536
  %v569 = vunpack.c.l.b16 %v537
  %v570 = vunpack.c.l.b16 %v538
  %v571 = vunpack.c.l.b16 %v539
  %v572 = vunpack.c.l.b16 %v540
  %v573 = vunpack.c.l.b16 %v541
  %v574 = vunpack.c.l.b16 %v542
  %v575 = vunpack.c.l.b16 %v543
  %v576 = vunpack.c.l.b16 %v544
  %v577 = vunpack.c.l.b16 %v545
  %v578 = vunpack.c.l.b16 %v546
  %v579 = vunpack.c.l.b16 %v547
  %v580 = vunpack.c.l.b16 %v548
  %v581 = vunpack.c.l.b16 %v549
  %v582 = vpack.c.b16 %v567, %v566
  %v583 = vpack.c.b16 %v569, %v568
  %v584 = vpack.c.b16 %v571, %v570
  %v585 = vpack.c.b16 %v573, %v572
  %v586 = vpack.c.b16 %v575, %v574
  %v587 = vpack.c.b16 %v577, %v576
  %v588 = vpack.c.b16 %v579, %v578
  %v589 = vpack.c.b16 %v581, %v580
  %598 = vmatprep.subr.bf16.mxu0 0
  %599 = vmatpush1.bf16.msra.mxu0 %v582
  %600 = vmatprep.subr.bf16.mxu0 0
  %601 = vmatpush1.bf16.msra.mxu0 %v583
  %602 = vmatprep.subr.bf16.mxu0 0
  %603 = vmatpush1.bf16.msra.mxu0 %v584
  %604 = vmatprep.subr.bf16.mxu0 0
  %605 = vmatpush1.bf16.msra.mxu0 %v585
  %606 = vmatprep.subr.bf16.mxu0 0
  %607 = vmatpush1.bf16.msra.mxu0 %v586
  %608 = vmatprep.subr.bf16.mxu0 0
  %609 = vmatpush1.bf16.msra.mxu0 %v587
  %610 = vmatprep.subr.bf16.mxu0 0
  %611 = vmatpush1.bf16.msra.mxu0 %v588
  %612 = vmatprep.subr.bf16.mxu0 0
  %613 = vmatpush1.bf16.msra.mxu0 %v589
  %614 = vmatprep.subr.bf16.mxu0 0
  %615 = vmatpush1.bf16.msra.mxu0 0
  %616 = vmatprep.subr.bf16.mxu0 0
  %617 = vmatpush1.bf16.msra.mxu0 0
  %618 = vmatprep.subr.bf16.mxu0 0
  %619 = vmatpush1.bf16.msra.mxu0 0
  %620 = vmatprep.subr.bf16.mxu0 0
  %621 = vmatpush1.bf16.msra.mxu0 0
  %622 = vmatprep.subr.bf16.mxu0 0
  %623 = vmatpush1.bf16.msra.mxu0 0
  %624 = vmatprep.subr.bf16.mxu0 0
  %625 = vmatpush1.bf16.msra.mxu0 0
  %626 = vmatprep.subr.bf16.mxu0 0
  %627 = vmatpush1.bf16.msra.mxu0 0
  %628 = vmatprep.subr.bf16.mxu0 0
  %629 = vmatpush1.bf16.msra.mxu0 0
  %630 = vmatprep.mubr.bf16.mxu0 0
  %631 = vmatmul.mubr.bf16.gmra.mrb[0].mxu0 %v73
  %v632 = vpop.f32.mrb[0].mxu0
  %v633 = vadd.f32 0.0, %v632
  %v634 = vpop.f32.mrb[0].mxu0
  %v635 = vpop.f32.mrb[0].mxu0
  %v636 = vadd.f32 0.0, %v635
  %v637 = vpop.f32.mrb[0].mxu0
  %638 = vmatprep.mubr.bf16.mxu0 0
  %639 = vmatmul.mubr.bf16.gmra.mrb[0].mxu0 %v74
  %v640 = vpop.f32.mrb[0].mxu0
  %v641 = vadd.f32 0.0, %v640
  %v642 = vpop.f32.mrb[0].mxu0
  %v643 = vpop.f32.mrb[0].mxu0
  %v644 = vpop.f32.mrb[0].mxu0
  %645 = vdwg.mxu0
  %v646 = vld [vmem:[%s12] sm:$0x1]
  %v648 = vlaneseq
  %v649 = vshrl.u32 %v648, 7
  %v650 = vsub.s32 0, %v649
  %v651 = vrot.slane %v646, %v650
  %v653 = vmul.f32 %v633, %v651
  %v654 = vmul.f32 %v636, %v651
  %v655 = vmul.f32 %v641, %v651
  %v656 = vld [vmem:[%s13] sm:$0x1]
  %v658 = vlaneseq
  %v659 = vshrl.u32 %v658, 7
  %v660 = vsub.s32 0, %v659
  %v661 = vrot.slane %v656, %v660
  %v663 = vadd.f32 %v653, %v661
  %v664 = vadd.f32 %v654, %v661
  %v665 = vadd.f32 %v655, %v661
  %v666 = vadd.f32 %v531, %v663
  %v667 = vadd.f32 %v532, %v664
  %v668 = vadd.f32 %v533, %v665
  %v669 = vmax.f32 %v666, 0.0
  %v670 = vmax.f32 %v667, 0.0
  %v671 = vmax.f32 %v668, 0.0
  %672 = vst [vmem:[%s14] sm:$0xff] %v669
  %673 = vst [vmem:[%s14 + $0x8] sm:$0xff] %v670
  %674 = vst [vmem:[%s14 + $0x10] sm:$0x3] %v671
  // Predicated region
  $region58: #{mrcnn_forward.21} parent=0 // pred_check
    _
  $region59: #{mrcnn_forward.21} parent=0 // pred_check_branch
    %676 = sbr.rel (0) target = $region61
  $region60: #{mrcnn_forward.21} parent=0 // pred_region
    _
  $region61: #{mrcnn_forward.21} parent=0 // pred_fallthru
    _
  // Predicated region
  $region62: #{mrcnn_forward.21} parent=0 // pred_check
    _
  $region63: #{mrcnn_forward.21} parent=0 // pred_check_branch
    %678 = sbr.rel (0) target = $region65
  $region64: #{mrcnn_forward.21} parent=0 // pred_region
    _
  $region65: #{mrcnn_forward.21} parent=0 // pred_fallthru
    _

</llo_original>
